<compile_context>
chip_gen: v7x
topology: tpu7x:2x2x1
jax: 0.10.0
libtpu: 0.0.40
codegen_flags: <defaults>
</compile_context>

<pallas_src>
import functools

import jax
import jax.numpy as jnp
from jax import lax
from jax.experimental import pallas as pl
from jax.experimental.pallas import tpu as pltpu


def _layer_norm(x, g, b, eps=1e-5):
    mu = jnp.mean(x, axis=-1, keepdims=True)
    d = x - mu
    var = jnp.mean(d * d, axis=-1, keepdims=True)
    return d * lax.rsqrt(var + eps) * g + b


def gpt2_mc_kernel(onehot_ref, amask_ref, cbias_ref, wte_ref, wpe_ref,
                   ln1_g_ref, ln1_b_ref, w_qkv_ref, b_qkv_ref,
                   w_proj_ref, b_proj_ref, ln2_g_ref, ln2_b_ref,
                   w_fc_ref, b_fc_ref, w_out_ref, b_out_ref,
                   lnf_g_ref, lnf_b_ref, w_mc_ref, b_mc_ref,
                   out_ref, *, num_heads, seq_len):
    R, V = onehot_ref.shape           # R = seqs_per_block * seq_len
    S = seq_len
    SB = R // S
    H = wte_ref.shape[1]
    L = w_qkv_ref.shape[0]
    HD = H // num_heads
    scale = 1.0 / float(HD) ** 0.5

    # Token embedding as a one-hot gather on the MXU (bf16 operands, f32 accumulate)
    # plus learned position embeddings (pre-tiled to the packed layout).
    x = jnp.dot(onehot_ref[...], wte_ref[...],
                preferred_element_type=jnp.float32) + wpe_ref[...]          # (R, H) f32
    # TODO(synk): token_type_ids / custom position_ids / head_mask are None in the
    # reference forward and are not modeled; training-mode dropout is identity (eval).

    # Attention bias: precomputed block-diagonal causal table + per-block padding.
    att_bias = cbias_ref[...] + (1.0 - amask_ref[...]) * (-1e9)             # (R, R)

    for l in range(L):  # static unroll; L is tiny
        # ---------------- multi-head causal self-attention ----------------
        h = _layer_norm(x, ln1_g_ref[l], ln1_b_ref[l])
        qkv = jnp.dot(h.astype(jnp.bfloat16), w_qkv_ref[l],
                      preferred_element_type=jnp.float32) + b_qkv_ref[l]    # (R, 3H)
        q = qkv[:, 0:H] * scale
        k = qkv[:, H:2 * H]
        v = qkv[:, 2 * H:3 * H]
        w_proj_l = w_proj_ref[l]                                            # (H, H) bf16

        attn_out = jnp.zeros((R, H), jnp.float32)
        for hh in range(num_heads):
            sl = slice(hh * HD, (hh + 1) * HD)
            qh = q[:, sl].astype(jnp.bfloat16)
            kh = k[:, sl].astype(jnp.bfloat16)
            vh = v[:, sl].astype(jnp.bfloat16)
            att = lax.dot_general(qh, kh, (((1,), (1,)), ((), ())),
                                  preferred_element_type=jnp.float32)       # (R, R)
            att = att + att_bias
            att = att - jnp.max(att, axis=-1, keepdims=True)
            p = jnp.exp(att)
            p = p * pl.reciprocal(jnp.sum(p, axis=-1, keepdims=True), approx=True)
            head = jnp.dot(p.astype(jnp.bfloat16), vh,
                           preferred_element_type=jnp.float32)              # (R, HD)
            # fold the output projection per head (avoids a lane concatenate)
            attn_out = attn_out + jnp.dot(head.astype(jnp.bfloat16),
                                          w_proj_l[sl, :],
                                          preferred_element_type=jnp.float32)
        x = x + attn_out + b_proj_ref[l]

        # ------------------------------- MLP -------------------------------
        h = _layer_norm(x, ln2_g_ref[l], ln2_b_ref[l])
        a = jnp.dot(h.astype(jnp.bfloat16), w_fc_ref[l],
                    preferred_element_type=jnp.float32) + b_fc_ref[l]       # (R, 4H)
        a = jax.nn.gelu(a, approximate=True)                                # GPT-2 "gelu_new"
        m = jnp.dot(a.astype(jnp.bfloat16), w_out_ref[l],
                    preferred_element_type=jnp.float32) + b_out_ref[l]
        x = x + m

    # Final LayerNorm.
    x = _layer_norm(x, lnf_g_ref[...], lnf_b_ref[...])

    # SequenceSummary: mc_token_ids=None -> take LAST token of each packed sequence,
    # then Linear(H, 1).  (lm_logits are not part of the returned tuple; skipped.)
    w_mc = w_mc_ref[...]                                                    # (1, H)
    b_mc = b_mc_ref[...]                                                    # (1, 1)
    for i in range(SB):                                                     # SB is tiny
        h_last = x[i * S + S - 1: i * S + S, :]                             # (1, H)
        mc = jnp.sum(h_last * w_mc, axis=-1, keepdims=True) + b_mc          # (1, 1)
        out_ref[i:i + 1, :] = mc


def _pick_seqs_per_block(bc, s, max_rows=256):
    """Largest divisor of bc keeping the packed block small and >=2 grid steps."""
    best = 1
    for cand in range(1, bc + 1):
        if bc % cand:
            continue
        if cand * s > max_rows:
            continue
        if bc >= 2 and (bc // cand) < 2:      # keep both TensorCores busy on v7x
            continue
        best = cand
    return best


def gpt2_multiple_choice_forward(params, input_ids, attention_mask, labels, *,
                                 num_heads, seqs_per_block=None):
    """Returns (mc_loss, mc_logits), matching GPT2ForMultipleChoice.forward."""
    B, C, S = input_ids.shape
    BC = B * C
    V, H = params["wte"].shape
    L = params["w_qkv"].shape[0]
    FF = params["w_fc"].shape[-1]

    SB = seqs_per_block or _pick_seqs_per_block(BC, S)
    assert BC % SB == 0, "batch*num_choices must be divisible by seqs_per_block"
    NB = BC // SB
    R = SB * S

    # Pack SB consecutive sequences per grid step (row-major grouping).
    onehot = jax.nn.one_hot(input_ids.reshape(NB, R), V, dtype=jnp.bfloat16)  # (NB, R, V)
    if attention_mask is None:
        amask = jnp.ones((NB, 1, R), jnp.float32)
    else:
        amask = attention_mask.reshape(NB, 1, R).astype(jnp.float32)

    # Static block-diagonal causal bias (built once on host, resident in VMEM).
    pos = jnp.arange(R)
    same_seq = (pos[:, None] // S) == (pos[None, :] // S)
    causal = pos[None, :] <= pos[:, None]
    causal_bias = jnp.where(same_seq & causal, 0.0, -1e9).astype(jnp.float32)  # (R, R)

    wpe_tiled = jnp.tile(params["wpe"], (SB, 1))                               # (R, H)

    def per_block(shape):                   # one block per packed group (grid axis 0)
        n = len(shape)
        return pl.BlockSpec((None,) + shape, lambda i, _n=n: (i,) + (0,) * _n)

    def shared(shape):                      # weights: same block every step -> stays in VMEM
        n = len(shape)
        return pl.BlockSpec(shape, lambda i, _n=n: (0,) * _n)

    kernel = functools.partial(gpt2_mc_kernel, num_heads=num_heads, seq_len=S)

    mc_raw = pl.pallas_call(
        kernel,
        out_shape=jax.ShapeDtypeStruct((NB, SB, 1), jnp.float32),
        grid=(NB,),
        in_specs=[
            per_block((R, V)),                                 # one-hot input ids
            per_block((1, R)),                                 # attention mask
            shared((R, R)),                                    # block-diag causal bias
            shared((V, H)),                                    # wte (bf16)
            shared((R, H)),                                    # wpe (tiled, f32)
            shared((L, 1, H)), shared((L, 1, H)),              # ln1 gamma / beta
            shared((L, H, 3 * H)), shared((L, 1, 3 * H)),      # qkv weight / bias
            shared((L, H, H)), shared((L, 1, H)),              # attn out-proj weight / bias
            shared((L, 1, H)), shared((L, 1, H)),              # ln2 gamma / beta
            shared((L, H, FF)), shared((L, 1, FF)),            # mlp fc weight / bias
            shared((L, FF, H)), shared((L, 1, H)),             # mlp proj weight / bias
            shared((1, H)), shared((1, H)),                    # final ln gamma / beta
            shared((1, H)), shared((1, 1)),                    # mc summary weight / bias
        ],
        out_specs=pl.BlockSpec((None, SB, 1), lambda i: (i, 0, 0)),
        compiler_params=pltpu.CompilerParams(
            dimension_semantics=("parallel",)),                # shard packed groups over TCs
    )(onehot, amask, causal_bias, params["wte"], wpe_tiled,
      params["ln1_g"], params["ln1_b"], params["w_qkv"], params["b_qkv"],
      params["w_proj"], params["b_proj"], params["ln2_g"], params["ln2_b"],
      params["w_fc"], params["b_fc"], params["w_out"], params["b_out"],
      params["lnf_g"], params["lnf_b"], params["w_mc"], params["b_mc"])

    mc_logits = mc_raw.reshape(B, C)
    # CrossEntropyLoss(mc_logits.view(-1, num_choices), labels.view(-1))
    logp = jax.nn.log_softmax(mc_logits, axis=-1)
    mc_loss = -jnp.mean(jnp.take_along_axis(logp, labels[:, None], axis=1))
    return mc_loss, mc_logits


if __name__ == "__main__":
    key = jax.random.PRNGKey(0)

    # Small, hardware-friendly GPT-2 config: all lane dims 128-aligned.
    B, C, S = 2, 2, 8          # batch, num_choices, seq_len
    V, H, NH, L = 128, 128, 2, 2
    FF = 4 * H

    ks = jax.random.split(key, 10)

    def init(k, shape, scale=0.02):
        return jax.random.normal(k, shape, jnp.float32) * scale

    params = {
        "wte":   init(ks[0], (V, H)).astype(jnp.bfloat16),
        "wpe":   init(ks[1], (S, H)),
        "ln1_g": jnp.ones((L, 1, H), jnp.float32),
        "ln1_b": jnp.zeros((L, 1, H), jnp.float32),
        "w_qkv": init(ks[2], (L, H, 3 * H)).astype(jnp.bfloat16),
        "b_qkv": jnp.zeros((L, 1, 3 * H), jnp.float32),
        "w_proj": init(ks[3], (L, H, H)).astype(jnp.bfloat16),
        "b_proj": jnp.zeros((L, 1, H), jnp.float32),
        "ln2_g": jnp.ones((L, 1, H), jnp.float32),
        "ln2_b": jnp.zeros((L, 1, H), jnp.float32),
        "w_fc":  init(ks[4], (L, H, FF)).astype(jnp.bfloat16),
        "b_fc":  jnp.zeros((L, 1, FF), jnp.float32),
        "w_out": init(ks[5], (L, FF, H)).astype(jnp.bfloat16),
        "b_out": jnp.zeros((L, 1, H), jnp.float32),
        "lnf_g": jnp.ones((1, H), jnp.float32),
        "lnf_b": jnp.zeros((1, H), jnp.float32),
        "w_mc":  init(ks[6], (1, H)),
        "b_mc":  jnp.zeros((1, 1), jnp.float32),
    }

    input_ids = jax.random.randint(ks[7], (B, C, S), 0, V)
    attention_mask = jnp.ones((B, C, S), jnp.float32)
    labels = jnp.array([0, 1], jnp.int32)

    mc_loss, mc_logits = gpt2_multiple_choice_forward(
        params, input_ids, attention_mask, labels, num_heads=NH)
    jax.block_until_ready((mc_loss, mc_logits))

    assert mc_logits.shape == (B, C)
    assert bool(jnp.all(jnp.isfinite(mc_logits)))
    assert bool(jnp.isfinite(mc_loss))
    print("KERNEL_OK")
</pallas_src>

<mosaic_0001>
module attributes {stable_mosaic.version = 11 : i64} {
  func.func @gpt2_mc_kernel(%arg0: i32, %arg1: memref<1x16x128xbf16, #tpu.memory_space<vmem>>, %arg2: memref<1x1x16xf32, #tpu.memory_space<vmem>>, %arg3: memref<16x16xf32, #tpu.memory_space<vmem>>, %arg4: memref<128x128xbf16, #tpu.memory_space<vmem>>, %arg5: memref<16x128xf32, #tpu.memory_space<vmem>>, %arg6: memref<2x1x128xf32, #tpu.memory_space<vmem>>, %arg7: memref<2x1x128xf32, #tpu.memory_space<vmem>>, %arg8: memref<2x128x384xbf16, #tpu.memory_space<vmem>>, %arg9: memref<2x1x384xf32, #tpu.memory_space<vmem>>, %arg10: memref<2x128x128xbf16, #tpu.memory_space<vmem>>, %arg11: memref<2x1x128xf32, #tpu.memory_space<vmem>>, %arg12: memref<2x1x128xf32, #tpu.memory_space<vmem>>, %arg13: memref<2x1x128xf32, #tpu.memory_space<vmem>>, %arg14: memref<2x128x512xbf16, #tpu.memory_space<vmem>>, %arg15: memref<2x1x512xf32, #tpu.memory_space<vmem>>, %arg16: memref<2x512x128xbf16, #tpu.memory_space<vmem>>, %arg17: memref<2x1x128xf32, #tpu.memory_space<vmem>>, %arg18: memref<1x128xf32, #tpu.memory_space<vmem>>, %arg19: memref<1x128xf32, #tpu.memory_space<vmem>>, %arg20: memref<1x128xf32, #tpu.memory_space<vmem>>, %arg21: memref<1x1xf32, #tpu.memory_space<vmem>>, %arg22: memref<1x2x1xf32, #tpu.memory_space<vmem>>) attributes {dimension_semantics = [#tpu.dimension_semantics<parallel>], iteration_bounds = array<i64: 2>, scalar_prefetch = 0 : i64, scratch_operands = 0 : i64, tpu.core_type = #tpu.core_type<tc>, window_params = [{transform_indices = @transform_0, window_bounds = array<i64: 1, 16, 128>}, {transform_indices = @transform_1, window_bounds = array<i64: 1, 1, 16>}, {pipeline_mode = #tpu.pipeline_mode<synchronous>, transform_indices = @transform_2, window_bounds = array<i64: 16, 16>}, {pipeline_mode = #tpu.pipeline_mode<synchronous>, transform_indices = @transform_3, window_bounds = array<i64: 128, 128>}, {pipeline_mode = #tpu.pipeline_mode<synchronous>, transform_indices = @transform_4, window_bounds = array<i64: 16, 128>}, {pipeline_mode = #tpu.pipeline_mode<synchronous>, transform_indices = @transform_5, window_bounds = array<i64: 2, 1, 128>}, {pipeline_mode = #tpu.pipeline_mode<synchronous>, transform_indices = @transform_6, window_bounds = array<i64: 2, 1, 128>}, {pipeline_mode = #tpu.pipeline_mode<synchronous>, transform_indices = @transform_7, window_bounds = array<i64: 2, 128, 384>}, {pipeline_mode = #tpu.pipeline_mode<synchronous>, transform_indices = @transform_8, window_bounds = array<i64: 2, 1, 384>}, {pipeline_mode = #tpu.pipeline_mode<synchronous>, transform_indices = @transform_9, window_bounds = array<i64: 2, 128, 128>}, {pipeline_mode = #tpu.pipeline_mode<synchronous>, transform_indices = @transform_10, window_bounds = array<i64: 2, 1, 128>}, {pipeline_mode = #tpu.pipeline_mode<synchronous>, transform_indices = @transform_11, window_bounds = array<i64: 2, 1, 128>}, {pipeline_mode = #tpu.pipeline_mode<synchronous>, transform_indices = @transform_12, window_bounds = array<i64: 2, 1, 128>}, {pipeline_mode = #tpu.pipeline_mode<synchronous>, transform_indices = @transform_13, window_bounds = array<i64: 2, 128, 512>}, {pipeline_mode = #tpu.pipeline_mode<synchronous>, transform_indices = @transform_14, window_bounds = array<i64: 2, 1, 512>}, {pipeline_mode = #tpu.pipeline_mode<synchronous>, transform_indices = @transform_15, window_bounds = array<i64: 2, 512, 128>}, {pipeline_mode = #tpu.pipeline_mode<synchronous>, transform_indices = @transform_16, window_bounds = array<i64: 2, 1, 128>}, {pipeline_mode = #tpu.pipeline_mode<synchronous>, transform_indices = @transform_17, window_bounds = array<i64: 1, 128>}, {pipeline_mode = #tpu.pipeline_mode<synchronous>, transform_indices = @transform_18, window_bounds = array<i64: 1, 128>}, {pipeline_mode = #tpu.pipeline_mode<synchronous>, transform_indices = @transform_19, window_bounds = array<i64: 1, 128>}, {pipeline_mode = #tpu.pipeline_mode<synchronous>, transform_indices = @transform_20, window_bounds = array<i64: 1, 1>}, {transform_indices = @transform_21, window_bounds = array<i64: 1, 2, 1>}]} {
    %c0 = arith.constant 0 : index
    %c0_0 = arith.constant 0 : index
    %c0_1 = arith.constant 0 : index
    %0 = vector.load %arg1[%c0, %c0_0, %c0_1] : memref<1x16x128xbf16, #tpu.memory_space<vmem>>, vector<1x16x128xbf16>
    %1 = vector.shape_cast %0 : vector<1x16x128xbf16> to vector<16x128xbf16>
    %c0_2 = arith.constant 0 : index
    %c0_3 = arith.constant 0 : index
    %2 = vector.load %arg4[%c0_2, %c0_3] : memref<128x128xbf16, #tpu.memory_space<vmem>>, vector<128x128xbf16>
    %cst = arith.constant dense<0.000000e+00> : vector<16x128xf32>
    %3 = tpu.matmul %1, %2, %cst {dimension_numbers = #tpu.dot_dimension_numbers<[1], [0], [0], [1], [0, 0, 1, 1], [], []>} : vector<16x128xbf16>, vector<128x128xbf16>, vector<16x128xf32> -> vector<16x128xf32>
    %c0_4 = arith.constant 0 : index
    %c0_5 = arith.constant 0 : index
    %4 = vector.load %arg5[%c0_4, %c0_5] : memref<16x128xf32, #tpu.memory_space<vmem>>, vector<16x128xf32>
    %5 = arith.addf %3, %4 : vector<16x128xf32>
    %c0_6 = arith.constant 0 : index
    %c0_7 = arith.constant 0 : index
    %6 = vector.load %arg3[%c0_6, %c0_7] : memref<16x16xf32, #tpu.memory_space<vmem>>, vector<16x16xf32>
    %c0_8 = arith.constant 0 : index
    %c0_9 = arith.constant 0 : index
    %c0_10 = arith.constant 0 : index
    %7 = vector.load %arg2[%c0_8, %c0_9, %c0_10] : memref<1x1x16xf32, #tpu.memory_space<vmem>>, vector<1x1x16xf32>
    %8 = vector.shape_cast %7 : vector<1x1x16xf32> to vector<1x16xf32>
    %cst_11 = arith.constant 1.000000e+00 : f32
    %9 = vector.broadcast %cst_11 : f32 to vector<1x16xf32>
    %10 = arith.subf %9, %8 : vector<1x16xf32>
    %cst_12 = arith.constant -1.000000e+09 : f32
    %11 = vector.broadcast %cst_12 : f32 to vector<1x16xf32>
    %12 = arith.mulf %10, %11 : vector<1x16xf32>
    %13 = vector.broadcast %12 : vector<1x16xf32> to vector<16x16xf32>
    %14 = arith.addf %6, %13 : vector<16x16xf32>
    %c0_13 = arith.constant 0 : index
    %c0_14 = arith.constant 0 : index
    %c0_15 = arith.constant 0 : index
    %15 = vector.load %arg6[%c0_13, %c0_14, %c0_15] : memref<2x1x128xf32, #tpu.memory_space<vmem>>, vector<1x1x128xf32>
    %16 = vector.shape_cast %15 : vector<1x1x128xf32> to vector<1x128xf32>
    %c0_16 = arith.constant 0 : index
    %c0_17 = arith.constant 0 : index
    %c0_18 = arith.constant 0 : index
    %17 = vector.load %arg7[%c0_16, %c0_17, %c0_18] : memref<2x1x128xf32, #tpu.memory_space<vmem>>, vector<1x1x128xf32>
    %18 = vector.shape_cast %17 : vector<1x1x128xf32> to vector<1x128xf32>
    %cst_19 = arith.constant dense<0.000000e+00> : vector<16xf32>
    %19 = vector.multi_reduction <add>, %5, %cst_19 [1] : vector<16x128xf32> to vector<16xf32>
    %20 = vector.shape_cast %19 : vector<16xf32> to vector<16x1xf32>
    %cst_20 = arith.constant 1.280000e+02 : f32
    %21 = vector.broadcast %cst_20 : f32 to vector<16x1xf32>
    %22 = arith.divf %20, %21 : vector<16x1xf32>
    %23 = vector.broadcast %22 : vector<16x1xf32> to vector<16x128xf32>
    %24 = arith.subf %5, %23 : vector<16x128xf32>
    %25 = arith.mulf %24, %24 : vector<16x128xf32>
    %cst_21 = arith.constant dense<0.000000e+00> : vector<16xf32>
    %26 = vector.multi_reduction <add>, %25, %cst_21 [1] : vector<16x128xf32> to vector<16xf32>
    %27 = vector.shape_cast %26 : vector<16xf32> to vector<16x1xf32>
    %cst_22 = arith.constant 1.280000e+02 : f32
    %28 = vector.broadcast %cst_22 : f32 to vector<16x1xf32>
    %29 = arith.divf %27, %28 : vector<16x1xf32>
    %cst_23 = arith.constant 9.99999974E-6 : f32
    %30 = vector.broadcast %cst_23 : f32 to vector<16x1xf32>
    %31 = arith.addf %29, %30 : vector<16x1xf32>
    %32 = math.rsqrt %31 : vector<16x1xf32>
    %33 = vector.broadcast %32 : vector<16x1xf32> to vector<16x128xf32>
    %34 = arith.mulf %24, %33 : vector<16x128xf32>
    %35 = vector.broadcast %16 : vector<1x128xf32> to vector<16x128xf32>
    %36 = arith.mulf %34, %35 : vector<16x128xf32>
    %37 = vector.broadcast %18 : vector<1x128xf32> to vector<16x128xf32>
    %38 = arith.addf %36, %37 : vector<16x128xf32>
    %39 = arith.truncf %38 : vector<16x128xf32> to vector<16x128xbf16>
    %c0_24 = arith.constant 0 : index
    %c0_25 = arith.constant 0 : index
    %c0_26 = arith.constant 0 : index
    %40 = vector.load %arg8[%c0_24, %c0_25, %c0_26] : memref<2x128x384xbf16, #tpu.memory_space<vmem>>, vector<1x128x384xbf16>
    %41 = vector.shape_cast %40 : vector<1x128x384xbf16> to vector<128x384xbf16>
    %cst_27 = arith.constant dense<0.000000e+00> : vector<16x384xf32>
    %42 = tpu.matmul %39, %41, %cst_27 {dimension_numbers = #tpu.dot_dimension_numbers<[1], [0], [0], [1], [0, 0, 1, 1], [], []>} : vector<16x128xbf16>, vector<128x384xbf16>, vector<16x384xf32> -> vector<16x384xf32>
    %c0_28 = arith.constant 0 : index
    %c0_29 = arith.constant 0 : index
    %c0_30 = arith.constant 0 : index
    %43 = vector.load %arg9[%c0_28, %c0_29, %c0_30] : memref<2x1x384xf32, #tpu.memory_space<vmem>>, vector<1x1x384xf32>
    %44 = vector.shape_cast %43 : vector<1x1x384xf32> to vector<1x384xf32>
    %45 = vector.broadcast %44 : vector<1x384xf32> to vector<16x384xf32>
    %46 = arith.addf %42, %45 : vector<16x384xf32>
    %47 = vector.extract_strided_slice %46 {offsets = [0, 0], sizes = [16, 128], strides = [1, 1]} : vector<16x384xf32> to vector<16x128xf32>
    %cst_31 = arith.constant 1.250000e-01 : f32
    %48 = vector.broadcast %cst_31 : f32 to vector<16x128xf32>
    %49 = arith.mulf %47, %48 : vector<16x128xf32>
    %50 = vector.extract_strided_slice %46 {offsets = [0, 128], sizes = [16, 128], strides = [1, 1]} : vector<16x384xf32> to vector<16x128xf32>
    %51 = vector.extract_strided_slice %46 {offsets = [0, 256], sizes = [16, 128], strides = [1, 1]} : vector<16x384xf32> to vector<16x128xf32>
    %c0_32 = arith.constant 0 : index
    %c0_33 = arith.constant 0 : index
    %c0_34 = arith.constant 0 : index
    %52 = vector.load %arg10[%c0_32, %c0_33, %c0_34] : memref<2x128x128xbf16, #tpu.memory_space<vmem>>, vector<1x128x128xbf16>
    %53 = vector.shape_cast %52 : vector<1x128x128xbf16> to vector<128x128xbf16>
    %cst_35 = arith.constant 0.000000e+00 : f32
    %54 = vector.broadcast %cst_35 : f32 to vector<16x128xf32>
    %55 = vector.extract_strided_slice %49 {offsets = [0, 0], sizes = [16, 64], strides = [1, 1]} : vector<16x128xf32> to vector<16x64xf32>
    %56 = arith.truncf %55 : vector<16x64xf32> to vector<16x64xbf16>
    %57 = vector.extract_strided_slice %50 {offsets = [0, 0], sizes = [16, 64], strides = [1, 1]} : vector<16x128xf32> to vector<16x64xf32>
    %58 = arith.truncf %57 : vector<16x64xf32> to vector<16x64xbf16>
    %59 = vector.extract_strided_slice %51 {offsets = [0, 0], sizes = [16, 64], strides = [1, 1]} : vector<16x128xf32> to vector<16x64xf32>
    %60 = arith.truncf %59 : vector<16x64xf32> to vector<16x64xbf16>
    %cst_36 = arith.constant dense<0.000000e+00> : vector<16x16xf32>
    %61 = tpu.matmul %56, %58, %cst_36 {dimension_numbers = #tpu.dot_dimension_numbers<[1], [1], [0], [0], [0, 0, 1, 0], [], []>} : vector<16x64xbf16>, vector<16x64xbf16>, vector<16x16xf32> -> vector<16x16xf32>
    %62 = arith.addf %61, %14 : vector<16x16xf32>
    %cst_37 = arith.constant dense<0xFF800000> : vector<16xf32>
    %63 = vector.multi_reduction <maximumf>, %62, %cst_37 [1] : vector<16x16xf32> to vector<16xf32>
    %64 = vector.shape_cast %63 : vector<16xf32> to vector<16x1xf32>
    %65 = vector.broadcast %64 : vector<16x1xf32> to vector<16x16xf32>
    %66 = arith.subf %62, %65 : vector<16x16xf32>
    %67 = math.exp %66 : vector<16x16xf32>
    %cst_38 = arith.constant dense<0.000000e+00> : vector<16xf32>
    %68 = vector.multi_reduction <add>, %67, %cst_38 [1] : vector<16x16xf32> to vector<16xf32>
    %69 = vector.shape_cast %68 : vector<16xf32> to vector<16x1xf32>
    %70 = tpu.reciprocal %69 {approx = true} : vector<16x1xf32> -> vector<16x1xf32>
    %71 = vector.broadcast %70 : vector<16x1xf32> to vector<16x16xf32>
    %72 = arith.mulf %67, %71 : vector<16x16xf32>
    %73 = arith.truncf %72 : vector<16x16xf32> to vector<16x16xbf16>
    %cst_39 = arith.constant dense<0.000000e+00> : vector<16x64xf32>
    %74 = tpu.matmul %73, %60, %cst_39 {dimension_numbers = #tpu.dot_dimension_numbers<[1], [0], [0], [1], [0, 0, 1, 1], [], []>} : vector<16x16xbf16>, vector<16x64xbf16>, vector<16x64xf32> -> vector<16x64xf32>
    %75 = arith.truncf %74 : vector<16x64xf32> to vector<16x64xbf16>
    %76 = vector.extract_strided_slice %53 {offsets = [0, 0], sizes = [64, 128], strides = [1, 1]} : vector<128x128xbf16> to vector<64x128xbf16>
    %cst_40 = arith.constant dense<0.000000e+00> : vector<16x128xf32>
    %77 = tpu.matmul %75, %76, %cst_40 {dimension_numbers = #tpu.dot_dimension_numbers<[1], [0], [0], [1], [0, 0, 1, 1], [], []>} : vector<16x64xbf16>, vector<64x128xbf16>, vector<16x128xf32> -> vector<16x128xf32>
    %78 = arith.addf %54, %77 : vector<16x128xf32>
    %79 = vector.extract_strided_slice %49 {offsets = [0, 64], sizes = [16, 64], strides = [1, 1]} : vector<16x128xf32> to vector<16x64xf32>
    %80 = arith.truncf %79 : vector<16x64xf32> to vector<16x64xbf16>
    %81 = vector.extract_strided_slice %50 {offsets = [0, 64], sizes = [16, 64], strides = [1, 1]} : vector<16x128xf32> to vector<16x64xf32>
    %82 = arith.truncf %81 : vector<16x64xf32> to vector<16x64xbf16>
    %83 = vector.extract_strided_slice %51 {offsets = [0, 64], sizes = [16, 64], strides = [1, 1]} : vector<16x128xf32> to vector<16x64xf32>
    %84 = arith.truncf %83 : vector<16x64xf32> to vector<16x64xbf16>
    %cst_41 = arith.constant dense<0.000000e+00> : vector<16x16xf32>
    %85 = tpu.matmul %80, %82, %cst_41 {dimension_numbers = #tpu.dot_dimension_numbers<[1], [1], [0], [0], [0, 0, 1, 0], [], []>} : vector<16x64xbf16>, vector<16x64xbf16>, vector<16x16xf32> -> vector<16x16xf32>
    %86 = arith.addf %85, %14 : vector<16x16xf32>
    %cst_42 = arith.constant dense<0xFF800000> : vector<16xf32>
    %87 = vector.multi_reduction <maximumf>, %86, %cst_42 [1] : vector<16x16xf32> to vector<16xf32>
    %88 = vector.shape_cast %87 : vector<16xf32> to vector<16x1xf32>
    %89 = vector.broadcast %88 : vector<16x1xf32> to vector<16x16xf32>
    %90 = arith.subf %86, %89 : vector<16x16xf32>
    %91 = math.exp %90 : vector<16x16xf32>
    %cst_43 = arith.constant dense<0.000000e+00> : vector<16xf32>
    %92 = vector.multi_reduction <add>, %91, %cst_43 [1] : vector<16x16xf32> to vector<16xf32>
    %93 = vector.shape_cast %92 : vector<16xf32> to vector<16x1xf32>
    %94 = tpu.reciprocal %93 {approx = true} : vector<16x1xf32> -> vector<16x1xf32>
    %95 = vector.broadcast %94 : vector<16x1xf32> to vector<16x16xf32>
    %96 = arith.mulf %91, %95 : vector<16x16xf32>
    %97 = arith.truncf %96 : vector<16x16xf32> to vector<16x16xbf16>
    %cst_44 = arith.constant dense<0.000000e+00> : vector<16x64xf32>
    %98 = tpu.matmul %97, %84, %cst_44 {dimension_numbers = #tpu.dot_dimension_numbers<[1], [0], [0], [1], [0, 0, 1, 1], [], []>} : vector<16x16xbf16>, vector<16x64xbf16>, vector<16x64xf32> -> vector<16x64xf32>
    %99 = arith.truncf %98 : vector<16x64xf32> to vector<16x64xbf16>
    %100 = vector.extract_strided_slice %53 {offsets = [64, 0], sizes = [64, 128], strides = [1, 1]} : vector<128x128xbf16> to vector<64x128xbf16>
    %cst_45 = arith.constant dense<0.000000e+00> : vector<16x128xf32>
    %101 = tpu.matmul %99, %100, %cst_45 {dimension_numbers = #tpu.dot_dimension_numbers<[1], [0], [0], [1], [0, 0, 1, 1], [], []>} : vector<16x64xbf16>, vector<64x128xbf16>, vector<16x128xf32> -> vector<16x128xf32>
    %102 = arith.addf %78, %101 : vector<16x128xf32>
    %103 = arith.addf %5, %102 : vector<16x128xf32>
    %c0_46 = arith.constant 0 : index
    %c0_47 = arith.constant 0 : index
    %c0_48 = arith.constant 0 : index
    %104 = vector.load %arg11[%c0_46, %c0_47, %c0_48] : memref<2x1x128xf32, #tpu.memory_space<vmem>>, vector<1x1x128xf32>
    %105 = vector.shape_cast %104 : vector<1x1x128xf32> to vector<1x128xf32>
    %106 = vector.broadcast %105 : vector<1x128xf32> to vector<16x128xf32>
    %107 = arith.addf %103, %106 : vector<16x128xf32>
    %c0_49 = arith.constant 0 : index
    %c0_50 = arith.constant 0 : index
    %c0_51 = arith.constant 0 : index
    %108 = vector.load %arg12[%c0_49, %c0_50, %c0_51] : memref<2x1x128xf32, #tpu.memory_space<vmem>>, vector<1x1x128xf32>
    %109 = vector.shape_cast %108 : vector<1x1x128xf32> to vector<1x128xf32>
    %c0_52 = arith.constant 0 : index
    %c0_53 = arith.constant 0 : index
    %c0_54 = arith.constant 0 : index
    %110 = vector.load %arg13[%c0_52, %c0_53, %c0_54] : memref<2x1x128xf32, #tpu.memory_space<vmem>>, vector<1x1x128xf32>
    %111 = vector.shape_cast %110 : vector<1x1x128xf32> to vector<1x128xf32>
    %cst_55 = arith.constant dense<0.000000e+00> : vector<16xf32>
    %112 = vector.multi_reduction <add>, %107, %cst_55 [1] : vector<16x128xf32> to vector<16xf32>
    %113 = vector.shape_cast %112 : vector<16xf32> to vector<16x1xf32>
    %cst_56 = arith.constant 1.280000e+02 : f32
    %114 = vector.broadcast %cst_56 : f32 to vector<16x1xf32>
    %115 = arith.divf %113, %114 : vector<16x1xf32>
    %116 = vector.broadcast %115 : vector<16x1xf32> to vector<16x128xf32>
    %117 = arith.subf %107, %116 : vector<16x128xf32>
    %118 = arith.mulf %117, %117 : vector<16x128xf32>
    %cst_57 = arith.constant dense<0.000000e+00> : vector<16xf32>
    %119 = vector.multi_reduction <add>, %118, %cst_57 [1] : vector<16x128xf32> to vector<16xf32>
    %120 = vector.shape_cast %119 : vector<16xf32> to vector<16x1xf32>
    %cst_58 = arith.constant 1.280000e+02 : f32
    %121 = vector.broadcast %cst_58 : f32 to vector<16x1xf32>
    %122 = arith.divf %120, %121 : vector<16x1xf32>
    %cst_59 = arith.constant 9.99999974E-6 : f32
    %123 = vector.broadcast %cst_59 : f32 to vector<16x1xf32>
    %124 = arith.addf %122, %123 : vector<16x1xf32>
    %125 = math.rsqrt %124 : vector<16x1xf32>
    %126 = vector.broadcast %125 : vector<16x1xf32> to vector<16x128xf32>
    %127 = arith.mulf %117, %126 : vector<16x128xf32>
    %128 = vector.broadcast %109 : vector<1x128xf32> to vector<16x128xf32>
    %129 = arith.mulf %127, %128 : vector<16x128xf32>
    %130 = vector.broadcast %111 : vector<1x128xf32> to vector<16x128xf32>
    %131 = arith.addf %129, %130 : vector<16x128xf32>
    %132 = arith.truncf %131 : vector<16x128xf32> to vector<16x128xbf16>
    %c0_60 = arith.constant 0 : index
    %c0_61 = arith.constant 0 : index
    %c0_62 = arith.constant 0 : index
    %133 = vector.load %arg14[%c0_60, %c0_61, %c0_62] : memref<2x128x512xbf16, #tpu.memory_space<vmem>>, vector<1x128x512xbf16>
    %134 = vector.shape_cast %133 : vector<1x128x512xbf16> to vector<128x512xbf16>
    %cst_63 = arith.constant dense<0.000000e+00> : vector<16x512xf32>
    %135 = tpu.matmul %132, %134, %cst_63 {dimension_numbers = #tpu.dot_dimension_numbers<[1], [0], [0], [1], [0, 0, 1, 1], [], []>} : vector<16x128xbf16>, vector<128x512xbf16>, vector<16x512xf32> -> vector<16x512xf32>
    %c0_64 = arith.constant 0 : index
    %c0_65 = arith.constant 0 : index
    %c0_66 = arith.constant 0 : index
    %136 = vector.load %arg15[%c0_64, %c0_65, %c0_66] : memref<2x1x512xf32, #tpu.memory_space<vmem>>, vector<1x1x512xf32>
    %137 = vector.shape_cast %136 : vector<1x1x512xf32> to vector<1x512xf32>
    %138 = vector.broadcast %137 : vector<1x512xf32> to vector<16x512xf32>
    %139 = arith.addf %135, %138 : vector<16x512xf32>
    %140 = arith.mulf %139, %139 : vector<16x512xf32>
    %141 = arith.mulf %139, %140 : vector<16x512xf32>
    %cst_67 = arith.constant 4.471500e-02 : f32
    %142 = vector.broadcast %cst_67 : f32 to vector<16x512xf32>
    %143 = arith.mulf %142, %141 : vector<16x512xf32>
    %144 = arith.addf %139, %143 : vector<16x512xf32>
    %cst_68 = arith.constant 0.797884583 : f32
    %145 = vector.broadcast %cst_68 : f32 to vector<16x512xf32>
    %146 = arith.mulf %145, %144 : vector<16x512xf32>
    %147 = math.tanh %146 : vector<16x512xf32>
    %cst_69 = arith.constant 1.000000e+00 : f32
    %148 = vector.broadcast %cst_69 : f32 to vector<16x512xf32>
    %149 = arith.addf %148, %147 : vector<16x512xf32>
    %cst_70 = arith.constant 5.000000e-01 : f32
    %150 = vector.broadcast %cst_70 : f32 to vector<16x512xf32>
    %151 = arith.mulf %150, %149 : vector<16x512xf32>
    %152 = arith.mulf %139, %151 : vector<16x512xf32>
    %153 = arith.truncf %152 : vector<16x512xf32> to vector<16x512xbf16>
    %c0_71 = arith.constant 0 : index
    %c0_72 = arith.constant 0 : index
    %c0_73 = arith.constant 0 : index
    %154 = vector.load %arg16[%c0_71, %c0_72, %c0_73] : memref<2x512x128xbf16, #tpu.memory_space<vmem>>, vector<1x512x128xbf16>
    %155 = vector.shape_cast %154 : vector<1x512x128xbf16> to vector<512x128xbf16>
    %cst_74 = arith.constant dense<0.000000e+00> : vector<16x128xf32>
    %156 = tpu.matmul %153, %155, %cst_74 {dimension_numbers = #tpu.dot_dimension_numbers<[1], [0], [0], [1], [0, 0, 1, 1], [], []>} : vector<16x512xbf16>, vector<512x128xbf16>, vector<16x128xf32> -> vector<16x128xf32>
    %c0_75 = arith.constant 0 : index
    %c0_76 = arith.constant 0 : index
    %c0_77 = arith.constant 0 : index
    %157 = vector.load %arg17[%c0_75, %c0_76, %c0_77] : memref<2x1x128xf32, #tpu.memory_space<vmem>>, vector<1x1x128xf32>
    %158 = vector.shape_cast %157 : vector<1x1x128xf32> to vector<1x128xf32>
    %159 = vector.broadcast %158 : vector<1x128xf32> to vector<16x128xf32>
    %160 = arith.addf %156, %159 : vector<16x128xf32>
    %161 = arith.addf %107, %160 : vector<16x128xf32>
    %c1 = arith.constant 1 : index
    %c0_78 = arith.constant 0 : index
    %c0_79 = arith.constant 0 : index
    %162 = vector.load %arg6[%c1, %c0_78, %c0_79] : memref<2x1x128xf32, #tpu.memory_space<vmem>>, vector<1x1x128xf32>
    %163 = vector.shape_cast %162 : vector<1x1x128xf32> to vector<1x128xf32>
    %c1_80 = arith.constant 1 : index
    %c0_81 = arith.constant 0 : index
    %c0_82 = arith.constant 0 : index
    %164 = vector.load %arg7[%c1_80, %c0_81, %c0_82] : memref<2x1x128xf32, #tpu.memory_space<vmem>>, vector<1x1x128xf32>
    %165 = vector.shape_cast %164 : vector<1x1x128xf32> to vector<1x128xf32>
    %cst_83 = arith.constant dense<0.000000e+00> : vector<16xf32>
    %166 = vector.multi_reduction <add>, %161, %cst_83 [1] : vector<16x128xf32> to vector<16xf32>
    %167 = vector.shape_cast %166 : vector<16xf32> to vector<16x1xf32>
    %cst_84 = arith.constant 1.280000e+02 : f32
    %168 = vector.broadcast %cst_84 : f32 to vector<16x1xf32>
    %169 = arith.divf %167, %168 : vector<16x1xf32>
    %170 = vector.broadcast %169 : vector<16x1xf32> to vector<16x128xf32>
    %171 = arith.subf %161, %170 : vector<16x128xf32>
    %172 = arith.mulf %171, %171 : vector<16x128xf32>
    %cst_85 = arith.constant dense<0.000000e+00> : vector<16xf32>
    %173 = vector.multi_reduction <add>, %172, %cst_85 [1] : vector<16x128xf32> to vector<16xf32>
    %174 = vector.shape_cast %173 : vector<16xf32> to vector<16x1xf32>
    %cst_86 = arith.constant 1.280000e+02 : f32
    %175 = vector.broadcast %cst_86 : f32 to vector<16x1xf32>
    %176 = arith.divf %174, %175 : vector<16x1xf32>
    %cst_87 = arith.constant 9.99999974E-6 : f32
    %177 = vector.broadcast %cst_87 : f32 to vector<16x1xf32>
    %178 = arith.addf %176, %177 : vector<16x1xf32>
    %179 = math.rsqrt %178 : vector<16x1xf32>
    %180 = vector.broadcast %179 : vector<16x1xf32> to vector<16x128xf32>
    %181 = arith.mulf %171, %180 : vector<16x128xf32>
    %182 = vector.broadcast %163 : vector<1x128xf32> to vector<16x128xf32>
    %183 = arith.mulf %181, %182 : vector<16x128xf32>
    %184 = vector.broadcast %165 : vector<1x128xf32> to vector<16x128xf32>
    %185 = arith.addf %183, %184 : vector<16x128xf32>
    %186 = arith.truncf %185 : vector<16x128xf32> to vector<16x128xbf16>
    %c1_88 = arith.constant 1 : index
    %c0_89 = arith.constant 0 : index
    %c0_90 = arith.constant 0 : index
    %187 = vector.load %arg8[%c1_88, %c0_89, %c0_90] : memref<2x128x384xbf16, #tpu.memory_space<vmem>>, vector<1x128x384xbf16>
    %188 = vector.shape_cast %187 : vector<1x128x384xbf16> to vector<128x384xbf16>
    %cst_91 = arith.constant dense<0.000000e+00> : vector<16x384xf32>
    %189 = tpu.matmul %186, %188, %cst_91 {dimension_numbers = #tpu.dot_dimension_numbers<[1], [0], [0], [1], [0, 0, 1, 1], [], []>} : vector<16x128xbf16>, vector<128x384xbf16>, vector<16x384xf32> -> vector<16x384xf32>
    %c1_92 = arith.constant 1 : index
    %c0_93 = arith.constant 0 : index
    %c0_94 = arith.constant 0 : index
    %190 = vector.load %arg9[%c1_92, %c0_93, %c0_94] : memref<2x1x384xf32, #tpu.memory_space<vmem>>, vector<1x1x384xf32>
    %191 = vector.shape_cast %190 : vector<1x1x384xf32> to vector<1x384xf32>
    %192 = vector.broadcast %191 : vector<1x384xf32> to vector<16x384xf32>
    %193 = arith.addf %189, %192 : vector<16x384xf32>
    %194 = vector.extract_strided_slice %193 {offsets = [0, 0], sizes = [16, 128], strides = [1, 1]} : vector<16x384xf32> to vector<16x128xf32>
    %cst_95 = arith.constant 1.250000e-01 : f32
    %195 = vector.broadcast %cst_95 : f32 to vector<16x128xf32>
    %196 = arith.mulf %194, %195 : vector<16x128xf32>
    %197 = vector.extract_strided_slice %193 {offsets = [0, 128], sizes = [16, 128], strides = [1, 1]} : vector<16x384xf32> to vector<16x128xf32>
    %198 = vector.extract_strided_slice %193 {offsets = [0, 256], sizes = [16, 128], strides = [1, 1]} : vector<16x384xf32> to vector<16x128xf32>
    %c1_96 = arith.constant 1 : index
    %c0_97 = arith.constant 0 : index
    %c0_98 = arith.constant 0 : index
    %199 = vector.load %arg10[%c1_96, %c0_97, %c0_98] : memref<2x128x128xbf16, #tpu.memory_space<vmem>>, vector<1x128x128xbf16>
    %200 = vector.shape_cast %199 : vector<1x128x128xbf16> to vector<128x128xbf16>
    %cst_99 = arith.constant 0.000000e+00 : f32
    %201 = vector.broadcast %cst_99 : f32 to vector<16x128xf32>
    %202 = vector.extract_strided_slice %196 {offsets = [0, 0], sizes = [16, 64], strides = [1, 1]} : vector<16x128xf32> to vector<16x64xf32>
    %203 = arith.truncf %202 : vector<16x64xf32> to vector<16x64xbf16>
    %204 = vector.extract_strided_slice %197 {offsets = [0, 0], sizes = [16, 64], strides = [1, 1]} : vector<16x128xf32> to vector<16x64xf32>
    %205 = arith.truncf %204 : vector<16x64xf32> to vector<16x64xbf16>
    %206 = vector.extract_strided_slice %198 {offsets = [0, 0], sizes = [16, 64], strides = [1, 1]} : vector<16x128xf32> to vector<16x64xf32>
    %207 = arith.truncf %206 : vector<16x64xf32> to vector<16x64xbf16>
    %cst_100 = arith.constant dense<0.000000e+00> : vector<16x16xf32>
    %208 = tpu.matmul %203, %205, %cst_100 {dimension_numbers = #tpu.dot_dimension_numbers<[1], [1], [0], [0], [0, 0, 1, 0], [], []>} : vector<16x64xbf16>, vector<16x64xbf16>, vector<16x16xf32> -> vector<16x16xf32>
    %209 = arith.addf %208, %14 : vector<16x16xf32>
    %cst_101 = arith.constant dense<0xFF800000> : vector<16xf32>
    %210 = vector.multi_reduction <maximumf>, %209, %cst_101 [1] : vector<16x16xf32> to vector<16xf32>
    %211 = vector.shape_cast %210 : vector<16xf32> to vector<16x1xf32>
    %212 = vector.broadcast %211 : vector<16x1xf32> to vector<16x16xf32>
    %213 = arith.subf %209, %212 : vector<16x16xf32>
    %214 = math.exp %213 : vector<16x16xf32>
    %cst_102 = arith.constant dense<0.000000e+00> : vector<16xf32>
    %215 = vector.multi_reduction <add>, %214, %cst_102 [1] : vector<16x16xf32> to vector<16xf32>
    %216 = vector.shape_cast %215 : vector<16xf32> to vector<16x1xf32>
    %217 = tpu.reciprocal %216 {approx = true} : vector<16x1xf32> -> vector<16x1xf32>
    %218 = vector.broadcast %217 : vector<16x1xf32> to vector<16x16xf32>
    %219 = arith.mulf %214, %218 : vector<16x16xf32>
    %220 = arith.truncf %219 : vector<16x16xf32> to vector<16x16xbf16>
    %cst_103 = arith.constant dense<0.000000e+00> : vector<16x64xf32>
    %221 = tpu.matmul %220, %207, %cst_103 {dimension_numbers = #tpu.dot_dimension_numbers<[1], [0], [0], [1], [0, 0, 1, 1], [], []>} : vector<16x16xbf16>, vector<16x64xbf16>, vector<16x64xf32> -> vector<16x64xf32>
    %222 = arith.truncf %221 : vector<16x64xf32> to vector<16x64xbf16>
    %223 = vector.extract_strided_slice %200 {offsets = [0, 0], sizes = [64, 128], strides = [1, 1]} : vector<128x128xbf16> to vector<64x128xbf16>
    %cst_104 = arith.constant dense<0.000000e+00> : vector<16x128xf32>
    %224 = tpu.matmul %222, %223, %cst_104 {dimension_numbers = #tpu.dot_dimension_numbers<[1], [0], [0], [1], [0, 0, 1, 1], [], []>} : vector<16x64xbf16>, vector<64x128xbf16>, vector<16x128xf32> -> vector<16x128xf32>
    %225 = arith.addf %201, %224 : vector<16x128xf32>
    %226 = vector.extract_strided_slice %196 {offsets = [0, 64], sizes = [16, 64], strides = [1, 1]} : vector<16x128xf32> to vector<16x64xf32>
    %227 = arith.truncf %226 : vector<16x64xf32> to vector<16x64xbf16>
    %228 = vector.extract_strided_slice %197 {offsets = [0, 64], sizes = [16, 64], strides = [1, 1]} : vector<16x128xf32> to vector<16x64xf32>
    %229 = arith.truncf %228 : vector<16x64xf32> to vector<16x64xbf16>
    %230 = vector.extract_strided_slice %198 {offsets = [0, 64], sizes = [16, 64], strides = [1, 1]} : vector<16x128xf32> to vector<16x64xf32>
    %231 = arith.truncf %230 : vector<16x64xf32> to vector<16x64xbf16>
    %cst_105 = arith.constant dense<0.000000e+00> : vector<16x16xf32>
    %232 = tpu.matmul %227, %229, %cst_105 {dimension_numbers = #tpu.dot_dimension_numbers<[1], [1], [0], [0], [0, 0, 1, 0], [], []>} : vector<16x64xbf16>, vector<16x64xbf16>, vector<16x16xf32> -> vector<16x16xf32>
    %233 = arith.addf %232, %14 : vector<16x16xf32>
    %cst_106 = arith.constant dense<0xFF800000> : vector<16xf32>
    %234 = vector.multi_reduction <maximumf>, %233, %cst_106 [1] : vector<16x16xf32> to vector<16xf32>
    %235 = vector.shape_cast %234 : vector<16xf32> to vector<16x1xf32>
    %236 = vector.broadcast %235 : vector<16x1xf32> to vector<16x16xf32>
    %237 = arith.subf %233, %236 : vector<16x16xf32>
    %238 = math.exp %237 : vector<16x16xf32>
    %cst_107 = arith.constant dense<0.000000e+00> : vector<16xf32>
    %239 = vector.multi_reduction <add>, %238, %cst_107 [1] : vector<16x16xf32> to vector<16xf32>
    %240 = vector.shape_cast %239 : vector<16xf32> to vector<16x1xf32>
    %241 = tpu.reciprocal %240 {approx = true} : vector<16x1xf32> -> vector<16x1xf32>
    %242 = vector.broadcast %241 : vector<16x1xf32> to vector<16x16xf32>
    %243 = arith.mulf %238, %242 : vector<16x16xf32>
    %244 = arith.truncf %243 : vector<16x16xf32> to vector<16x16xbf16>
    %cst_108 = arith.constant dense<0.000000e+00> : vector<16x64xf32>
    %245 = tpu.matmul %244, %231, %cst_108 {dimension_numbers = #tpu.dot_dimension_numbers<[1], [0], [0], [1], [0, 0, 1, 1], [], []>} : vector<16x16xbf16>, vector<16x64xbf16>, vector<16x64xf32> -> vector<16x64xf32>
    %246 = arith.truncf %245 : vector<16x64xf32> to vector<16x64xbf16>
    %247 = vector.extract_strided_slice %200 {offsets = [64, 0], sizes = [64, 128], strides = [1, 1]} : vector<128x128xbf16> to vector<64x128xbf16>
    %cst_109 = arith.constant dense<0.000000e+00> : vector<16x128xf32>
    %248 = tpu.matmul %246, %247, %cst_109 {dimension_numbers = #tpu.dot_dimension_numbers<[1], [0], [0], [1], [0, 0, 1, 1], [], []>} : vector<16x64xbf16>, vector<64x128xbf16>, vector<16x128xf32> -> vector<16x128xf32>
    %249 = arith.addf %225, %248 : vector<16x128xf32>
    %250 = arith.addf %161, %249 : vector<16x128xf32>
    %c1_110 = arith.constant 1 : index
    %c0_111 = arith.constant 0 : index
    %c0_112 = arith.constant 0 : index
    %251 = vector.load %arg11[%c1_110, %c0_111, %c0_112] : memref<2x1x128xf32, #tpu.memory_space<vmem>>, vector<1x1x128xf32>
    %252 = vector.shape_cast %251 : vector<1x1x128xf32> to vector<1x128xf32>
    %253 = vector.broadcast %252 : vector<1x128xf32> to vector<16x128xf32>
    %254 = arith.addf %250, %253 : vector<16x128xf32>
    %c1_113 = arith.constant 1 : index
    %c0_114 = arith.constant 0 : index
    %c0_115 = arith.constant 0 : index
    %255 = vector.load %arg12[%c1_113, %c0_114, %c0_115] : memref<2x1x128xf32, #tpu.memory_space<vmem>>, vector<1x1x128xf32>
    %256 = vector.shape_cast %255 : vector<1x1x128xf32> to vector<1x128xf32>
    %c1_116 = arith.constant 1 : index
    %c0_117 = arith.constant 0 : index
    %c0_118 = arith.constant 0 : index
    %257 = vector.load %arg13[%c1_116, %c0_117, %c0_118] : memref<2x1x128xf32, #tpu.memory_space<vmem>>, vector<1x1x128xf32>
    %258 = vector.shape_cast %257 : vector<1x1x128xf32> to vector<1x128xf32>
    %cst_119 = arith.constant dense<0.000000e+00> : vector<16xf32>
    %259 = vector.multi_reduction <add>, %254, %cst_119 [1] : vector<16x128xf32> to vector<16xf32>
    %260 = vector.shape_cast %259 : vector<16xf32> to vector<16x1xf32>
    %cst_120 = arith.constant 1.280000e+02 : f32
    %261 = vector.broadcast %cst_120 : f32 to vector<16x1xf32>
    %262 = arith.divf %260, %261 : vector<16x1xf32>
    %263 = vector.broadcast %262 : vector<16x1xf32> to vector<16x128xf32>
    %264 = arith.subf %254, %263 : vector<16x128xf32>
    %265 = arith.mulf %264, %264 : vector<16x128xf32>
    %cst_121 = arith.constant dense<0.000000e+00> : vector<16xf32>
    %266 = vector.multi_reduction <add>, %265, %cst_121 [1] : vector<16x128xf32> to vector<16xf32>
    %267 = vector.shape_cast %266 : vector<16xf32> to vector<16x1xf32>
    %cst_122 = arith.constant 1.280000e+02 : f32
    %268 = vector.broadcast %cst_122 : f32 to vector<16x1xf32>
    %269 = arith.divf %267, %268 : vector<16x1xf32>
    %cst_123 = arith.constant 9.99999974E-6 : f32
    %270 = vector.broadcast %cst_123 : f32 to vector<16x1xf32>
    %271 = arith.addf %269, %270 : vector<16x1xf32>
    %272 = math.rsqrt %271 : vector<16x1xf32>
    %273 = vector.broadcast %272 : vector<16x1xf32> to vector<16x128xf32>
    %274 = arith.mulf %264, %273 : vector<16x128xf32>
    %275 = vector.broadcast %256 : vector<1x128xf32> to vector<16x128xf32>
    %276 = arith.mulf %274, %275 : vector<16x128xf32>
    %277 = vector.broadcast %258 : vector<1x128xf32> to vector<16x128xf32>
    %278 = arith.addf %276, %277 : vector<16x128xf32>
    %279 = arith.truncf %278 : vector<16x128xf32> to vector<16x128xbf16>
    %c1_124 = arith.constant 1 : index
    %c0_125 = arith.constant 0 : index
    %c0_126 = arith.constant 0 : index
    %280 = vector.load %arg14[%c1_124, %c0_125, %c0_126] : memref<2x128x512xbf16, #tpu.memory_space<vmem>>, vector<1x128x512xbf16>
    %281 = vector.shape_cast %280 : vector<1x128x512xbf16> to vector<128x512xbf16>
    %cst_127 = arith.constant dense<0.000000e+00> : vector<16x512xf32>
    %282 = tpu.matmul %279, %281, %cst_127 {dimension_numbers = #tpu.dot_dimension_numbers<[1], [0], [0], [1], [0, 0, 1, 1], [], []>} : vector<16x128xbf16>, vector<128x512xbf16>, vector<16x512xf32> -> vector<16x512xf32>
    %c1_128 = arith.constant 1 : index
    %c0_129 = arith.constant 0 : index
    %c0_130 = arith.constant 0 : index
    %283 = vector.load %arg15[%c1_128, %c0_129, %c0_130] : memref<2x1x512xf32, #tpu.memory_space<vmem>>, vector<1x1x512xf32>
    %284 = vector.shape_cast %283 : vector<1x1x512xf32> to vector<1x512xf32>
    %285 = vector.broadcast %284 : vector<1x512xf32> to vector<16x512xf32>
    %286 = arith.addf %282, %285 : vector<16x512xf32>
    %287 = arith.mulf %286, %286 : vector<16x512xf32>
    %288 = arith.mulf %286, %287 : vector<16x512xf32>
    %cst_131 = arith.constant 4.471500e-02 : f32
    %289 = vector.broadcast %cst_131 : f32 to vector<16x512xf32>
    %290 = arith.mulf %289, %288 : vector<16x512xf32>
    %291 = arith.addf %286, %290 : vector<16x512xf32>
    %cst_132 = arith.constant 0.797884583 : f32
    %292 = vector.broadcast %cst_132 : f32 to vector<16x512xf32>
    %293 = arith.mulf %292, %291 : vector<16x512xf32>
    %294 = math.tanh %293 : vector<16x512xf32>
    %cst_133 = arith.constant 1.000000e+00 : f32
    %295 = vector.broadcast %cst_133 : f32 to vector<16x512xf32>
    %296 = arith.addf %295, %294 : vector<16x512xf32>
    %cst_134 = arith.constant 5.000000e-01 : f32
    %297 = vector.broadcast %cst_134 : f32 to vector<16x512xf32>
    %298 = arith.mulf %297, %296 : vector<16x512xf32>
    %299 = arith.mulf %286, %298 : vector<16x512xf32>
    %300 = arith.truncf %299 : vector<16x512xf32> to vector<16x512xbf16>
    %c1_135 = arith.constant 1 : index
    %c0_136 = arith.constant 0 : index
    %c0_137 = arith.constant 0 : index
    %301 = vector.load %arg16[%c1_135, %c0_136, %c0_137] : memref<2x512x128xbf16, #tpu.memory_space<vmem>>, vector<1x512x128xbf16>
    %302 = vector.shape_cast %301 : vector<1x512x128xbf16> to vector<512x128xbf16>
    %cst_138 = arith.constant dense<0.000000e+00> : vector<16x128xf32>
    %303 = tpu.matmul %300, %302, %cst_138 {dimension_numbers = #tpu.dot_dimension_numbers<[1], [0], [0], [1], [0, 0, 1, 1], [], []>} : vector<16x512xbf16>, vector<512x128xbf16>, vector<16x128xf32> -> vector<16x128xf32>
    %c1_139 = arith.constant 1 : index
    %c0_140 = arith.constant 0 : index
    %c0_141 = arith.constant 0 : index
    %304 = vector.load %arg17[%c1_139, %c0_140, %c0_141] : memref<2x1x128xf32, #tpu.memory_space<vmem>>, vector<1x1x128xf32>
    %305 = vector.shape_cast %304 : vector<1x1x128xf32> to vector<1x128xf32>
    %306 = vector.broadcast %305 : vector<1x128xf32> to vector<16x128xf32>
    %307 = arith.addf %303, %306 : vector<16x128xf32>
    %308 = arith.addf %254, %307 : vector<16x128xf32>
    %c0_142 = arith.constant 0 : index
    %c0_143 = arith.constant 0 : index
    %309 = vector.load %arg18[%c0_142, %c0_143] : memref<1x128xf32, #tpu.memory_space<vmem>>, vector<1x128xf32>
    %c0_144 = arith.constant 0 : index
    %c0_145 = arith.constant 0 : index
    %310 = vector.load %arg19[%c0_144, %c0_145] : memref<1x128xf32, #tpu.memory_space<vmem>>, vector<1x128xf32>
    %cst_146 = arith.constant dense<0.000000e+00> : vector<16xf32>
    %311 = vector.multi_reduction <add>, %308, %cst_146 [1] : vector<16x128xf32> to vector<16xf32>
    %312 = vector.shape_cast %311 : vector<16xf32> to vector<16x1xf32>
    %cst_147 = arith.constant 1.280000e+02 : f32
    %313 = vector.broadcast %cst_147 : f32 to vector<16x1xf32>
    %314 = arith.divf %312, %313 : vector<16x1xf32>
    %315 = vector.broadcast %314 : vector<16x1xf32> to vector<16x128xf32>
    %316 = arith.subf %308, %315 : vector<16x128xf32>
    %317 = arith.mulf %316, %316 : vector<16x128xf32>
    %cst_148 = arith.constant dense<0.000000e+00> : vector<16xf32>
    %318 = vector.multi_reduction <add>, %317, %cst_148 [1] : vector<16x128xf32> to vector<16xf32>
    %319 = vector.shape_cast %318 : vector<16xf32> to vector<16x1xf32>
    %cst_149 = arith.constant 1.280000e+02 : f32
    %320 = vector.broadcast %cst_149 : f32 to vector<16x1xf32>
    %321 = arith.divf %319, %320 : vector<16x1xf32>
    %cst_150 = arith.constant 9.99999974E-6 : f32
    %322 = vector.broadcast %cst_150 : f32 to vector<16x1xf32>
    %323 = arith.addf %321, %322 : vector<16x1xf32>
    %324 = math.rsqrt %323 : vector<16x1xf32>
    %325 = vector.broadcast %324 : vector<16x1xf32> to vector<16x128xf32>
    %326 = arith.mulf %316, %325 : vector<16x128xf32>
    %327 = vector.broadcast %309 : vector<1x128xf32> to vector<16x128xf32>
    %328 = arith.mulf %326, %327 : vector<16x128xf32>
    %329 = vector.broadcast %310 : vector<1x128xf32> to vector<16x128xf32>
    %330 = arith.addf %328, %329 : vector<16x128xf32>
    %c0_151 = arith.constant 0 : index
    %c0_152 = arith.constant 0 : index
    %331 = vector.load %arg20[%c0_151, %c0_152] : memref<1x128xf32, #tpu.memory_space<vmem>>, vector<1x128xf32>
    %c0_153 = arith.constant 0 : index
    %c0_154 = arith.constant 0 : index
    %332 = vector.load %arg21[%c0_153, %c0_154] : memref<1x1xf32, #tpu.memory_space<vmem>>, vector<1x1xf32>
    %333 = vector.extract_strided_slice %330 {offsets = [7, 0], sizes = [1, 128], strides = [1, 1]} : vector<16x128xf32> to vector<1x128xf32>
    %334 = arith.mulf %333, %331 : vector<1x128xf32>
    %cst_155 = arith.constant dense<0.000000e+00> : vector<1xf32>
    %335 = vector.multi_reduction <add>, %334, %cst_155 [1] : vector<1x128xf32> to vector<1xf32>
    %336 = vector.shape_cast %335 : vector<1xf32> to vector<1x1xf32>
    %337 = arith.addf %336, %332 : vector<1x1xf32>
    %c0_156 = arith.constant 0 : index
    %c0_157 = arith.constant 0 : index
    %c0_158 = arith.constant 0 : index
    %338 = vector.load %arg22[%c0_156, %c0_157, %c0_158] : memref<1x2x1xf32, #tpu.memory_space<vmem>>, vector<1x1x1xf32>
    %339 = vector.shape_cast %338 : vector<1x1x1xf32> to vector<1x1xf32>
    %340 = vector.shape_cast %337 : vector<1x1xf32> to vector<1x1x1xf32>
    tpu.vector_store %arg22[%c0_156, %c0_157, %c0_158], %340 {strides = array<i32>} : memref<1x2x1xf32, #tpu.memory_space<vmem>>, vector<1x1x1xf32>,
    %341 = vector.extract_strided_slice %330 {offsets = [15, 0], sizes = [1, 128], strides = [1, 1]} : vector<16x128xf32> to vector<1x128xf32>
    %342 = arith.mulf %341, %331 : vector<1x128xf32>
    %cst_159 = arith.constant dense<0.000000e+00> : vector<1xf32>
    %343 = vector.multi_reduction <add>, %342, %cst_159 [1] : vector<1x128xf32> to vector<1xf32>
    %344 = vector.shape_cast %343 : vector<1xf32> to vector<1x1xf32>
    %345 = arith.addf %344, %332 : vector<1x1xf32>
    %c0_160 = arith.constant 0 : index
    %c1_161 = arith.constant 1 : index
    %c0_162 = arith.constant 0 : index
    %346 = vector.load %arg22[%c0_160, %c1_161, %c0_162] : memref<1x2x1xf32, #tpu.memory_space<vmem>>, vector<1x1x1xf32>
    %347 = vector.shape_cast %346 : vector<1x1x1xf32> to vector<1x1xf32>
    %348 = vector.shape_cast %345 : vector<1x1xf32> to vector<1x1x1xf32>
    tpu.vector_store %arg22[%c0_160, %c1_161, %c0_162], %348 {strides = array<i32>} : memref<1x2x1xf32, #tpu.memory_space<vmem>>, vector<1x1x1xf32>,
    return
  }
  func.func @transform_0(%arg0: i32) -> (i32, i32, i32) {
    %c0_i32 = arith.constant 0 : i32
    %c0_i32_0 = arith.constant 0 : i32
    %c0_i32_1 = arith.constant 0 : i32
    return %arg0, %c0_i32, %c0_i32_0 : i32, i32, i32
  }
  func.func @transform_1(%arg0: i32) -> (i32, i32, i32) {
    %c0_i32 = arith.constant 0 : i32
    %c0_i32_0 = arith.constant 0 : i32
    %c0_i32_1 = arith.constant 0 : i32
    return %arg0, %c0_i32, %c0_i32_0 : i32, i32, i32
  }
  func.func @transform_2(%arg0: i32) -> (i32, i32) {
    %c0_i32 = arith.constant 0 : i32
    %c0_i32_0 = arith.constant 0 : i32
    %c0_i32_1 = arith.constant 0 : i32
    return %c0_i32, %c0_i32_0 : i32, i32
  }
  func.func @transform_3(%arg0: i32) -> (i32, i32) {
    %c0_i32 = arith.constant 0 : i32
    %c0_i32_0 = arith.constant 0 : i32
    %c0_i32_1 = arith.constant 0 : i32
    return %c0_i32, %c0_i32_0 : i32, i32
  }
  func.func @transform_4(%arg0: i32) -> (i32, i32) {
    %c0_i32 = arith.constant 0 : i32
    %c0_i32_0 = arith.constant 0 : i32
    %c0_i32_1 = arith.constant 0 : i32
    return %c0_i32, %c0_i32_0 : i32, i32
  }
  func.func @transform_5(%arg0: i32) -> (i32, i32, i32) {
    %c0_i32 = arith.constant 0 : i32
    %c0_i32_0 = arith.constant 0 : i32
    %c0_i32_1 = arith.constant 0 : i32
    %c0_i32_2 = arith.constant 0 : i32
    return %c0_i32, %c0_i32_0, %c0_i32_1 : i32, i32, i32
  }
  func.func @transform_6(%arg0: i32) -> (i32, i32, i32) {
    %c0_i32 = arith.constant 0 : i32
    %c0_i32_0 = arith.constant 0 : i32
    %c0_i32_1 = arith.constant 0 : i32
    %c0_i32_2 = arith.constant 0 : i32
    return %c0_i32, %c0_i32_0, %c0_i32_1 : i32, i32, i32
  }
  func.func @transform_7(%arg0: i32) -> (i32, i32, i32) {
    %c0_i32 = arith.constant 0 : i32
    %c0_i32_0 = arith.constant 0 : i32
    %c0_i32_1 = arith.constant 0 : i32
    %c0_i32_2 = arith.constant 0 : i32
    return %c0_i32, %c0_i32_0, %c0_i32_1 : i32, i32, i32
  }
  func.func @transform_8(%arg0: i32) -> (i32, i32, i32) {
    %c0_i32 = arith.constant 0 : i32
    %c0_i32_0 = arith.constant 0 : i32
    %c0_i32_1 = arith.constant 0 : i32
    %c0_i32_2 = arith.constant 0 : i32
    return %c0_i32, %c0_i32_0, %c0_i32_1 : i32, i32, i32
  }
  func.func @transform_9(%arg0: i32) -> (i32, i32, i32) {
    %c0_i32 = arith.constant 0 : i32
    %c0_i32_0 = arith.constant 0 : i32
    %c0_i32_1 = arith.constant 0 : i32
    %c0_i32_2 = arith.constant 0 : i32
    return %c0_i32, %c0_i32_0, %c0_i32_1 : i32, i32, i32
  }
  func.func @transform_10(%arg0: i32) -> (i32, i32, i32) {
    %c0_i32 = arith.constant 0 : i32
    %c0_i32_0 = arith.constant 0 : i32
    %c0_i32_1 = arith.constant 0 : i32
    %c0_i32_2 = arith.constant 0 : i32
    return %c0_i32, %c0_i32_0, %c0_i32_1 : i32, i32, i32
  }
  func.func @transform_11(%arg0: i32) -> (i32, i32, i32) {
    %c0_i32 = arith.constant 0 : i32
    %c0_i32_0 = arith.constant 0 : i32
    %c0_i32_1 = arith.constant 0 : i32
    %c0_i32_2 = arith.constant 0 : i32
    return %c0_i32, %c0_i32_0, %c0_i32_1 : i32, i32, i32
  }
  func.func @transform_12(%arg0: i32) -> (i32, i32, i32) {
    %c0_i32 = arith.constant 0 : i32
    %c0_i32_0 = arith.constant 0 : i32
    %c0_i32_1 = arith.constant 0 : i32
    %c0_i32_2 = arith.constant 0 : i32
    return %c0_i32, %c0_i32_0, %c0_i32_1 : i32, i32, i32
  }
  func.func @transform_13(%arg0: i32) -> (i32, i32, i32) {
    %c0_i32 = arith.constant 0 : i32
    %c0_i32_0 = arith.constant 0 : i32
    %c0_i32_1 = arith.constant 0 : i32
    %c0_i32_2 = arith.constant 0 : i32
    return %c0_i32, %c0_i32_0, %c0_i32_1 : i32, i32, i32
  }
  func.func @transform_14(%arg0: i32) -> (i32, i32, i32) {
    %c0_i32 = arith.constant 0 : i32
    %c0_i32_0 = arith.constant 0 : i32
    %c0_i32_1 = arith.constant 0 : i32
    %c0_i32_2 = arith.constant 0 : i32
    return %c0_i32, %c0_i32_0, %c0_i32_1 : i32, i32, i32
  }
  func.func @transform_15(%arg0: i32) -> (i32, i32, i32) {
    %c0_i32 = arith.constant 0 : i32
    %c0_i32_0 = arith.constant 0 : i32
    %c0_i32_1 = arith.constant 0 : i32
    %c0_i32_2 = arith.constant 0 : i32
    return %c0_i32, %c0_i32_0, %c0_i32_1 : i32, i32, i32
  }
  func.func @transform_16(%arg0: i32) -> (i32, i32, i32) {
    %c0_i32 = arith.constant 0 : i32
    %c0_i32_0 = arith.constant 0 : i32
    %c0_i32_1 = arith.constant 0 : i32
    %c0_i32_2 = arith.constant 0 : i32
    return %c0_i32, %c0_i32_0, %c0_i32_1 : i32, i32, i32
  }
  func.func @transform_17(%arg0: i32) -> (i32, i32) {
    %c0_i32 = arith.constant 0 : i32
    %c0_i32_0 = arith.constant 0 : i32
    %c0_i32_1 = arith.constant 0 : i32
    return %c0_i32, %c0_i32_0 : i32, i32
  }
  func.func @transform_18(%arg0: i32) -> (i32, i32) {
    %c0_i32 = arith.constant 0 : i32
    %c0_i32_0 = arith.constant 0 : i32
    %c0_i32_1 = arith.constant 0 : i32
    return %c0_i32, %c0_i32_0 : i32, i32
  }
  func.func @transform_19(%arg0: i32) -> (i32, i32) {
    %c0_i32 = arith.constant 0 : i32
    %c0_i32_0 = arith.constant 0 : i32
    %c0_i32_1 = arith.constant 0 : i32
    return %c0_i32, %c0_i32_0 : i32, i32
  }
  func.func @transform_20(%arg0: i32) -> (i32, i32) {
    %c0_i32 = arith.constant 0 : i32
    %c0_i32_0 = arith.constant 0 : i32
    %c0_i32_1 = arith.constant 0 : i32
    return %c0_i32, %c0_i32_0 : i32, i32
  }
  func.func @transform_21(%arg0: i32) -> (i32, i32, i32) {
    %c0_i32 = arith.constant 0 : i32
    %c0_i32_0 = arith.constant 0 : i32
    %c0_i32_1 = arith.constant 0 : i32
    return %arg0, %c0_i32, %c0_i32_0 : i32, i32, i32
  }
}

</mosaic_0001>

<llo_original>
// kernel: tpu_custom_call.1
$region0: #{tpu_custom_call.1}
  #allocation0 [shape = 'u32[]', space=smem, size = 0x4, offset = 0x4, fixed_abs, tag = 'smem constant byte address 0x4 - core index']
  #allocation1 [shape = 'u32[144,128]{1,0:T(1,128)}', space=vmem, size = 0x12000, scoped, tag = 'internal scratch']
  #allocation2 [shape = 'f32[1,1]{1,0:T(1,128)S(1)}', space=vmem, size = 0x200, scoped, tag = 'scoped memory for tpu_custom_call.1']
  %s0 = inlined_call_operand.hbm [shape: bf16[2,16,128], index: 0, kind: input, shape index: {}]
  %s1 = inlined_call_operand.hbm [shape: f32[2,1,16], index: 1, kind: input, shape index: {}]
  %s2 = inlined_call_operand.hbm [shape: f32[16,16], index: 2, kind: input, shape index: {}]
  %s3 = inlined_call_operand.hbm [shape: bf16[128,128], index: 3, kind: input, shape index: {}]
  %s4 = inlined_call_operand.vmem [shape: f32[16,128], index: 4, kind: input, shape index: {}]
  %s5 = inlined_call_operand.hbm [shape: f32[2,1,128], index: 5, kind: input, shape index: {}]
  %s6 = inlined_call_operand.hbm [shape: f32[2,1,128], index: 6, kind: input, shape index: {}]
  %s7 = inlined_call_operand.hbm [shape: bf16[2,128,384], index: 7, kind: input, shape index: {}]
  %s8 = inlined_call_operand.vmem [shape: f32[2,1,384], index: 8, kind: input, shape index: {}]
  %s9 = inlined_call_operand.hbm [shape: bf16[2,128,128], index: 9, kind: input, shape index: {}]
  %s10 = inlined_call_operand.vmem [shape: f32[2,1,128], index: 10, kind: input, shape index: {}]
  %s11 = inlined_call_operand.vmem [shape: f32[2,1,128], index: 11, kind: input, shape index: {}]
  %s12 = inlined_call_operand.vmem [shape: f32[2,1,128], index: 12, kind: input, shape index: {}]
  %s13 = inlined_call_operand.hbm [shape: bf16[2,128,512], index: 13, kind: input, shape index: {}]
  %s14 = inlined_call_operand.vmem [shape: f32[2,1,512], index: 14, kind: input, shape index: {}]
  %s15 = inlined_call_operand.hbm [shape: bf16[2,512,128], index: 15, kind: input, shape index: {}]
  %s16 = inlined_call_operand.vmem [shape: f32[2,1,128], index: 16, kind: input, shape index: {}]
  %s17 = inlined_call_operand.vmem [shape: f32[1,128], index: 17, kind: input, shape index: {}]
  %s18 = inlined_call_operand.vmem [shape: f32[1,128], index: 18, kind: input, shape index: {}]
  %s19 = inlined_call_operand.vmem [shape: f32[1,128], index: 19, kind: input, shape index: {}]
  %s20 = inlined_call_operand.<no memory space> [shape: f32[1,1], index: 20, kind: input, shape index: {}]
  %s21 = inlined_call_operand.vmem [shape: f32[2,2,1], index: 21, kind: output, shape index: {}]
  %s22 = sld [smem:[#allocation0]]
  $region157: #{tpu_custom_call.1} parent=0
    _
  %s24 = ssub.s32 1, %s22
  %s25 = scalar_select 0, %s24, %s22
  %v26 = vstv %s20
  %27 = vst [vmem:[#allocation2] sm:$0x1] %v26
  $region1: #{tpu_custom_call.1} parent=0
    #allocation3 [shape = 'u8[8192]{0}', space=vmem, size = 0x2000, scoped, tag = 'input window, operand 0']
    #allocation4 [shape = 's32[2]{0}', space=sflag, size = 0x8, scoped, tag = 'scoped memory for tpu_custom_call.1']
    #allocation5 [shape = 'u8[1024]{0}', space=vmem, size = 0x400, scoped, tag = 'input window, operand 1']
    #allocation6 [shape = 's32[2]{0}', space=sflag, size = 0x8, scoped, tag = 'scoped memory for tpu_custom_call.1']
    #allocation7 [shape = 'u8[8192]{0}', space=vmem, size = 0x2000, scoped, tag = 'input window, operand 2, single buffered']
    #allocation8 [shape = 'u8[32768]{0}', space=vmem, size = 0x8000, scoped, tag = 'input window, operand 3, single buffered']
    #allocation9 [shape = 's32[1]{0}', space=sflag, size = 0x4, scoped, tag = 'scoped memory for tpu_custom_call.1']
    #allocation10 [shape = 'u8[1024]{0}', space=vmem, size = 0x400, scoped, tag = 'input window, operand 5, single buffered']
    #allocation11 [shape = 'u8[1024]{0}', space=vmem, size = 0x400, scoped, tag = 'input window, operand 6, single buffered']
    #allocation12 [shape = 's32[1]{0}', space=sflag, size = 0x4, scoped, tag = 'scoped memory for tpu_custom_call.1']
    #allocation13 [shape = 'u8[196608]{0}', space=vmem, size = 0x30000, scoped, tag = 'input window, operand 7, single buffered']
    #allocation14 [shape = 'u8[65536]{0}', space=vmem, size = 0x10000, scoped, tag = 'input window, operand 9, single buffered']
    #allocation15 [shape = 's32[1]{0}', space=sflag, size = 0x4, scoped, tag = 'scoped memory for tpu_custom_call.1']
    #allocation16 [shape = 'u8[262144]{0}', space=vmem, size = 0x40000, scoped, tag = 'input window, operand 13, single buffered']
    #allocation17 [shape = 'u8[262144]{0}', space=vmem, size = 0x40000, scoped, tag = 'input window, operand 15, single buffered']
    #allocation18 [shape = 's32[1]{0}', space=sflag, size = 0x4, scoped, tag = 'scoped memory for tpu_custom_call.1']
    %28 = vsyncpa [#allocation4], 0
    %s29 = scalar_lea.sflag [#allocation4], 1
    %30 = vsyncpa %s29, 0
    %31 = vsyncpa [#allocation6], 0
    %s32 = scalar_lea.sflag [#allocation6], 1
    %33 = vsyncpa %s32, 0
    %34 = vsyncpa [#allocation9], 0
    %35 = vsyncpa [#allocation12], 0
    %36 = vsyncpa [#allocation15], 0
    %37 = vsyncpa [#allocation18], 0
    loop: start=0, step=1, limit=4
    $region2: #{tpu_custom_call.1} parent=1 // loop_pre_header
      _
    $region3: #{tpu_custom_call.1} parent=1 // loop_header
      %s39 = sphi 0, %s43
      %p40 = scmp.ge.s32.totalorder %s39, 4
      %s49 = sphi 0, %s51
      %s52 = sphi 0, %s49
      %s53 = sphi 0, %s52
      %s69 = sphi 0, %s53
      %s75 = sphi 0, %s77
      %s78 = sphi 0, %s75
      %s79 = sphi 0, %s78
      %s95 = sphi 0, %s79
      %s99 = sphi 0, %s99
      %s101 = sphi 0, %s99
      %s102 = sphi 0, %s101
      %s116 = sphi 0, %s102
      %s120 = sphi 0, %s120
      %s122 = sphi 0, %s120
      %s123 = sphi 0, %s122
      %s137 = sphi 0, %s123
      %s141 = sphi 0, %s141
      %s143 = sphi 0, %s141
      %s144 = sphi 0, %s143
      %s158 = sphi 0, %s144
      %s162 = sphi 0, %s162
      %s164 = sphi 0, %s162
      %s165 = sphi 0, %s164
      %s179 = sphi 0, %s165
      %s183 = sphi 0, %s183
      %s185 = sphi 0, %s183
      %s186 = sphi 0, %s185
      %s200 = sphi 0, %s186
      %s204 = sphi 0, %s204
      %s206 = sphi 0, %s204
      %s207 = sphi 0, %s206
      %s221 = sphi 0, %s207
      %s225 = sphi 0, %s225
      %s227 = sphi 0, %s225
      %s228 = sphi 0, %s227
      %s242 = sphi 0, %s228
      %s246 = sphi 0, %s246
      %s248 = sphi 0, %s246
      %s249 = sphi 0, %s248
      %s263 = sphi 0, %s249
      %s267 = sphi 0, %s267
      %s269 = sphi 0, %s267
      %s270 = sphi 0, %s269
      %s284 = sphi 0, %s270
      %s288 = sphi 0, %s288
      %s290 = sphi 0, %s288
      %s291 = sphi 0, %s290
      %s305 = sphi 0, %s291
      %s309 = sphi 0, %s309
      %s311 = sphi 0, %s309
      %s312 = sphi 0, %s311
      %s326 = sphi 0, %s312
      %s330 = sphi 0, %s330
      %s332 = sphi 0, %s330
      %s333 = sphi 0, %s332
      %s347 = sphi 0, %s333
      %s351 = sphi 0, %s351
      %s353 = sphi 0, %s351
      %s354 = sphi 0, %s353
      %s368 = sphi 0, %s354
      %s372 = sphi 0, %s372
      %s374 = sphi 0, %s372
      %s375 = sphi 0, %s374
      %s389 = sphi 0, %s375
      %s393 = sphi 0, %s393
      %s395 = sphi 0, %s393
      %s396 = sphi 0, %s395
      %s410 = sphi 0, %s396
      %s414 = sphi 0, %s414
      %s416 = sphi 0, %s414
      %s417 = sphi 0, %s416
      %s431 = sphi 0, %s417
      %s435 = sphi 0, %s435
      %s437 = sphi 0, %s435
      %s438 = sphi 0, %s437
      %s452 = sphi 0, %s438
      %s456 = sphi 0, %s456
      %s458 = sphi 0, %s456
      %s459 = sphi 0, %s458
      %s473 = sphi 0, %s459
      %s477 = sphi 0, %s477
      %s479 = sphi 0, %s477
      %s480 = sphi 0, %s479
      %s494 = sphi 0, %s480
      %s500 = sphi 0, %s502
      %s503 = sphi 0, %s500
      %s504 = sphi 0, %s503
      %s520 = sphi 0, %s504
    $region4: #{tpu_custom_call.1} parent=1 // loop_header_branch
      %42 = sbr.rel (%p40) target = $region8
    $region5: #{tpu_custom_call.1} parent=1 // loop_body
      %s44 = ssub.s32 %s39, 1
      %s45 = ssub.s32 %s39, 2
      %s46 = sadd.s32 %s39, 1
      %s47 = ssub.s32 %s39, %s46
      %p48 = scmp.eq.s32.totalorder %s47, 0
      %s50 = sadd.s32 %s49, 1
      %s51 = scalar_select %p48, %s49, %s50
      %p54 = pneg %p48
      %p55 = scmp.eq.s32.totalorder %s39, 1
      %p56 = por %p54, %p55
      %p57 = scmp.ne.s32.totalorder %s49, %s52
      %p58 = scmp.eq.s32.totalorder %s39, 0
      %p59 = por %p57, %p58
      %p60 = scmp.ne.s32.totalorder %s49, %s52
      %p61 = scmp.eq.s32.totalorder %s44, 1
      %p62 = por %p60, %p61
      %p63 = scmp.ne.s32.totalorder %s52, %s53
      %p64 = scmp.eq.s32.totalorder %s44, 0
      %p65 = por %p63, %p64
      %p66 = scmp.ne.s32.totalorder %s52, %s53
      %p67 = scmp.eq.s32.totalorder %s45, 1
      %p68 = por %p66, %p67
      %p70 = scmp.ne.s32.totalorder %s53, %s69
      %p71 = scmp.eq.s32.totalorder %s45, 0
      %p72 = por %p70, %p71
      %s73 = ssub.s32 %s39, %s46
      %p74 = scmp.eq.s32.totalorder %s73, 0
      %s76 = sadd.s32 %s75, 1
      %s77 = scalar_select %p74, %s75, %s76
      %p80 = pneg %p74
      %p81 = scmp.eq.s32.totalorder %s39, 1
      %p82 = por %p80, %p81
      %p83 = scmp.ne.s32.totalorder %s75, %s78
      %p84 = scmp.eq.s32.totalorder %s39, 0
      %p85 = por %p83, %p84
      %p86 = scmp.ne.s32.totalorder %s75, %s78
      %p87 = scmp.eq.s32.totalorder %s44, 1
      %p88 = por %p86, %p87
      %p89 = scmp.ne.s32.totalorder %s78, %s79
      %p90 = scmp.eq.s32.totalorder %s44, 0
      %p91 = por %p89, %p90
      %p92 = scmp.ne.s32.totalorder %s78, %s79
      %p93 = scmp.eq.s32.totalorder %s45, 1
      %p94 = por %p92, %p93
      %p96 = scmp.ne.s32.totalorder %s79, %s95
      %p97 = scmp.eq.s32.totalorder %s45, 0
      %p98 = por %p96, %p97
      %s100 = sadd.s32 %s99, 1
      %p103 = scmp.eq.s32.totalorder %s39, 1
      %p104 = scmp.ne.s32.totalorder %s99, %s101
      %p105 = scmp.eq.s32.totalorder %s39, 0
      %p106 = por %p104, %p105
      %p107 = scmp.ne.s32.totalorder %s99, %s101
      %p108 = scmp.eq.s32.totalorder %s44, 1
      %p109 = por %p107, %p108
      %p110 = scmp.ne.s32.totalorder %s101, %s102
      %p111 = scmp.eq.s32.totalorder %s44, 0
      %p112 = por %p110, %p111
      %p113 = scmp.ne.s32.totalorder %s101, %s102
      %p114 = scmp.eq.s32.totalorder %s45, 1
      %p115 = por %p113, %p114
      %p117 = scmp.ne.s32.totalorder %s102, %s116
      %p118 = scmp.eq.s32.totalorder %s45, 0
      %p119 = por %p117, %p118
      %s121 = sadd.s32 %s120, 1
      %p124 = scmp.eq.s32.totalorder %s39, 1
      %p125 = scmp.ne.s32.totalorder %s120, %s122
      %p126 = scmp.eq.s32.totalorder %s39, 0
      %p127 = por %p125, %p126
      %p128 = scmp.ne.s32.totalorder %s120, %s122
      %p129 = scmp.eq.s32.totalorder %s44, 1
      %p130 = por %p128, %p129
      %p131 = scmp.ne.s32.totalorder %s122, %s123
      %p132 = scmp.eq.s32.totalorder %s44, 0
      %p133 = por %p131, %p132
      %p134 = scmp.ne.s32.totalorder %s122, %s123
      %p135 = scmp.eq.s32.totalorder %s45, 1
      %p136 = por %p134, %p135
      %p138 = scmp.ne.s32.totalorder %s123, %s137
      %p139 = scmp.eq.s32.totalorder %s45, 0
      %p140 = por %p138, %p139
      %s142 = sadd.s32 %s141, 1
      %p145 = scmp.eq.s32.totalorder %s39, 1
      %p146 = scmp.ne.s32.totalorder %s141, %s143
      %p147 = scmp.eq.s32.totalorder %s39, 0
      %p148 = por %p146, %p147
      %p149 = scmp.ne.s32.totalorder %s141, %s143
      %p150 = scmp.eq.s32.totalorder %s44, 1
      %p151 = por %p149, %p150
      %p152 = scmp.ne.s32.totalorder %s143, %s144
      %p153 = scmp.eq.s32.totalorder %s44, 0
      %p154 = por %p152, %p153
      %p155 = scmp.ne.s32.totalorder %s143, %s144
      %p156 = scmp.eq.s32.totalorder %s45, 1
      %p157 = por %p155, %p156
      %p159 = scmp.ne.s32.totalorder %s144, %s158
      %p160 = scmp.eq.s32.totalorder %s45, 0
      %p161 = por %p159, %p160
      %s163 = sadd.s32 %s162, 1
      %p166 = scmp.eq.s32.totalorder %s39, 1
      %p167 = scmp.ne.s32.totalorder %s162, %s164
      %p168 = scmp.eq.s32.totalorder %s39, 0
      %p169 = por %p167, %p168
      %p170 = scmp.ne.s32.totalorder %s162, %s164
      %p171 = scmp.eq.s32.totalorder %s44, 1
      %p172 = por %p170, %p171
      %p173 = scmp.ne.s32.totalorder %s164, %s165
      %p174 = scmp.eq.s32.totalorder %s44, 0
      %p175 = por %p173, %p174
      %p176 = scmp.ne.s32.totalorder %s164, %s165
      %p177 = scmp.eq.s32.totalorder %s45, 1
      %p178 = por %p176, %p177
      %p180 = scmp.ne.s32.totalorder %s165, %s179
      %p181 = scmp.eq.s32.totalorder %s45, 0
      %p182 = por %p180, %p181
      %s184 = sadd.s32 %s183, 1
      %p187 = scmp.eq.s32.totalorder %s39, 1
      %p188 = scmp.ne.s32.totalorder %s183, %s185
      %p189 = scmp.eq.s32.totalorder %s39, 0
      %p190 = por %p188, %p189
      %p191 = scmp.ne.s32.totalorder %s183, %s185
      %p192 = scmp.eq.s32.totalorder %s44, 1
      %p193 = por %p191, %p192
      %p194 = scmp.ne.s32.totalorder %s185, %s186
      %p195 = scmp.eq.s32.totalorder %s44, 0
      %p196 = por %p194, %p195
      %p197 = scmp.ne.s32.totalorder %s185, %s186
      %p198 = scmp.eq.s32.totalorder %s45, 1
      %p199 = por %p197, %p198
      %p201 = scmp.ne.s32.totalorder %s186, %s200
      %p202 = scmp.eq.s32.totalorder %s45, 0
      %p203 = por %p201, %p202
      %s205 = sadd.s32 %s204, 1
      %p208 = scmp.eq.s32.totalorder %s39, 1
      %p209 = scmp.ne.s32.totalorder %s204, %s206
      %p210 = scmp.eq.s32.totalorder %s39, 0
      %p211 = por %p209, %p210
      %p212 = scmp.ne.s32.totalorder %s204, %s206
      %p213 = scmp.eq.s32.totalorder %s44, 1
      %p214 = por %p212, %p213
      %p215 = scmp.ne.s32.totalorder %s206, %s207
      %p216 = scmp.eq.s32.totalorder %s44, 0
      %p217 = por %p215, %p216
      %p218 = scmp.ne.s32.totalorder %s206, %s207
      %p219 = scmp.eq.s32.totalorder %s45, 1
      %p220 = por %p218, %p219
      %p222 = scmp.ne.s32.totalorder %s207, %s221
      %p223 = scmp.eq.s32.totalorder %s45, 0
      %p224 = por %p222, %p223
      %s226 = sadd.s32 %s225, 1
      %p229 = scmp.eq.s32.totalorder %s39, 1
      %p230 = scmp.ne.s32.totalorder %s225, %s227
      %p231 = scmp.eq.s32.totalorder %s39, 0
      %p232 = por %p230, %p231
      %p233 = scmp.ne.s32.totalorder %s225, %s227
      %p234 = scmp.eq.s32.totalorder %s44, 1
      %p235 = por %p233, %p234
      %p236 = scmp.ne.s32.totalorder %s227, %s228
      %p237 = scmp.eq.s32.totalorder %s44, 0
      %p238 = por %p236, %p237
      %p239 = scmp.ne.s32.totalorder %s227, %s228
      %p240 = scmp.eq.s32.totalorder %s45, 1
      %p241 = por %p239, %p240
      %p243 = scmp.ne.s32.totalorder %s228, %s242
      %p244 = scmp.eq.s32.totalorder %s45, 0
      %p245 = por %p243, %p244
      %s247 = sadd.s32 %s246, 1
      %p250 = scmp.eq.s32.totalorder %s39, 1
      %p251 = scmp.ne.s32.totalorder %s246, %s248
      %p252 = scmp.eq.s32.totalorder %s39, 0
      %p253 = por %p251, %p252
      %p254 = scmp.ne.s32.totalorder %s246, %s248
      %p255 = scmp.eq.s32.totalorder %s44, 1
      %p256 = por %p254, %p255
      %p257 = scmp.ne.s32.totalorder %s248, %s249
      %p258 = scmp.eq.s32.totalorder %s44, 0
      %p259 = por %p257, %p258
      %p260 = scmp.ne.s32.totalorder %s248, %s249
      %p261 = scmp.eq.s32.totalorder %s45, 1
      %p262 = por %p260, %p261
      %p264 = scmp.ne.s32.totalorder %s249, %s263
      %p265 = scmp.eq.s32.totalorder %s45, 0
      %p266 = por %p264, %p265
      %s268 = sadd.s32 %s267, 1
      %p271 = scmp.eq.s32.totalorder %s39, 1
      %p272 = scmp.ne.s32.totalorder %s267, %s269
      %p273 = scmp.eq.s32.totalorder %s39, 0
      %p274 = por %p272, %p273
      %p275 = scmp.ne.s32.totalorder %s267, %s269
      %p276 = scmp.eq.s32.totalorder %s44, 1
      %p277 = por %p275, %p276
      %p278 = scmp.ne.s32.totalorder %s269, %s270
      %p279 = scmp.eq.s32.totalorder %s44, 0
      %p280 = por %p278, %p279
      %p281 = scmp.ne.s32.totalorder %s269, %s270
      %p282 = scmp.eq.s32.totalorder %s45, 1
      %p283 = por %p281, %p282
      %p285 = scmp.ne.s32.totalorder %s270, %s284
      %p286 = scmp.eq.s32.totalorder %s45, 0
      %p287 = por %p285, %p286
      %s289 = sadd.s32 %s288, 1
      %p292 = scmp.eq.s32.totalorder %s39, 1
      %p293 = scmp.ne.s32.totalorder %s288, %s290
      %p294 = scmp.eq.s32.totalorder %s39, 0
      %p295 = por %p293, %p294
      %p296 = scmp.ne.s32.totalorder %s288, %s290
      %p297 = scmp.eq.s32.totalorder %s44, 1
      %p298 = por %p296, %p297
      %p299 = scmp.ne.s32.totalorder %s290, %s291
      %p300 = scmp.eq.s32.totalorder %s44, 0
      %p301 = por %p299, %p300
      %p302 = scmp.ne.s32.totalorder %s290, %s291
      %p303 = scmp.eq.s32.totalorder %s45, 1
      %p304 = por %p302, %p303
      %p306 = scmp.ne.s32.totalorder %s291, %s305
      %p307 = scmp.eq.s32.totalorder %s45, 0
      %p308 = por %p306, %p307
      %s310 = sadd.s32 %s309, 1
      %p313 = scmp.eq.s32.totalorder %s39, 1
      %p314 = scmp.ne.s32.totalorder %s309, %s311
      %p315 = scmp.eq.s32.totalorder %s39, 0
      %p316 = por %p314, %p315
      %p317 = scmp.ne.s32.totalorder %s309, %s311
      %p318 = scmp.eq.s32.totalorder %s44, 1
      %p319 = por %p317, %p318
      %p320 = scmp.ne.s32.totalorder %s311, %s312
      %p321 = scmp.eq.s32.totalorder %s44, 0
      %p322 = por %p320, %p321
      %p323 = scmp.ne.s32.totalorder %s311, %s312
      %p324 = scmp.eq.s32.totalorder %s45, 1
      %p325 = por %p323, %p324
      %p327 = scmp.ne.s32.totalorder %s312, %s326
      %p328 = scmp.eq.s32.totalorder %s45, 0
      %p329 = por %p327, %p328
      %s331 = sadd.s32 %s330, 1
      %p334 = scmp.eq.s32.totalorder %s39, 1
      %p335 = scmp.ne.s32.totalorder %s330, %s332
      %p336 = scmp.eq.s32.totalorder %s39, 0
      %p337 = por %p335, %p336
      %p338 = scmp.ne.s32.totalorder %s330, %s332
      %p339 = scmp.eq.s32.totalorder %s44, 1
      %p340 = por %p338, %p339
      %p341 = scmp.ne.s32.totalorder %s332, %s333
      %p342 = scmp.eq.s32.totalorder %s44, 0
      %p343 = por %p341, %p342
      %p344 = scmp.ne.s32.totalorder %s332, %s333
      %p345 = scmp.eq.s32.totalorder %s45, 1
      %p346 = por %p344, %p345
      %p348 = scmp.ne.s32.totalorder %s333, %s347
      %p349 = scmp.eq.s32.totalorder %s45, 0
      %p350 = por %p348, %p349
      %s352 = sadd.s32 %s351, 1
      %p355 = scmp.eq.s32.totalorder %s39, 1
      %p356 = scmp.ne.s32.totalorder %s351, %s353
      %p357 = scmp.eq.s32.totalorder %s39, 0
      %p358 = por %p356, %p357
      %p359 = scmp.ne.s32.totalorder %s351, %s353
      %p360 = scmp.eq.s32.totalorder %s44, 1
      %p361 = por %p359, %p360
      %p362 = scmp.ne.s32.totalorder %s353, %s354
      %p363 = scmp.eq.s32.totalorder %s44, 0
      %p364 = por %p362, %p363
      %p365 = scmp.ne.s32.totalorder %s353, %s354
      %p366 = scmp.eq.s32.totalorder %s45, 1
      %p367 = por %p365, %p366
      %p369 = scmp.ne.s32.totalorder %s354, %s368
      %p370 = scmp.eq.s32.totalorder %s45, 0
      %p371 = por %p369, %p370
      %s373 = sadd.s32 %s372, 1
      %p376 = scmp.eq.s32.totalorder %s39, 1
      %p377 = scmp.ne.s32.totalorder %s372, %s374
      %p378 = scmp.eq.s32.totalorder %s39, 0
      %p379 = por %p377, %p378
      %p380 = scmp.ne.s32.totalorder %s372, %s374
      %p381 = scmp.eq.s32.totalorder %s44, 1
      %p382 = por %p380, %p381
      %p383 = scmp.ne.s32.totalorder %s374, %s375
      %p384 = scmp.eq.s32.totalorder %s44, 0
      %p385 = por %p383, %p384
      %p386 = scmp.ne.s32.totalorder %s374, %s375
      %p387 = scmp.eq.s32.totalorder %s45, 1
      %p388 = por %p386, %p387
      %p390 = scmp.ne.s32.totalorder %s375, %s389
      %p391 = scmp.eq.s32.totalorder %s45, 0
      %p392 = por %p390, %p391
      %s394 = sadd.s32 %s393, 1
      %p397 = scmp.eq.s32.totalorder %s39, 1
      %p398 = scmp.ne.s32.totalorder %s393, %s395
      %p399 = scmp.eq.s32.totalorder %s39, 0
      %p400 = por %p398, %p399
      %p401 = scmp.ne.s32.totalorder %s393, %s395
      %p402 = scmp.eq.s32.totalorder %s44, 1
      %p403 = por %p401, %p402
      %p404 = scmp.ne.s32.totalorder %s395, %s396
      %p405 = scmp.eq.s32.totalorder %s44, 0
      %p406 = por %p404, %p405
      %p407 = scmp.ne.s32.totalorder %s395, %s396
      %p408 = scmp.eq.s32.totalorder %s45, 1
      %p409 = por %p407, %p408
      %p411 = scmp.ne.s32.totalorder %s396, %s410
      %p412 = scmp.eq.s32.totalorder %s45, 0
      %p413 = por %p411, %p412
      %s415 = sadd.s32 %s414, 1
      %p418 = scmp.eq.s32.totalorder %s39, 1
      %p419 = scmp.ne.s32.totalorder %s414, %s416
      %p420 = scmp.eq.s32.totalorder %s39, 0
      %p421 = por %p419, %p420
      %p422 = scmp.ne.s32.totalorder %s414, %s416
      %p423 = scmp.eq.s32.totalorder %s44, 1
      %p424 = por %p422, %p423
      %p425 = scmp.ne.s32.totalorder %s416, %s417
      %p426 = scmp.eq.s32.totalorder %s44, 0
      %p427 = por %p425, %p426
      %p428 = scmp.ne.s32.totalorder %s416, %s417
      %p429 = scmp.eq.s32.totalorder %s45, 1
      %p430 = por %p428, %p429
      %p432 = scmp.ne.s32.totalorder %s417, %s431
      %p433 = scmp.eq.s32.totalorder %s45, 0
      %p434 = por %p432, %p433
      %s436 = sadd.s32 %s435, 1
      %p439 = scmp.eq.s32.totalorder %s39, 1
      %p440 = scmp.ne.s32.totalorder %s435, %s437
      %p441 = scmp.eq.s32.totalorder %s39, 0
      %p442 = por %p440, %p441
      %p443 = scmp.ne.s32.totalorder %s435, %s437
      %p444 = scmp.eq.s32.totalorder %s44, 1
      %p445 = por %p443, %p444
      %p446 = scmp.ne.s32.totalorder %s437, %s438
      %p447 = scmp.eq.s32.totalorder %s44, 0
      %p448 = por %p446, %p447
      %p449 = scmp.ne.s32.totalorder %s437, %s438
      %p450 = scmp.eq.s32.totalorder %s45, 1
      %p451 = por %p449, %p450
      %p453 = scmp.ne.s32.totalorder %s438, %s452
      %p454 = scmp.eq.s32.totalorder %s45, 0
      %p455 = por %p453, %p454
      %s457 = sadd.s32 %s456, 1
      %p460 = scmp.eq.s32.totalorder %s39, 1
      %p461 = scmp.ne.s32.totalorder %s456, %s458
      %p462 = scmp.eq.s32.totalorder %s39, 0
      %p463 = por %p461, %p462
      %p464 = scmp.ne.s32.totalorder %s456, %s458
      %p465 = scmp.eq.s32.totalorder %s44, 1
      %p466 = por %p464, %p465
      %p467 = scmp.ne.s32.totalorder %s458, %s459
      %p468 = scmp.eq.s32.totalorder %s44, 0
      %p469 = por %p467, %p468
      %p470 = scmp.ne.s32.totalorder %s458, %s459
      %p471 = scmp.eq.s32.totalorder %s45, 1
      %p472 = por %p470, %p471
      %p474 = scmp.ne.s32.totalorder %s459, %s473
      %p475 = scmp.eq.s32.totalorder %s45, 0
      %p476 = por %p474, %p475
      %s478 = sadd.s32 %s477, 1
      %p481 = scmp.eq.s32.totalorder %s39, 1
      %p482 = scmp.ne.s32.totalorder %s477, %s479
      %p483 = scmp.eq.s32.totalorder %s39, 0
      %p484 = por %p482, %p483
      %p485 = scmp.ne.s32.totalorder %s477, %s479
      %p486 = scmp.eq.s32.totalorder %s44, 1
      %p487 = por %p485, %p486
      %p488 = scmp.ne.s32.totalorder %s479, %s480
      %p489 = scmp.eq.s32.totalorder %s44, 0
      %p490 = por %p488, %p489
      %p491 = scmp.ne.s32.totalorder %s479, %s480
      %p492 = scmp.eq.s32.totalorder %s45, 1
      %p493 = por %p491, %p492
      %p495 = scmp.ne.s32.totalorder %s480, %s494
      %p496 = scmp.eq.s32.totalorder %s45, 0
      %p497 = por %p495, %p496
      %s498 = ssub.s32 %s39, %s46
      %p499 = scmp.eq.s32.totalorder %s498, 0
      %s501 = sadd.s32 %s500, 1
      %s502 = scalar_select %p499, %s500, %s501
      %p505 = pneg %p499
      %p506 = scmp.eq.s32.totalorder %s39, 1
      %p507 = por %p505, %p506
      %p508 = scmp.ne.s32.totalorder %s500, %s503
      %p509 = scmp.eq.s32.totalorder %s39, 0
      %p510 = por %p508, %p509
      %p511 = scmp.ne.s32.totalorder %s500, %s503
      %p512 = scmp.eq.s32.totalorder %s44, 1
      %p513 = por %p511, %p512
      %p514 = scmp.ne.s32.totalorder %s503, %s504
      %p515 = scmp.eq.s32.totalorder %s44, 0
      %p516 = por %p514, %p515
      %p517 = scmp.ne.s32.totalorder %s503, %s504
      %p518 = scmp.eq.s32.totalorder %s45, 1
      %p519 = por %p517, %p518
      %p521 = scmp.ne.s32.totalorder %s504, %s520
      %p522 = scmp.eq.s32.totalorder %s45, 0
      %p523 = por %p521, %p522
      %p524 = scmp.le.s32.totalorder 1, %s39
      %p525 = scmp.lt.s32.totalorder %s39, 3
      %p526 = pnand %p524, %p525
      %p527 = pneg %p526
      // Predicated region
      $region9: #{tpu_custom_call.1} parent=5 // pred_check
        _
      $region10: #{tpu_custom_call.1} parent=5 // pred_check_branch
        %529 = sbr.rel (%p526) target = $region12
      $region11: #{tpu_custom_call.1} parent=5 // pred_region
        %s530 = ssub.s32 %s39, 1
        // Predicated region
        $region13: #{tpu_custom_call.1} parent=11 // pred_check
          %p531 = pneg %p112
        $region14: #{tpu_custom_call.1} parent=11 // pred_check_branch
          %533 = sbr.rel (%p531) target = $region16
        $region15: #{tpu_custom_call.1} parent=11 // pred_region
          %s535 = ssub.s32 256, 256
          %536 = vsyncadd [#allocation6], %s535
          %s537 = sshll.u32 [#allocation7], 4
          %s538 = int_to_ptr.vmem [resolvable:$true] %s537
          %543 = dma.hbm_to_vmem [thread:$0]  %s2, 256, %s538, [#allocation6], 128, 128, 8
        $region16: #{tpu_custom_call.1} parent=11 // pred_fallthru
          _
        // Predicated region
        $region17: #{tpu_custom_call.1} parent=11 // pred_check
          %p544 = pneg %p133
        $region18: #{tpu_custom_call.1} parent=11 // pred_check_branch
          %546 = sbr.rel (%p544) target = $region20
        $region19: #{tpu_custom_call.1} parent=11 // pred_region
          %s548 = ssub.s32 1024, 1024
          %549 = vsyncadd [#allocation9], %s548
          %s550 = sshll.u32 [#allocation8], 4
          %s551 = int_to_ptr.vmem [resolvable:$true] %s550
          %556 = dma.hbm_to_vmem [thread:$0]  %s3, 1024, %s551, [#allocation9], 64, 64, 4
        $region20: #{tpu_custom_call.1} parent=11 // pred_fallthru
          _
        // Predicated region
        $region21: #{tpu_custom_call.1} parent=11 // pred_check
          %p557 = pneg %p154
        $region22: #{tpu_custom_call.1} parent=11 // pred_check_branch
          %559 = sbr.rel (%p557) target = $region24
        $region23: #{tpu_custom_call.1} parent=11 // pred_region
          _
        $region24: #{tpu_custom_call.1} parent=11 // pred_fallthru
          _
        // Predicated region
        $region25: #{tpu_custom_call.1} parent=11 // pred_check
          %p560 = pneg %p175
        $region26: #{tpu_custom_call.1} parent=11 // pred_check_branch
          %562 = sbr.rel (%p560) target = $region28
        $region27: #{tpu_custom_call.1} parent=11 // pred_region
          %s564 = ssub.s32 32, 32
          %565 = vsyncadd [#allocation9], %s564
          %s566 = sshll.u32 [#allocation10], 4
          %s567 = int_to_ptr.vmem [resolvable:$true] %s566
          %572 = dma.hbm_to_vmem [thread:$0]  %s5, 32, %s567, [#allocation9], 16, 16, 1
        $region28: #{tpu_custom_call.1} parent=11 // pred_fallthru
          _
        // Predicated region
        $region29: #{tpu_custom_call.1} parent=11 // pred_check
          %p573 = pneg %p196
        $region30: #{tpu_custom_call.1} parent=11 // pred_check_branch
          %575 = sbr.rel (%p573) target = $region32
        $region31: #{tpu_custom_call.1} parent=11 // pred_region
          %s577 = ssub.s32 32, 32
          %578 = vsyncadd [#allocation12], %s577
          %s579 = sshll.u32 [#allocation11], 4
          %s580 = int_to_ptr.vmem [resolvable:$true] %s579
          %585 = dma.hbm_to_vmem [thread:$0]  %s6, 32, %s580, [#allocation12], 16, 16, 1
        $region32: #{tpu_custom_call.1} parent=11 // pred_fallthru
          _
        // Predicated region
        $region33: #{tpu_custom_call.1} parent=11 // pred_check
          %p586 = pneg %p217
        $region34: #{tpu_custom_call.1} parent=11 // pred_check_branch
          %588 = sbr.rel (%p586) target = $region36
        $region35: #{tpu_custom_call.1} parent=11 // pred_region
          %s590 = ssub.s32 6144, 6144
          %591 = vsyncadd [#allocation12], %s590
          %s592 = sshll.u32 [#allocation13], 4
          %s593 = int_to_ptr.vmem [resolvable:$true] %s592
          %598 = dma.hbm_to_vmem [thread:$0]  %s7, 6144, %s593, [#allocation12], 192, 192, 12
        $region36: #{tpu_custom_call.1} parent=11 // pred_fallthru
          _
        // Predicated region
        $region37: #{tpu_custom_call.1} parent=11 // pred_check
          %p599 = pneg %p238
        $region38: #{tpu_custom_call.1} parent=11 // pred_check_branch
          %601 = sbr.rel (%p599) target = $region40
        $region39: #{tpu_custom_call.1} parent=11 // pred_region
          _
        $region40: #{tpu_custom_call.1} parent=11 // pred_fallthru
          _
        // Predicated region
        $region41: #{tpu_custom_call.1} parent=11 // pred_check
          %p602 = pneg %p259
        $region42: #{tpu_custom_call.1} parent=11 // pred_check_branch
          %604 = sbr.rel (%p602) target = $region44
        $region43: #{tpu_custom_call.1} parent=11 // pred_region
          %s606 = ssub.s32 2048, 2048
          %607 = vsyncadd [#allocation15], %s606
          %s608 = sshll.u32 [#allocation14], 4
          %s609 = int_to_ptr.vmem [resolvable:$true] %s608
          %614 = dma.hbm_to_vmem [thread:$0]  %s9, 2048, %s609, [#allocation15], 64, 64, 4
        $region44: #{tpu_custom_call.1} parent=11 // pred_fallthru
          _
        // Predicated region
        $region45: #{tpu_custom_call.1} parent=11 // pred_check
          %p615 = pneg %p280
        $region46: #{tpu_custom_call.1} parent=11 // pred_check_branch
          %617 = sbr.rel (%p615) target = $region48
        $region47: #{tpu_custom_call.1} parent=11 // pred_region
          _
        $region48: #{tpu_custom_call.1} parent=11 // pred_fallthru
          _
        // Predicated region
        $region49: #{tpu_custom_call.1} parent=11 // pred_check
          %p618 = pneg %p301
        $region50: #{tpu_custom_call.1} parent=11 // pred_check_branch
          %620 = sbr.rel (%p618) target = $region52
        $region51: #{tpu_custom_call.1} parent=11 // pred_region
          _
        $region52: #{tpu_custom_call.1} parent=11 // pred_fallthru
          _
        // Predicated region
        $region53: #{tpu_custom_call.1} parent=11 // pred_check
          %p621 = pneg %p322
        $region54: #{tpu_custom_call.1} parent=11 // pred_check_branch
          %623 = sbr.rel (%p621) target = $region56
        $region55: #{tpu_custom_call.1} parent=11 // pred_region
          _
        $region56: #{tpu_custom_call.1} parent=11 // pred_fallthru
          _
        // Predicated region
        $region57: #{tpu_custom_call.1} parent=11 // pred_check
          %p624 = pneg %p343
        $region58: #{tpu_custom_call.1} parent=11 // pred_check_branch
          %626 = sbr.rel (%p624) target = $region60
        $region59: #{tpu_custom_call.1} parent=11 // pred_region
          %s628 = ssub.s32 8192, 8192
          %629 = vsyncadd [#allocation15], %s628
          %s630 = sshll.u32 [#allocation16], 4
          %s631 = int_to_ptr.vmem [resolvable:$true] %s630
          %636 = dma.hbm_to_vmem [thread:$0]  %s13, 8192, %s631, [#allocation15], 256, 256, 16
        $region60: #{tpu_custom_call.1} parent=11 // pred_fallthru
          _
        // Predicated region
        $region61: #{tpu_custom_call.1} parent=11 // pred_check
          %p637 = pneg %p364
        $region62: #{tpu_custom_call.1} parent=11 // pred_check_branch
          %639 = sbr.rel (%p637) target = $region64
        $region63: #{tpu_custom_call.1} parent=11 // pred_region
          _
        $region64: #{tpu_custom_call.1} parent=11 // pred_fallthru
          _
        // Predicated region
        $region65: #{tpu_custom_call.1} parent=11 // pred_check
          %p640 = pneg %p385
        $region66: #{tpu_custom_call.1} parent=11 // pred_check_branch
          %642 = sbr.rel (%p640) target = $region68
        $region67: #{tpu_custom_call.1} parent=11 // pred_region
          %s644 = ssub.s32 8192, 8192
          %645 = vsyncadd [#allocation18], %s644
          %s646 = sshll.u32 [#allocation17], 4
          %s647 = int_to_ptr.vmem [resolvable:$true] %s646
          %652 = dma.hbm_to_vmem [thread:$0]  %s15, 8192, %s647, [#allocation18], 64, 64, 4
        $region68: #{tpu_custom_call.1} parent=11 // pred_fallthru
          _
        // Predicated region
        $region69: #{tpu_custom_call.1} parent=11 // pred_check
          %p653 = pneg %p406
        $region70: #{tpu_custom_call.1} parent=11 // pred_check_branch
          %655 = sbr.rel (%p653) target = $region72
        $region71: #{tpu_custom_call.1} parent=11 // pred_region
          _
        $region72: #{tpu_custom_call.1} parent=11 // pred_fallthru
          _
        // Predicated region
        $region73: #{tpu_custom_call.1} parent=11 // pred_check
          %p656 = pneg %p427
        $region74: #{tpu_custom_call.1} parent=11 // pred_check_branch
          %658 = sbr.rel (%p656) target = $region76
        $region75: #{tpu_custom_call.1} parent=11 // pred_region
          _
        $region76: #{tpu_custom_call.1} parent=11 // pred_fallthru
          _
        // Predicated region
        $region77: #{tpu_custom_call.1} parent=11 // pred_check
          %p659 = pneg %p448
        $region78: #{tpu_custom_call.1} parent=11 // pred_check_branch
          %661 = sbr.rel (%p659) target = $region80
        $region79: #{tpu_custom_call.1} parent=11 // pred_region
          _
        $region80: #{tpu_custom_call.1} parent=11 // pred_fallthru
          _
        // Predicated region
        $region81: #{tpu_custom_call.1} parent=11 // pred_check
          %p662 = pneg %p469
        $region82: #{tpu_custom_call.1} parent=11 // pred_check_branch
          %664 = sbr.rel (%p662) target = $region84
        $region83: #{tpu_custom_call.1} parent=11 // pred_region
          _
        $region84: #{tpu_custom_call.1} parent=11 // pred_fallthru
          _
        // Predicated region
        $region85: #{tpu_custom_call.1} parent=11 // pred_check
          %p665 = pneg %p490
        $region86: #{tpu_custom_call.1} parent=11 // pred_check_branch
          %667 = sbr.rel (%p665) target = $region88
        $region87: #{tpu_custom_call.1} parent=11 // pred_region
          _
        $region88: #{tpu_custom_call.1} parent=11 // pred_fallthru
          _
      $region12: #{tpu_custom_call.1} parent=5 // pred_fallthru
        _
      %p668 = scmp.lt.s32.totalorder %s39, 2
      // Predicated region
      $region89: #{tpu_custom_call.1} parent=5 // pred_check
        %p669 = pneg %p668
      $region90: #{tpu_custom_call.1} parent=5 // pred_check_branch
        %671 = sbr.rel (%p669) target = $region92
      $region91: #{tpu_custom_call.1} parent=5 // pred_region
        // Predicated region
        $region93: #{tpu_custom_call.1} parent=91 // pred_check
          %p672 = pneg %p59
        $region94: #{tpu_custom_call.1} parent=91 // pred_check_branch
          %674 = sbr.rel (%p672) target = $region96
        $region95: #{tpu_custom_call.1} parent=91 // pred_region
          %s675 = sand.u32 %s49, 1
          %s676 = scalar_lea.sflag [#allocation4], %s675
          %s677 = sand.u32 %s49, 1
          %s678 = smul.addr %s677, 8
          %s679 = scalar_lea.vmem [#allocation3], %s678
          %s681 = ssub.s32 128, 128
          %682 = vsyncadd %s676, %s681
          %s683 = smul.addr %s39, 2
          %s684 = smul.addr %s683, 64
          %s685 = scalar_lea.hbm %s0, %s684
          %s686 = sshll.u32 %s679, 4
          %s687 = int_to_ptr.vmem [resolvable:$true] %s686
          %692 = dma.hbm_to_vmem [thread:$0]  %s685, 128, %s687, %s676, 64, 64, 4
        $region96: #{tpu_custom_call.1} parent=91 // pred_fallthru
          _
        // Predicated region
        $region97: #{tpu_custom_call.1} parent=91 // pred_check
          %p693 = pneg %p85
        $region98: #{tpu_custom_call.1} parent=91 // pred_check_branch
          %695 = sbr.rel (%p693) target = $region100
        $region99: #{tpu_custom_call.1} parent=91 // pred_region
          %s696 = sand.u32 %s39, 1
          %s697 = scalar_lea.sflag [#allocation6], %s696
          %s698 = sand.u32 %s75, 1
          %s699 = scalar_lea.vmem [#allocation5], %s698
          %s701 = ssub.s32 16, 16
          %702 = vsyncadd %s697, %s701
          %s703 = smul.addr %s39, 16
          %s704 = scalar_lea.hbm %s1, %s703
          %s706 = sshll.u32 %s699, 4
          %s707 = int_to_ptr.vmem [resolvable:$true] %s706
          %709 = dma.hbm_to_vmem [thread:$0]  %s704, 16, %s707, %s697
        $region100: #{tpu_custom_call.1} parent=91 // pred_fallthru
          _
      $region92: #{tpu_custom_call.1} parent=5 // pred_fallthru
        _
      %p710 = scmp.le.s32.totalorder 1, %s39
      %p711 = scmp.lt.s32.totalorder %s39, 3
      %p712 = pnand %p710, %p711
      %p713 = pneg %p712
      // Predicated region
      $region101: #{tpu_custom_call.1} parent=5 // pred_check
        _
      $region102: #{tpu_custom_call.1} parent=5 // pred_check_branch
        %715 = sbr.rel (%p712) target = $region104
      $region103: #{tpu_custom_call.1} parent=5 // pred_region
        %s716 = ssub.s32 %s39, 1
        %s717 = sand.u32 %s52, 1
        %s718 = scalar_lea.sflag [#allocation4], %s717
        %s719 = sand.u32 %s52, 1
        %s720 = smul.addr %s719, 8
        %s721 = scalar_lea.vmem [#allocation3], %s720
        // Predicated region
        $region105: #{tpu_custom_call.1} parent=103 // pred_check
          %p722 = pneg %p65
        $region106: #{tpu_custom_call.1} parent=103 // pred_check_branch
          %724 = sbr.rel (%p722) target = $region108
        $region107: #{tpu_custom_call.1} parent=103 // pred_region
          %725 = dma.done %s718, 128
        $region108: #{tpu_custom_call.1} parent=103 // pred_fallthru
          _
        %s726 = sand.u32 %s44, 1
        %s727 = scalar_lea.sflag [#allocation6], %s726
        %s728 = sand.u32 %s78, 1
        %s729 = scalar_lea.vmem [#allocation5], %s728
        // Predicated region
        $region109: #{tpu_custom_call.1} parent=103 // pred_check
          %p730 = pneg %p91
        $region110: #{tpu_custom_call.1} parent=103 // pred_check_branch
          %732 = sbr.rel (%p730) target = $region112
        $region111: #{tpu_custom_call.1} parent=103 // pred_region
          %733 = dma.done %s727, 16
        $region112: #{tpu_custom_call.1} parent=103 // pred_fallthru
          _
        // Predicated region
        $region113: #{tpu_custom_call.1} parent=103 // pred_check
          %p734 = pneg %p112
        $region114: #{tpu_custom_call.1} parent=103 // pred_check_branch
          %736 = sbr.rel (%p734) target = $region116
        $region115: #{tpu_custom_call.1} parent=103 // pred_region
          %737 = dma.done [#allocation6], 256
        $region116: #{tpu_custom_call.1} parent=103 // pred_fallthru
          _
        // Predicated region
        $region117: #{tpu_custom_call.1} parent=103 // pred_check
          %p738 = pneg %p133
        $region118: #{tpu_custom_call.1} parent=103 // pred_check_branch
          %740 = sbr.rel (%p738) target = $region120
        $region119: #{tpu_custom_call.1} parent=103 // pred_region
          %741 = dma.done [#allocation9], 1024
        $region120: #{tpu_custom_call.1} parent=103 // pred_fallthru
          _
        // Predicated region
        $region121: #{tpu_custom_call.1} parent=103 // pred_check
          %p742 = pneg %p175
        $region122: #{tpu_custom_call.1} parent=103 // pred_check_branch
          %744 = sbr.rel (%p742) target = $region124
        $region123: #{tpu_custom_call.1} parent=103 // pred_region
          %745 = dma.done [#allocation9], 32
        $region124: #{tpu_custom_call.1} parent=103 // pred_fallthru
          _
        // Predicated region
        $region125: #{tpu_custom_call.1} parent=103 // pred_check
          %p746 = pneg %p196
        $region126: #{tpu_custom_call.1} parent=103 // pred_check_branch
          %748 = sbr.rel (%p746) target = $region128
        $region127: #{tpu_custom_call.1} parent=103 // pred_region
          %749 = dma.done [#allocation12], 32
        $region128: #{tpu_custom_call.1} parent=103 // pred_fallthru
          _
        // Predicated region
        $region129: #{tpu_custom_call.1} parent=103 // pred_check
          %p750 = pneg %p217
        $region130: #{tpu_custom_call.1} parent=103 // pred_check_branch
          %752 = sbr.rel (%p750) target = $region132
        $region131: #{tpu_custom_call.1} parent=103 // pred_region
          %753 = dma.done [#allocation12], 6144
        $region132: #{tpu_custom_call.1} parent=103 // pred_fallthru
          _
        // Predicated region
        $region133: #{tpu_custom_call.1} parent=103 // pred_check
          %p754 = pneg %p259
        $region134: #{tpu_custom_call.1} parent=103 // pred_check_branch
          %756 = sbr.rel (%p754) target = $region136
        $region135: #{tpu_custom_call.1} parent=103 // pred_region
          %757 = dma.done [#allocation15], 2048
        $region136: #{tpu_custom_call.1} parent=103 // pred_fallthru
          _
        // Predicated region
        $region137: #{tpu_custom_call.1} parent=103 // pred_check
          %p758 = pneg %p343
        $region138: #{tpu_custom_call.1} parent=103 // pred_check_branch
          %760 = sbr.rel (%p758) target = $region140
        $region139: #{tpu_custom_call.1} parent=103 // pred_region
          %761 = dma.done [#allocation15], 8192
        $region140: #{tpu_custom_call.1} parent=103 // pred_fallthru
          _
        // Predicated region
        $region141: #{tpu_custom_call.1} parent=103 // pred_check
          %p762 = pneg %p385
        $region142: #{tpu_custom_call.1} parent=103 // pred_check_branch
          %764 = sbr.rel (%p762) target = $region144
        $region143: #{tpu_custom_call.1} parent=103 // pred_region
          %765 = dma.done [#allocation18], 8192
        $region144: #{tpu_custom_call.1} parent=103 // pred_fallthru
          _
        %s766 = sand.u32 %s52, 1
        %s767 = scalar_lea.sflag [#allocation4], %s766
        %s768 = sand.u32 %s52, 1
        %s769 = smul.addr %s768, 8
        %s770 = scalar_lea.vmem [#allocation3], %s769
        %p771 = pneg %p65
        %p772 = pneg %p62
        %s773 = sand.u32 %s44, 1
        %s774 = scalar_lea.sflag [#allocation6], %s773
        %s775 = sand.u32 %s78, 1
        %s776 = scalar_lea.vmem [#allocation5], %s775
        %p777 = pneg %p91
        %p778 = pneg %p88
        %p779 = pneg %p112
        %p780 = pneg %p109
        %p781 = pneg %p133
        %p782 = pneg %p130
        %p783 = pneg %p154
        %p784 = pneg %p151
        %p785 = pneg %p175
        %p786 = pneg %p172
        %p787 = pneg %p196
        %p788 = pneg %p193
        %p789 = pneg %p217
        %p790 = pneg %p214
        %p791 = pneg %p238
        %p792 = pneg %p235
        %p793 = pneg %p259
        %p794 = pneg %p256
        %p795 = pneg %p280
        %p796 = pneg %p277
        %p797 = pneg %p301
        %p798 = pneg %p298
        %p799 = pneg %p322
        %p800 = pneg %p319
        %p801 = pneg %p343
        %p802 = pneg %p340
        %p803 = pneg %p364
        %p804 = pneg %p361
        %p805 = pneg %p385
        %p806 = pneg %p382
        %p807 = pneg %p406
        %p808 = pneg %p403
        %p809 = pneg %p427
        %p810 = pneg %p424
        %p811 = pneg %p448
        %p812 = pneg %p445
        %p813 = pneg %p469
        %p814 = pneg %p466
        %p815 = pneg %p490
        %p816 = pneg %p487
        %p817 = pneg %p516
        %p818 = pneg %p513
        %p819 = scmp.lt.s32.totalorder %s44, 1
        %s820 = scalar_select %p819, %s44, 1
        %s821 = smul.addr %s820, 2
        %s822 = scalar_lea.vmem %s21, %s821
        %p823 = scmp.lt.s32.totalorder %s44, 1
        %s824 = scalar_select %p823, %s44, 1
        %s825 = smul.addr %s824, 2
        %s826 = scalar_lea.vmem %s21, %s825
        %v828 = vld [vmem:[%s721] sm:$0xf]
        %v829 = vld [vmem:[%s721 + $0x4] sm:$0xf]
        %v830 = vld [vmem:[#allocation8] sm:$0xf]
        %v831 = vld [vmem:[#allocation8 + $0x4] sm:$0xf]
        %v832 = vld [vmem:[#allocation8 + $0x8] sm:$0xf]
        %v833 = vld [vmem:[#allocation8 + $0xc] sm:$0xf]
        %v834 = vld [vmem:[#allocation8 + $0x10] sm:$0xf]
        %v835 = vld [vmem:[#allocation8 + $0x14] sm:$0xf]
        %v836 = vld [vmem:[#allocation8 + $0x18] sm:$0xf]
        %v837 = vld [vmem:[#allocation8 + $0x1c] sm:$0xf]
        %v838 = vld [vmem:[#allocation8 + $0x20] sm:$0xf]
        %v839 = vld [vmem:[#allocation8 + $0x24] sm:$0xf]
        %v840 = vld [vmem:[#allocation8 + $0x28] sm:$0xf]
        %v841 = vld [vmem:[#allocation8 + $0x2c] sm:$0xf]
        %v842 = vld [vmem:[#allocation8 + $0x30] sm:$0xf]
        %v843 = vld [vmem:[#allocation8 + $0x34] sm:$0xf]
        %v844 = vld [vmem:[#allocation8 + $0x38] sm:$0xf]
        %v845 = vld [vmem:[#allocation8 + $0x3c] sm:$0xf]
        %v846 = vld [vmem:[%s4] sm:$0xff]
        %v847 = vld [vmem:[%s4 + $0x8] sm:$0xff]
        %v850 = vunpack.c.l.b16 %v828
        %v851 = vunpack.c.l.b16 %v829
        %v852 = vpack.c.b16 %v851, %v850
        %v870 = vunpack.c.l.b16 %v830
        %v871 = vunpack.c.l.b16 %v831
        %v872 = vunpack.c.l.b16 %v832
        %v873 = vunpack.c.l.b16 %v833
        %v874 = vunpack.c.l.b16 %v834
        %v875 = vunpack.c.l.b16 %v835
        %v876 = vunpack.c.l.b16 %v836
        %v877 = vunpack.c.l.b16 %v837
        %v878 = vunpack.c.l.b16 %v838
        %v879 = vunpack.c.l.b16 %v839
        %v880 = vunpack.c.l.b16 %v840
        %v881 = vunpack.c.l.b16 %v841
        %v882 = vunpack.c.l.b16 %v842
        %v883 = vunpack.c.l.b16 %v843
        %v884 = vunpack.c.l.b16 %v844
        %v885 = vunpack.c.l.b16 %v845
        %v886 = vpack.c.b16 %v871, %v870
        %v887 = vpack.c.b16 %v873, %v872
        %v888 = vpack.c.b16 %v875, %v874
        %v889 = vpack.c.b16 %v877, %v876
        %v890 = vpack.c.b16 %v879, %v878
        %v891 = vpack.c.b16 %v881, %v880
        %v892 = vpack.c.b16 %v883, %v882
        %v893 = vpack.c.b16 %v885, %v884
        %902 = vmatprep.subr.bf16.mxu0 0
        %903 = vmatpush1.bf16.msra.mxu0 %v886
        %904 = vmatprep.subr.bf16.mxu0 0
        %905 = vmatpush1.bf16.msra.mxu0 %v887
        %906 = vmatprep.subr.bf16.mxu0 0
        %907 = vmatpush1.bf16.msra.mxu0 %v888
        %908 = vmatprep.subr.bf16.mxu0 0
        %909 = vmatpush1.bf16.msra.mxu0 %v889
        %910 = vmatprep.subr.bf16.mxu0 0
        %911 = vmatpush1.bf16.msra.mxu0 %v890
        %912 = vmatprep.subr.bf16.mxu0 0
        %913 = vmatpush1.bf16.msra.mxu0 %v891
        %914 = vmatprep.subr.bf16.mxu0 0
        %915 = vmatpush1.bf16.msra.mxu0 %v892
        %916 = vmatprep.subr.bf16.mxu0 0
        %917 = vmatpush1.bf16.msra.mxu0 %v893
        %918 = vmatprep.subr.bf16.mxu0 0
        %919 = vmatpush1.bf16.msra.mxu0 0
        %920 = vmatprep.subr.bf16.mxu0 0
        %921 = vmatpush1.bf16.msra.mxu0 0
        %922 = vmatprep.subr.bf16.mxu0 0
        %923 = vmatpush1.bf16.msra.mxu0 0
        %924 = vmatprep.subr.bf16.mxu0 0
        %925 = vmatpush1.bf16.msra.mxu0 0
        %926 = vmatprep.subr.bf16.mxu0 0
        %927 = vmatpush1.bf16.msra.mxu0 0
        %928 = vmatprep.subr.bf16.mxu0 0
        %929 = vmatpush1.bf16.msra.mxu0 0
        %930 = vmatprep.subr.bf16.mxu0 0
        %931 = vmatpush1.bf16.msra.mxu0 0
        %932 = vmatprep.subr.bf16.mxu0 0
        %933 = vmatpush1.bf16.msra.mxu0 0
        %934 = vmatprep.mubr.bf16.mxu0 0
        %935 = vmatmul.mubr.bf16.gmra.mrb[0].mxu0 %v852
        %v936 = vpop.f32.mrb[0].mxu0
        %v937 = vadd.f32 %v846, %v936
        %v938 = vpop.f32.mrb[0].mxu0
        %v939 = vpop.f32.mrb[0].mxu0
        %v940 = vadd.f32 %v847, %v939
        %v941 = vpop.f32.mrb[0].mxu0
        %942 = vdwg.mxu0
        %v943 = vld [vmem:[#allocation7] sm:$0xff]
        %v944 = vld [vmem:[#allocation7 + $0x8] sm:$0xff]
        %v945 = vld [vmem:[%s729] sm:$0x1]
        %v946 = vsub.f32 1.0, %v945
        %v947 = vmul.f32 %v946, -1e+09
        %v949 = vlaneseq
        %v950 = vshrl.u32 %v949, 7
        %v951 = vsub.s32 0, %v950
        %v952 = vrot.slane %v947, %v951
        %v954 = vadd.f32 %v943, %v952
        %v955 = vadd.f32 %v944, %v952
        %v956 = vld [vmem:[#allocation10] sm:$0x1]
        %v957 = vld [vmem:[#allocation11] sm:$0x1]
        %958 = vadd.xlane.f32.xlu0 %v937
        %v959 = vpop.xlane.xlu0 %958
        %960 = vadd.xlane.f32.xlu0 %v940
        %v961 = vpop.xlane.xlu0 %960
        %v962 = vrcp.pop 128.0
        %v963 = vmul.f32 %v959, %v962
        %v964 = vmul.f32 %v961, %v962
        %v965 = vsub.f32 %v937, %v963
        %v966 = vsub.f32 %v940, %v964
        %v967 = vmul.f32 %v965, %v965
        %v968 = vmul.f32 %v966, %v966
        %969 = vadd.xlane.f32.xlu0 %v967
        %v970 = vpop.xlane.xlu0 %969
        %971 = vadd.xlane.f32.xlu0 %v968
        %v972 = vpop.xlane.xlu0 %971
        %v973 = vmul.f32 %v970, %v962
        %v974 = vmul.f32 %v972, %v962
        %v975 = vadd.f32 %v973, 1e-05
        %v976 = vadd.f32 %v974, 1e-05
        %v977 = vrsqrt.pop %v975
        %v978 = vrsqrt.pop %v976
        %v979 = vmul.f32 %v965, %v977
        %v980 = vmul.f32 %v966, %v978
        %v982 = vlaneseq
        %v983 = vshrl.u32 %v982, 7
        %v984 = vsub.s32 0, %v983
        %v985 = vrot.slane %v956, %v984
        %v987 = vmul.f32 %v979, %v985
        %v988 = vmul.f32 %v980, %v985
        %v990 = vlaneseq
        %v991 = vshrl.u32 %v990, 7
        %v992 = vsub.s32 0, %v991
        %v993 = vrot.slane %v957, %v992
        %v995 = vadd.f32 %v987, %v993
        %v996 = vadd.f32 %v988, %v993
        %v997 = vpack.c.bf16 %v996, %v995
        %v998 = vld [vmem:[#allocation13] sm:$0xff]
        %v999 = vld [vmem:[#allocation13 + $0x8] sm:$0xf]
        %v1000 = vld [vmem:[#allocation13 + $0xc] sm:$0xff]
        %v1001 = vld [vmem:[#allocation13 + $0x14] sm:$0xf]
        %v1002 = vld [vmem:[#allocation13 + $0x18] sm:$0xff]
        %v1003 = vld [vmem:[#allocation13 + $0x20] sm:$0xf]
        %v1004 = vld [vmem:[#allocation13 + $0x24] sm:$0xff]
        %v1005 = vld [vmem:[#allocation13 + $0x2c] sm:$0xf]
        %v1006 = vld [vmem:[#allocation13 + $0x30] sm:$0xff]
        %v1007 = vld [vmem:[#allocation13 + $0x38] sm:$0xf]
        %v1008 = vld [vmem:[#allocation13 + $0x3c] sm:$0xff]
        %v1009 = vld [vmem:[#allocation13 + $0x44] sm:$0xf]
        %v1010 = vld [vmem:[#allocation13 + $0x48] sm:$0xff]
        %v1011 = vld [vmem:[#allocation13 + $0x50] sm:$0xf]
        %v1012 = vld [vmem:[#allocation13 + $0x54] sm:$0xff]
        %v1013 = vld [vmem:[#allocation13 + $0x5c] sm:$0xf]
        %v1014 = vld [vmem:[#allocation13 + $0x60] sm:$0xff]
        %v1015 = vld [vmem:[#allocation13 + $0x68] sm:$0xf]
        %v1016 = vld [vmem:[#allocation13 + $0x6c] sm:$0xff]
        %v1017 = vld [vmem:[#allocation13 + $0x74] sm:$0xf]
        %v1018 = vld [vmem:[#allocation13 + $0x78] sm:$0xff]
        %v1019 = vld [vmem:[#allocation13 + $0x80] sm:$0xf]
        %v1020 = vld [vmem:[#allocation13 + $0x84] sm:$0xff]
        %v1021 = vld [vmem:[#allocation13 + $0x8c] sm:$0xf]
        %v1022 = vld [vmem:[#allocation13 + $0x90] sm:$0xff]
        %v1023 = vld [vmem:[#allocation13 + $0x98] sm:$0xf]
        %v1024 = vld [vmem:[#allocation13 + $0x9c] sm:$0xff]
        %v1025 = vld [vmem:[#allocation13 + $0xa4] sm:$0xf]
        %v1026 = vld [vmem:[#allocation13 + $0xa8] sm:$0xff]
        %v1027 = vld [vmem:[#allocation13 + $0xb0] sm:$0xf]
        %v1028 = vld [vmem:[#allocation13 + $0xb4] sm:$0xff]
        %v1029 = vld [vmem:[#allocation13 + $0xbc] sm:$0xf]
        %v1030 = vld [vmem:[%s8] sm:$0x7]
        %v1032 = vlaneseq
        %v1033 = vshrl.u32 %v1032, 7
        %v1034 = vsub.s32 0, %v1033
        %v1035 = vrot.slane %v1030, %v1034
        %v1036 = vlaneseq
        %v1037 = vshrl.u32 %v1036, 7
        %v1038 = vsub.s32 1, %v1037
        %v1039 = vrot.slane %v1030, %v1038
        %v1040 = vlaneseq
        %v1041 = vshrl.u32 %v1040, 7
        %v1042 = vsub.s32 2, %v1041
        %v1043 = vrot.slane %v1030, %v1042
        %v1079 = vunpack.c.l.b16 %v998
        %v1080 = vunpack.c.h.b16 %v998
        %v1081 = vunpack.c.l.b16 %v999
        %v1082 = vunpack.c.l.b16 %v1000
        %v1083 = vunpack.c.h.b16 %v1000
        %v1084 = vunpack.c.l.b16 %v1001
        %v1085 = vunpack.c.l.b16 %v1002
        %v1086 = vunpack.c.h.b16 %v1002
        %v1087 = vunpack.c.l.b16 %v1003
        %v1088 = vunpack.c.l.b16 %v1004
        %v1089 = vunpack.c.h.b16 %v1004
        %v1090 = vunpack.c.l.b16 %v1005
        %v1091 = vunpack.c.l.b16 %v1006
        %v1092 = vunpack.c.h.b16 %v1006
        %v1093 = vunpack.c.l.b16 %v1007
        %v1094 = vunpack.c.l.b16 %v1008
        %v1095 = vunpack.c.h.b16 %v1008
        %v1096 = vunpack.c.l.b16 %v1009
        %v1097 = vunpack.c.l.b16 %v1010
        %v1098 = vunpack.c.h.b16 %v1010
        %v1099 = vunpack.c.l.b16 %v1011
        %v1100 = vunpack.c.l.b16 %v1012
        %v1101 = vunpack.c.h.b16 %v1012
        %v1102 = vunpack.c.l.b16 %v1013
        %v1103 = vunpack.c.l.b16 %v1014
        %v1104 = vunpack.c.h.b16 %v1014
        %v1105 = vunpack.c.l.b16 %v1015
        %v1106 = vunpack.c.l.b16 %v1016
        %v1107 = vunpack.c.h.b16 %v1016
        %v1108 = vunpack.c.l.b16 %v1017
        %v1109 = vunpack.c.l.b16 %v1018
        %v1110 = vunpack.c.h.b16 %v1018
        %v1111 = vunpack.c.l.b16 %v1019
        %v1112 = vunpack.c.l.b16 %v1020
        %v1113 = vunpack.c.h.b16 %v1020
        %v1114 = vunpack.c.l.b16 %v1021
        %v1115 = vunpack.c.l.b16 %v1022
        %v1116 = vunpack.c.h.b16 %v1022
        %v1117 = vunpack.c.l.b16 %v1023
        %v1118 = vunpack.c.l.b16 %v1024
        %v1119 = vunpack.c.h.b16 %v1024
        %v1120 = vunpack.c.l.b16 %v1025
        %v1121 = vunpack.c.l.b16 %v1026
        %v1122 = vunpack.c.h.b16 %v1026
        %v1123 = vunpack.c.l.b16 %v1027
        %v1124 = vunpack.c.l.b16 %v1028
        %v1125 = vunpack.c.h.b16 %v1028
        %v1126 = vunpack.c.l.b16 %v1029
        %v1127 = vpack.c.b16 %v1082, %v1079
        %v1128 = vpack.c.b16 %v1083, %v1080
        %v1129 = vpack.c.b16 %v1084, %v1081
        %v1130 = vpack.c.b16 %v1088, %v1085
        %v1131 = vpack.c.b16 %v1089, %v1086
        %v1132 = vpack.c.b16 %v1090, %v1087
        %v1133 = vpack.c.b16 %v1094, %v1091
        %v1134 = vpack.c.b16 %v1095, %v1092
        %v1135 = vpack.c.b16 %v1096, %v1093
        %v1136 = vpack.c.b16 %v1100, %v1097
        %v1137 = vpack.c.b16 %v1101, %v1098
        %v1138 = vpack.c.b16 %v1102, %v1099
        %v1139 = vpack.c.b16 %v1106, %v1103
        %v1140 = vpack.c.b16 %v1107, %v1104
        %v1141 = vpack.c.b16 %v1108, %v1105
        %v1142 = vpack.c.b16 %v1112, %v1109
        %v1143 = vpack.c.b16 %v1113, %v1110
        %v1144 = vpack.c.b16 %v1114, %v1111
        %v1145 = vpack.c.b16 %v1118, %v1115
        %v1146 = vpack.c.b16 %v1119, %v1116
        %v1147 = vpack.c.b16 %v1120, %v1117
        %v1148 = vpack.c.b16 %v1124, %v1121
        %v1149 = vpack.c.b16 %v1125, %v1122
        %v1150 = vpack.c.b16 %v1126, %v1123
        %1175 = vmatprep.subr.bf16.mxu0 %v1128
        %1176 = vmatpush1.bf16.msra.mxu0 %v1127
        %1177 = vmatprep.subr.bf16.mxu0 %v1131
        %1178 = vmatpush1.bf16.msra.mxu0 %v1130
        %1179 = vmatprep.subr.bf16.mxu0 %v1134
        %1180 = vmatpush1.bf16.msra.mxu0 %v1133
        %1181 = vmatprep.subr.bf16.mxu0 %v1137
        %1182 = vmatpush1.bf16.msra.mxu0 %v1136
        %1183 = vmatprep.subr.bf16.mxu0 %v1140
        %1184 = vmatpush1.bf16.msra.mxu0 %v1139
        %1185 = vmatprep.subr.bf16.mxu0 %v1143
        %1186 = vmatpush1.bf16.msra.mxu0 %v1142
        %1187 = vmatprep.subr.bf16.mxu0 %v1146
        %1188 = vmatpush1.bf16.msra.mxu0 %v1145
        %1189 = vmatprep.subr.bf16.mxu0 %v1149
        %1190 = vmatpush1.bf16.msra.mxu0 %v1148
        %1191 = vmatprep.subr.bf16.mxu0 0
        %1192 = vmatpush1.bf16.msra.mxu0 0
        %1193 = vmatprep.subr.bf16.mxu0 0
        %1194 = vmatpush1.bf16.msra.mxu0 0
        %1195 = vmatprep.subr.bf16.mxu0 0
        %1196 = vmatpush1.bf16.msra.mxu0 0
        %1197 = vmatprep.subr.bf16.mxu0 0
        %1198 = vmatpush1.bf16.msra.mxu0 0
        %1199 = vmatprep.subr.bf16.mxu0 0
        %1200 = vmatpush1.bf16.msra.mxu0 0
        %1201 = vmatprep.subr.bf16.mxu0 0
        %1202 = vmatpush1.bf16.msra.mxu0 0
        %1203 = vmatprep.subr.bf16.mxu0 0
        %1204 = vmatpush1.bf16.msra.mxu0 0
        %1205 = vmatprep.subr.bf16.mxu0 0
        %1206 = vmatpush1.bf16.msra.mxu0 0
        %1207 = vmatprep.mubr.bf16.mxu0 0
        %1208 = vmatmul.mubr.bf16.gmra.mrb[0].mxu0 %v997
        %v1209 = vpop.f32.mrb[0].mxu0
        %v1210 = vadd.f32 %v1035, %v1209
        %v1211 = vpop.f32.mrb[0].mxu0
        %v1212 = vadd.f32 %v1039, %v1211
        %v1213 = vpop.f32.mrb[0].mxu0
        %v1214 = vadd.f32 %v1035, %v1213
        %v1215 = vpop.f32.mrb[0].mxu0
        %v1216 = vadd.f32 %v1039, %v1215
        %1217 = vdwg.mxu0
        %1218 = vmatprep.subr.bf16.mxu0 0
        %1219 = vmatpush1.bf16.msra.mxu0 %v1129
        %1220 = vmatprep.subr.bf16.mxu0 0
        %1221 = vmatpush1.bf16.msra.mxu0 %v1132
        %1222 = vmatprep.subr.bf16.mxu0 0
        %1223 = vmatpush1.bf16.msra.mxu0 %v1135
        %1224 = vmatprep.subr.bf16.mxu0 0
        %1225 = vmatpush1.bf16.msra.mxu0 %v1138
        %1226 = vmatprep.subr.bf16.mxu0 0
        %1227 = vmatpush1.bf16.msra.mxu0 %v1141
        %1228 = vmatprep.subr.bf16.mxu0 0
        %1229 = vmatpush1.bf16.msra.mxu0 %v1144
        %1230 = vmatprep.subr.bf16.mxu0 0
        %1231 = vmatpush1.bf16.msra.mxu0 %v1147
        %1232 = vmatprep.subr.bf16.mxu0 0
        %1233 = vmatpush1.bf16.msra.mxu0 %v1150
        %1234 = vmatprep.subr.bf16.mxu0 0
        %1235 = vmatpush1.bf16.msra.mxu0 0
        %1236 = vmatprep.subr.bf16.mxu0 0
        %1237 = vmatpush1.bf16.msra.mxu0 0
        %1238 = vmatprep.subr.bf16.mxu0 0
        %1239 = vmatpush1.bf16.msra.mxu0 0
        %1240 = vmatprep.subr.bf16.mxu0 0
        %1241 = vmatpush1.bf16.msra.mxu0 0
        %1242 = vmatprep.subr.bf16.mxu0 0
        %1243 = vmatpush1.bf16.msra.mxu0 0
        %1244 = vmatprep.subr.bf16.mxu0 0
        %1245 = vmatpush1.bf16.msra.mxu0 0
        %1246 = vmatprep.subr.bf16.mxu0 0
        %1247 = vmatpush1.bf16.msra.mxu0 0
        %1248 = vmatprep.subr.bf16.mxu0 0
        %1249 = vmatpush1.bf16.msra.mxu0 0
        %1250 = vmatprep.mubr.bf16.mxu0 0
        %1251 = vmatmul.mubr.bf16.gmra.mrb[0].mxu0 %v997
        %v1252 = vpop.f32.mrb[0].mxu0
        %v1253 = vadd.f32 %v1043, %v1252
        %v1254 = vpop.f32.mrb[0].mxu0
        %v1255 = vpop.f32.mrb[0].mxu0
        %v1256 = vadd.f32 %v1043, %v1255
        %v1257 = vpop.f32.mrb[0].mxu0
        %1258 = vdwg.mxu0
        %v1259 = vmul.f32 %v1210, 0.125
        %v1260 = vmul.f32 %v1214, 0.125
        %v1261 = vld [vmem:[#allocation14] sm:$0xf]
        %v1262 = vld [vmem:[#allocation14 + $0x4] sm:$0xf]
        %v1263 = vld [vmem:[#allocation14 + $0x8] sm:$0xf]
        %v1264 = vld [vmem:[#allocation14 + $0xc] sm:$0xf]
        %v1265 = vld [vmem:[#allocation14 + $0x10] sm:$0xf]
        %v1266 = vld [vmem:[#allocation14 + $0x14] sm:$0xf]
        %v1267 = vld [vmem:[#allocation14 + $0x18] sm:$0xf]
        %v1268 = vld [vmem:[#allocation14 + $0x1c] sm:$0xf]
        %v1269 = vld [vmem:[#allocation14 + $0x20] sm:$0xf]
        %v1270 = vld [vmem:[#allocation14 + $0x24] sm:$0xf]
        %v1271 = vld [vmem:[#allocation14 + $0x28] sm:$0xf]
        %v1272 = vld [vmem:[#allocation14 + $0x2c] sm:$0xf]
        %v1273 = vld [vmem:[#allocation14 + $0x30] sm:$0xf]
        %v1274 = vld [vmem:[#allocation14 + $0x34] sm:$0xf]
        %v1275 = vld [vmem:[#allocation14 + $0x38] sm:$0xf]
        %v1276 = vld [vmem:[#allocation14 + $0x3c] sm:$0xf]
        %v1277 = vpack.c.bf16 %v1260, %v1259
        %v1278 = vpack.c.bf16 %v1216, %v1212
        %v1279 = vpack.c.bf16 %v1256, %v1253
        %vm1280 = vcmask 523264
        %v1282 = vsel %vm1280, %v1277, 0
        %v1285 = vsel %vm1280, %v1278, 0
        %1287 = vmatprep.subr.bf16.mxu0 0
        %1288 = vmatpush1.bf16.xpose.msra.mxu0 %v1285
        %1289 = vmatprep.subr.bf16.mxu0 0
        %1290 = vmatpush1.bf16.xpose.msra.mxu0 0
        %1291 = vmatprep.subr.bf16.mxu0 0
        %1292 = vmatpush1.bf16.xpose.msra.mxu0 0
        %1293 = vmatprep.subr.bf16.mxu0 0
        %1294 = vmatpush1.bf16.xpose.msra.mxu0 0
        %1295 = vmatprep.subr.bf16.mxu0 0
        %1296 = vmatpush1.bf16.xpose.msra.mxu0 0
        %1297 = vmatprep.subr.bf16.mxu0 0
        %1298 = vmatpush1.bf16.xpose.msra.mxu0 0
        %1299 = vmatprep.subr.bf16.mxu0 0
        %1300 = vmatpush1.bf16.xpose.msra.mxu0 0
        %1301 = vmatprep.subr.bf16.mxu0 0
        %1302 = vmatpush1.bf16.xpose.msra.mxu0 0
        %1303 = vmatprep.subr.bf16.mxu0 0
        %1304 = vmatpush1.bf16.xpose.msra.mxu0 0
        %1305 = vmatprep.subr.bf16.mxu0 0
        %1306 = vmatpush1.bf16.xpose.msra.mxu0 0
        %1307 = vmatprep.subr.bf16.mxu0 0
        %1308 = vmatpush1.bf16.xpose.msra.mxu0 0
        %1309 = vmatprep.subr.bf16.mxu0 0
        %1310 = vmatpush1.bf16.xpose.msra.mxu0 0
        %1311 = vmatprep.subr.bf16.mxu0 0
        %1312 = vmatpush1.bf16.xpose.msra.mxu0 0
        %1313 = vmatprep.subr.bf16.mxu0 0
        %1314 = vmatpush1.bf16.xpose.msra.mxu0 0
        %1315 = vmatprep.subr.bf16.mxu0 0
        %1316 = vmatpush1.bf16.xpose.msra.mxu0 0
        %1317 = vmatprep.subr.bf16.mxu0 0
        %1318 = vmatpush1.bf16.xpose.msra.mxu0 0
        %1319 = vmatprep.mubr.bf16.mxu0 0
        %1320 = vmatmul.mubr.bf16.gmra.mrb[0].mxu0 %v1282
        %v1321 = vpop.f32.mrb[0].mxu0
        %v1322 = vadd.f32 %v954, %v1321
        %v1323 = vpop.f32.mrb[0].mxu0
        %v1324 = vpop.f32.mrb[0].mxu0
        %v1325 = vadd.f32 %v955, %v1324
        %v1326 = vpop.f32.mrb[0].mxu0
        %1327 = vdwg.mxu0
        %vm1328 = vcmask 130048
        %v1329 = vsel %vm1328, %v1322, -inf
        %1330 = vmax.xlane.f32.xlu0 %v1329
        %v1331 = vpop.xlane.xlu0 %1330
        %v1332 = vsel %vm1328, %v1325, -inf
        %1333 = vmax.xlane.f32.xlu0 %v1332
        %v1334 = vpop.xlane.xlu0 %1333
        %v1335 = vsub.f32 %v1322, %v1331
        %v1336 = vsub.f32 %v1325, %v1334
        %v1337 = vmul.f32 %v1335, 1.442695
        %v1338 = vpow.pop %v1337
        %v1339 = vmul.f32 %v1336, 1.442695
        %v1340 = vpow.pop %v1339
        %v1341 = vsel %vm1328, %v1338, 0.0
        %1342 = vadd.xlane.f32.xlu0 %v1341
        %v1343 = vpop.xlane.xlu0 %1342
        %v1344 = vsel %vm1328, %v1340, 0.0
        %1345 = vadd.xlane.f32.xlu0 %v1344
        %v1346 = vpop.xlane.xlu0 %1345
        %v1347 = vrcp.pop %v1343
        %v1348 = vrcp.pop %v1346
        %v1349 = vmul.f32 %v1338, %v1347
        %v1350 = vmul.f32 %v1340, %v1348
        %v1351 = vpack.c.bf16 %v1350, %v1349
        %v1353 = vsel %vm1328, %v1351, 0
        %1355 = vmatprep.subr.bf16.mxu0 0
        %1356 = vmatpush1.bf16.msra.mxu0 %v1279
        %1357 = vmatprep.subr.bf16.mxu0 0
        %1358 = vmatpush1.bf16.msra.mxu0 0
        %1359 = vmatprep.subr.bf16.mxu0 0
        %1360 = vmatpush1.bf16.msra.mxu0 0
        %1361 = vmatprep.subr.bf16.mxu0 0
        %1362 = vmatpush1.bf16.msra.mxu0 0
        %1363 = vmatprep.subr.bf16.mxu0 0
        %1364 = vmatpush1.bf16.msra.mxu0 0
        %1365 = vmatprep.subr.bf16.mxu0 0
        %1366 = vmatpush1.bf16.msra.mxu0 0
        %1367 = vmatprep.subr.bf16.mxu0 0
        %1368 = vmatpush1.bf16.msra.mxu0 0
        %1369 = vmatprep.subr.bf16.mxu0 0
        %1370 = vmatpush1.bf16.msra.mxu0 0
        %1371 = vmatprep.subr.bf16.mxu0 0
        %1372 = vmatpush1.bf16.msra.mxu0 0
        %1373 = vmatprep.subr.bf16.mxu0 0
        %1374 = vmatpush1.bf16.msra.mxu0 0
        %1375 = vmatprep.subr.bf16.mxu0 0
        %1376 = vmatpush1.bf16.msra.mxu0 0
        %1377 = vmatprep.subr.bf16.mxu0 0
        %1378 = vmatpush1.bf16.msra.mxu0 0
        %1379 = vmatprep.subr.bf16.mxu0 0
        %1380 = vmatpush1.bf16.msra.mxu0 0
        %1381 = vmatprep.subr.bf16.mxu0 0
        %1382 = vmatpush1.bf16.msra.mxu0 0
        %1383 = vmatprep.subr.bf16.mxu0 0
        %1384 = vmatpush1.bf16.msra.mxu0 0
        %1385 = vmatprep.subr.bf16.mxu0 0
        %1386 = vmatpush1.bf16.msra.mxu0 0
        %1387 = vmatprep.mubr.bf16.mxu0 0
        %1388 = vmatmul.mubr.bf16.gmra.mrb[0].mxu0 %v1353
        %v1389 = vpop.f32.mrb[0].mxu0
        %v1390 = vadd.f32 0.0, %v1389
        %v1391 = vpop.f32.mrb[0].mxu0
        %v1392 = vpop.f32.mrb[0].mxu0
        %v1393 = vadd.f32 0.0, %v1392
        %v1394 = vpop.f32.mrb[0].mxu0
        %1395 = vdwg.mxu0
        %v1396 = vpack.c.bf16 %v1393, %v1390
        %1398 = vrot.lane.b32.xlu0 %v1277, 64
        %v1399 = vpop.permute.xlu0 %1398
        %1401 = vrot.lane.b32.xlu0 %v1278, 64
        %v1402 = vpop.permute.xlu0 %1401
        %v1404 = vsel %vm1280, %v1399, 0
        %v1407 = vsel %vm1280, %v1402, 0
        %1409 = vmatprep.subr.bf16.mxu0 0
        %1410 = vmatpush1.bf16.xpose.msra.mxu0 %v1407
        %1411 = vmatprep.subr.bf16.mxu0 0
        %1412 = vmatpush1.bf16.xpose.msra.mxu0 0
        %1413 = vmatprep.subr.bf16.mxu0 0
        %1414 = vmatpush1.bf16.xpose.msra.mxu0 0
        %1415 = vmatprep.subr.bf16.mxu0 0
        %1416 = vmatpush1.bf16.xpose.msra.mxu0 0
        %1417 = vmatprep.subr.bf16.mxu0 0
        %1418 = vmatpush1.bf16.xpose.msra.mxu0 0
        %1419 = vmatprep.subr.bf16.mxu0 0
        %1420 = vmatpush1.bf16.xpose.msra.mxu0 0
        %1421 = vmatprep.subr.bf16.mxu0 0
        %1422 = vmatpush1.bf16.xpose.msra.mxu0 0
        %1423 = vmatprep.subr.bf16.mxu0 0
        %1424 = vmatpush1.bf16.xpose.msra.mxu0 0
        %1425 = vmatprep.subr.bf16.mxu0 0
        %1426 = vmatpush1.bf16.xpose.msra.mxu0 0
        %1427 = vmatprep.subr.bf16.mxu0 0
        %1428 = vmatpush1.bf16.xpose.msra.mxu0 0
        %1429 = vmatprep.subr.bf16.mxu0 0
        %1430 = vmatpush1.bf16.xpose.msra.mxu0 0
        %1431 = vmatprep.subr.bf16.mxu0 0
        %1432 = vmatpush1.bf16.xpose.msra.mxu0 0
        %1433 = vmatprep.subr.bf16.mxu0 0
        %1434 = vmatpush1.bf16.xpose.msra.mxu0 0
        %1435 = vmatprep.subr.bf16.mxu0 0
        %1436 = vmatpush1.bf16.xpose.msra.mxu0 0
        %1437 = vmatprep.subr.bf16.mxu0 0
        %1438 = vmatpush1.bf16.xpose.msra.mxu0 0
        %1439 = vmatprep.subr.bf16.mxu0 0
        %1440 = vmatpush1.bf16.xpose.msra.mxu0 0
        %1441 = vmatprep.mubr.bf16.mxu0 0
        %1442 = vmatmul.mubr.bf16.gmra.mrb[0].mxu0 %v1404
        %v1443 = vpop.f32.mrb[0].mxu0
        %v1444 = vadd.f32 %v954, %v1443
        %v1445 = vpop.f32.mrb[0].mxu0
        %v1446 = vpop.f32.mrb[0].mxu0
        %v1447 = vadd.f32 %v955, %v1446
        %v1448 = vpop.f32.mrb[0].mxu0
        %1449 = vdwg.mxu0
        %v1450 = vsel %vm1328, %v1444, -inf
        %1451 = vmax.xlane.f32.xlu0 %v1450
        %v1452 = vpop.xlane.xlu0 %1451
        %v1453 = vsel %vm1328, %v1447, -inf
        %1454 = vmax.xlane.f32.xlu0 %v1453
        %v1455 = vpop.xlane.xlu0 %1454
        %v1456 = vsub.f32 %v1444, %v1452
        %v1457 = vsub.f32 %v1447, %v1455
        %v1458 = vmul.f32 %v1456, 1.442695
        %v1459 = vpow.pop %v1458
        %v1460 = vmul.f32 %v1457, 1.442695
        %v1461 = vpow.pop %v1460
        %v1462 = vsel %vm1328, %v1459, 0.0
        %1463 = vadd.xlane.f32.xlu0 %v1462
        %v1464 = vpop.xlane.xlu0 %1463
        %v1465 = vsel %vm1328, %v1461, 0.0
        %1466 = vadd.xlane.f32.xlu0 %v1465
        %v1467 = vpop.xlane.xlu0 %1466
        %v1468 = vrcp.pop %v1464
        %v1469 = vrcp.pop %v1467
        %v1470 = vmul.f32 %v1459, %v1468
        %v1471 = vmul.f32 %v1461, %v1469
        %v1472 = vpack.c.bf16 %v1471, %v1470
        %1474 = vrot.lane.b32.xlu0 %v1279, 64
        %v1475 = vpop.permute.xlu0 %1474
        %v1478 = vsel %vm1328, %v1472, 0
        %1480 = vmatprep.subr.bf16.mxu0 0
        %1481 = vmatpush1.bf16.msra.mxu0 %v1475
        %1482 = vmatprep.subr.bf16.mxu0 0
        %1483 = vmatpush1.bf16.msra.mxu0 0
        %1484 = vmatprep.subr.bf16.mxu0 0
        %1485 = vmatpush1.bf16.msra.mxu0 0
        %1486 = vmatprep.subr.bf16.mxu0 0
        %1487 = vmatpush1.bf16.msra.mxu0 0
        %1488 = vmatprep.subr.bf16.mxu0 0
        %1489 = vmatpush1.bf16.msra.mxu0 0
        %1490 = vmatprep.subr.bf16.mxu0 0
        %1491 = vmatpush1.bf16.msra.mxu0 0
        %1492 = vmatprep.subr.bf16.mxu0 0
        %1493 = vmatpush1.bf16.msra.mxu0 0
        %1494 = vmatprep.subr.bf16.mxu0 0
        %1495 = vmatpush1.bf16.msra.mxu0 0
        %1496 = vmatprep.subr.bf16.mxu0 0
        %1497 = vmatpush1.bf16.msra.mxu0 0
        %1498 = vmatprep.subr.bf16.mxu0 0
        %1499 = vmatpush1.bf16.msra.mxu0 0
        %1500 = vmatprep.subr.bf16.mxu0 0
        %1501 = vmatpush1.bf16.msra.mxu0 0
        %1502 = vmatprep.subr.bf16.mxu0 0
        %1503 = vmatpush1.bf16.msra.mxu0 0
        %1504 = vmatprep.subr.bf16.mxu0 0
        %1505 = vmatpush1.bf16.msra.mxu0 0
        %1506 = vmatprep.subr.bf16.mxu0 0
        %1507 = vmatpush1.bf16.msra.mxu0 0
        %1508 = vmatprep.subr.bf16.mxu0 0
        %1509 = vmatpush1.bf16.msra.mxu0 0
        %1510 = vmatprep.subr.bf16.mxu0 0
        %1511 = vmatpush1.bf16.msra.mxu0 0
        %1512 = vmatprep.mubr.bf16.mxu0 0
        %1513 = vmatmul.mubr.bf16.gmra.mrb[0].mxu0 %v1478
        %v1514 = vpop.f32.mrb[0].mxu0
        %v1515 = vadd.f32 0.0, %v1514
        %v1516 = vpop.f32.mrb[0].mxu0
        %v1517 = vpop.f32.mrb[0].mxu0
        %v1518 = vadd.f32 0.0, %v1517
        %v1519 = vpop.f32.mrb[0].mxu0
        %1520 = vdwg.mxu0
        %v1521 = vpack.c.bf16 %v1518, %v1515
        %v1530 = vunpack.c.l.b16 %v1269
        %v1531 = vunpack.c.l.b16 %v1270
        %v1532 = vunpack.c.l.b16 %v1271
        %v1533 = vunpack.c.l.b16 %v1272
        %v1534 = vunpack.c.l.b16 %v1273
        %v1535 = vunpack.c.l.b16 %v1274
        %v1536 = vunpack.c.l.b16 %v1275
        %v1537 = vunpack.c.l.b16 %v1276
        %v1538 = vpack.c.b16 %v1531, %v1530
        %v1539 = vpack.c.b16 %v1533, %v1532
        %v1540 = vpack.c.b16 %v1535, %v1534
        %v1541 = vpack.c.b16 %v1537, %v1536
        %v1547 = vsel %vm1280, %v1521, 0
        %1549 = vmatprep.subr.bf16.mxu0 0
        %1550 = vmatpush1.bf16.msra.mxu0 %v1538
        %1551 = vmatprep.subr.bf16.mxu0 0
        %1552 = vmatpush1.bf16.msra.mxu0 %v1539
        %1553 = vmatprep.subr.bf16.mxu0 0
        %1554 = vmatpush1.bf16.msra.mxu0 %v1540
        %1555 = vmatprep.subr.bf16.mxu0 0
        %1556 = vmatpush1.bf16.msra.mxu0 %v1541
        %1557 = vmatprep.subr.bf16.mxu0 0
        %1558 = vmatpush1.bf16.msra.mxu0 0
        %1559 = vmatprep.subr.bf16.mxu0 0
        %1560 = vmatpush1.bf16.msra.mxu0 0
        %1561 = vmatprep.subr.bf16.mxu0 0
        %1562 = vmatpush1.bf16.msra.mxu0 0
        %1563 = vmatprep.subr.bf16.mxu0 0
        %1564 = vmatpush1.bf16.msra.mxu0 0
        %1565 = vmatprep.subr.bf16.mxu0 0
        %1566 = vmatpush1.bf16.msra.mxu0 0
        %1567 = vmatprep.subr.bf16.mxu0 0
        %1568 = vmatpush1.bf16.msra.mxu0 0
        %1569 = vmatprep.subr.bf16.mxu0 0
        %1570 = vmatpush1.bf16.msra.mxu0 0
        %1571 = vmatprep.subr.bf16.mxu0 0
        %1572 = vmatpush1.bf16.msra.mxu0 0
        %1573 = vmatprep.subr.bf16.mxu0 0
        %1574 = vmatpush1.bf16.msra.mxu0 0
        %1575 = vmatprep.subr.bf16.mxu0 0
        %1576 = vmatpush1.bf16.msra.mxu0 0
        %1577 = vmatprep.subr.bf16.mxu0 0
        %1578 = vmatpush1.bf16.msra.mxu0 0
        %1579 = vmatprep.subr.bf16.mxu0 0
        %1580 = vmatpush1.bf16.msra.mxu0 0
        %1581 = vmatprep.mubr.bf16.mxu0 0
        %1582 = vmatmul.mubr.bf16.gmra.mrb[0].mxu0 %v1547
        %v1583 = vpop.f32.mrb[0].mxu0
        %v1584 = vadd.f32 0.0, %v1583
        %v1585 = vpop.f32.mrb[0].mxu0
        %v1586 = vpop.f32.mrb[0].mxu0
        %v1587 = vadd.f32 0.0, %v1586
        %v1588 = vpop.f32.mrb[0].mxu0
        %1589 = vdwg.mxu0
        %v1598 = vunpack.c.l.b16 %v1261
        %v1599 = vunpack.c.l.b16 %v1262
        %v1600 = vunpack.c.l.b16 %v1263
        %v1601 = vunpack.c.l.b16 %v1264
        %v1602 = vunpack.c.l.b16 %v1265
        %v1603 = vunpack.c.l.b16 %v1266
        %v1604 = vunpack.c.l.b16 %v1267
        %v1605 = vunpack.c.l.b16 %v1268
        %v1606 = vpack.c.b16 %v1599, %v1598
        %v1607 = vpack.c.b16 %v1601, %v1600
        %v1608 = vpack.c.b16 %v1603, %v1602
        %v1609 = vpack.c.b16 %v1605, %v1604
        %v1615 = vsel %vm1280, %v1396, 0
        %1617 = vmatprep.subr.bf16.mxu0 0
        %1618 = vmatpush1.bf16.msra.mxu0 %v1606
        %1619 = vmatprep.subr.bf16.mxu0 0
        %1620 = vmatpush1.bf16.msra.mxu0 %v1607
        %1621 = vmatprep.subr.bf16.mxu0 0
        %1622 = vmatpush1.bf16.msra.mxu0 %v1608
        %1623 = vmatprep.subr.bf16.mxu0 0
        %1624 = vmatpush1.bf16.msra.mxu0 %v1609
        %1625 = vmatprep.subr.bf16.mxu0 0
        %1626 = vmatpush1.bf16.msra.mxu0 0
        %1627 = vmatprep.subr.bf16.mxu0 0
        %1628 = vmatpush1.bf16.msra.mxu0 0
        %1629 = vmatprep.subr.bf16.mxu0 0
        %1630 = vmatpush1.bf16.msra.mxu0 0
        %1631 = vmatprep.subr.bf16.mxu0 0
        %1632 = vmatpush1.bf16.msra.mxu0 0
        %1633 = vmatprep.subr.bf16.mxu0 0
        %1634 = vmatpush1.bf16.msra.mxu0 0
        %1635 = vmatprep.subr.bf16.mxu0 0
        %1636 = vmatpush1.bf16.msra.mxu0 0
        %1637 = vmatprep.subr.bf16.mxu0 0
        %1638 = vmatpush1.bf16.msra.mxu0 0
        %1639 = vmatprep.subr.bf16.mxu0 0
        %1640 = vmatpush1.bf16.msra.mxu0 0
        %1641 = vmatprep.subr.bf16.mxu0 0
        %1642 = vmatpush1.bf16.msra.mxu0 0
        %1643 = vmatprep.subr.bf16.mxu0 0
        %1644 = vmatpush1.bf16.msra.mxu0 0
        %1645 = vmatprep.subr.bf16.mxu0 0
        %1646 = vmatpush1.bf16.msra.mxu0 0
        %1647 = vmatprep.subr.bf16.mxu0 0
        %1648 = vmatpush1.bf16.msra.mxu0 0
        %1649 = vmatprep.mubr.bf16.mxu0 0
        %1650 = vmatmul.mubr.bf16.gmra.mrb[0].mxu0 %v1615
        %v1651 = vpop.f32.mrb[0].mxu0
        %v1652 = vadd.f32 %v1584, %v1651
        %v1653 = vpop.f32.mrb[0].mxu0
        %v1654 = vpop.f32.mrb[0].mxu0
        %v1655 = vadd.f32 %v1587, %v1654
        %v1656 = vpop.f32.mrb[0].mxu0
        %1657 = vdwg.mxu0
        %v1658 = vadd.f32 %v937, %v1652
        %v1659 = vadd.f32 %v940, %v1655
        %v1660 = vld [vmem:[%s10] sm:$0x1]
        %v1662 = vlaneseq
        %v1663 = vshrl.u32 %v1662, 7
        %v1664 = vsub.s32 0, %v1663
        %v1665 = vrot.slane %v1660, %v1664
        %v1667 = vadd.f32 %v1658, %v1665
        %v1668 = vadd.f32 %v1659, %v1665
        %v1669 = vld [vmem:[%s11] sm:$0x1]
        %v1670 = vld [vmem:[%s12] sm:$0x1]
        %1671 = vadd.xlane.f32.xlu0 %v1667
        %v1672 = vpop.xlane.xlu0 %1671
        %1673 = vadd.xlane.f32.xlu0 %v1668
        %v1674 = vpop.xlane.xlu0 %1673
        %v1675 = vmul.f32 %v1672, %v962
        %v1676 = vmul.f32 %v1674, %v962
        %v1677 = vsub.f32 %v1667, %v1675
        %v1678 = vsub.f32 %v1668, %v1676
        %v1679 = vmul.f32 %v1677, %v1677
        %v1680 = vmul.f32 %v1678, %v1678
        %1681 = vadd.xlane.f32.xlu0 %v1679
        %v1682 = vpop.xlane.xlu0 %1681
        %1683 = vadd.xlane.f32.xlu0 %v1680
        %v1684 = vpop.xlane.xlu0 %1683
        %v1685 = vmul.f32 %v1682, %v962
        %v1686 = vmul.f32 %v1684, %v962
        %v1687 = vadd.f32 %v1685, 1e-05
        %v1688 = vadd.f32 %v1686, 1e-05
        %v1689 = vrsqrt.pop %v1687
        %v1690 = vrsqrt.pop %v1688
        %v1691 = vmul.f32 %v1677, %v1689
        %v1692 = vmul.f32 %v1678, %v1690
        %v1694 = vlaneseq
        %v1695 = vshrl.u32 %v1694, 7
        %v1696 = vsub.s32 0, %v1695
        %v1697 = vrot.slane %v1669, %v1696
        %v1699 = vmul.f32 %v1691, %v1697
        %v1700 = vmul.f32 %v1692, %v1697
        %v1702 = vlaneseq
        %v1703 = vshrl.u32 %v1702, 7
        %v1704 = vsub.s32 0, %v1703
        %v1705 = vrot.slane %v1670, %v1704
        %v1707 = vadd.f32 %v1699, %v1705
        %v1708 = vadd.f32 %v1700, %v1705
        %v1709 = vpack.c.bf16 %v1708, %v1707
        %v1710 = vld [vmem:[#allocation16] sm:$0xff]
        %v1711 = vld [vmem:[#allocation16 + $0x8] sm:$0xff]
        %v1712 = vld [vmem:[#allocation16 + $0x10] sm:$0xff]
        %v1713 = vld [vmem:[#allocation16 + $0x18] sm:$0xff]
        %v1714 = vld [vmem:[#allocation16 + $0x20] sm:$0xff]
        %v1715 = vld [vmem:[#allocation16 + $0x28] sm:$0xff]
        %v1716 = vld [vmem:[#allocation16 + $0x30] sm:$0xff]
        %v1717 = vld [vmem:[#allocation16 + $0x38] sm:$0xff]
        %v1718 = vld [vmem:[#allocation16 + $0x40] sm:$0xff]
        %v1719 = vld [vmem:[#allocation16 + $0x48] sm:$0xff]
        %v1720 = vld [vmem:[#allocation16 + $0x50] sm:$0xff]
        %v1721 = vld [vmem:[#allocation16 + $0x58] sm:$0xff]
        %v1722 = vld [vmem:[#allocation16 + $0x60] sm:$0xff]
        %v1723 = vld [vmem:[#allocation16 + $0x68] sm:$0xff]
        %v1724 = vld [vmem:[#allocation16 + $0x70] sm:$0xff]
        %v1725 = vld [vmem:[#allocation16 + $0x78] sm:$0xff]
        %v1726 = vld [vmem:[#allocation16 + $0x80] sm:$0xff]
        %v1727 = vld [vmem:[#allocation16 + $0x88] sm:$0xff]
        %v1728 = vld [vmem:[#allocation16 + $0x90] sm:$0xff]
        %v1729 = vld [vmem:[#allocation16 + $0x98] sm:$0xff]
        %v1730 = vld [vmem:[#allocation16 + $0xa0] sm:$0xff]
        %v1731 = vld [vmem:[#allocation16 + $0xa8] sm:$0xff]
        %v1732 = vld [vmem:[#allocation16 + $0xb0] sm:$0xff]
        %v1733 = vld [vmem:[#allocation16 + $0xb8] sm:$0xff]
        %v1734 = vld [vmem:[#allocation16 + $0xc0] sm:$0xff]
        %v1735 = vld [vmem:[#allocation16 + $0xc8] sm:$0xff]
        %v1736 = vld [vmem:[#allocation16 + $0xd0] sm:$0xff]
        %v1737 = vld [vmem:[#allocation16 + $0xd8] sm:$0xff]
        %v1738 = vld [vmem:[#allocation16 + $0xe0] sm:$0xff]
        %v1739 = vld [vmem:[#allocation16 + $0xe8] sm:$0xff]
        %v1740 = vld [vmem:[#allocation16 + $0xf0] sm:$0xff]
        %v1741 = vld [vmem:[#allocation16 + $0xf8] sm:$0xff]
        %v1742 = vld [vmem:[%s14] sm:$0xf]
        %v1744 = vlaneseq
        %v1745 = vshrl.u32 %v1744, 7
        %v1746 = vsub.s32 0, %v1745
        %v1747 = vrot.slane %v1742, %v1746
        %v1748 = vlaneseq
        %v1749 = vshrl.u32 %v1748, 7
        %v1750 = vsub.s32 1, %v1749
        %v1751 = vrot.slane %v1742, %v1750
        %v1752 = vlaneseq
        %v1753 = vshrl.u32 %v1752, 7
        %v1754 = vsub.s32 2, %v1753
        %v1755 = vrot.slane %v1742, %v1754
        %v1756 = vlaneseq
        %v1757 = vshrl.u32 %v1756, 7
        %v1758 = vsub.s32 3, %v1757
        %v1759 = vrot.slane %v1742, %v1758
        %v1796 = vunpack.c.l.b16 %v1710
        %v1797 = vunpack.c.h.b16 %v1710
        %v1798 = vunpack.c.l.b16 %v1711
        %v1799 = vunpack.c.h.b16 %v1711
        %v1800 = vunpack.c.l.b16 %v1712
        %v1801 = vunpack.c.h.b16 %v1712
        %v1802 = vunpack.c.l.b16 %v1713
        %v1803 = vunpack.c.h.b16 %v1713
        %v1804 = vunpack.c.l.b16 %v1714
        %v1805 = vunpack.c.h.b16 %v1714
        %v1806 = vunpack.c.l.b16 %v1715
        %v1807 = vunpack.c.h.b16 %v1715
        %v1808 = vunpack.c.l.b16 %v1716
        %v1809 = vunpack.c.h.b16 %v1716
        %v1810 = vunpack.c.l.b16 %v1717
        %v1811 = vunpack.c.h.b16 %v1717
        %v1812 = vunpack.c.l.b16 %v1718
        %v1813 = vunpack.c.h.b16 %v1718
        %v1814 = vunpack.c.l.b16 %v1719
        %v1815 = vunpack.c.h.b16 %v1719
        %v1816 = vunpack.c.l.b16 %v1720
        %v1817 = vunpack.c.h.b16 %v1720
        %v1818 = vunpack.c.l.b16 %v1721
        %v1819 = vunpack.c.h.b16 %v1721
        %v1820 = vunpack.c.l.b16 %v1722
        %v1821 = vunpack.c.h.b16 %v1722
        %v1822 = vunpack.c.l.b16 %v1723
        %v1823 = vunpack.c.h.b16 %v1723
        %v1824 = vunpack.c.l.b16 %v1724
        %v1825 = vunpack.c.h.b16 %v1724
        %v1826 = vunpack.c.l.b16 %v1725
        %v1827 = vunpack.c.h.b16 %v1725
        %v1828 = vunpack.c.l.b16 %v1726
        %v1829 = vunpack.c.h.b16 %v1726
        %v1830 = vunpack.c.l.b16 %v1727
        %v1831 = vunpack.c.h.b16 %v1727
        %v1832 = vunpack.c.l.b16 %v1728
        %v1833 = vunpack.c.h.b16 %v1728
        %v1834 = vunpack.c.l.b16 %v1729
        %v1835 = vunpack.c.h.b16 %v1729
        %v1836 = vunpack.c.l.b16 %v1730
        %v1837 = vunpack.c.h.b16 %v1730
        %v1838 = vunpack.c.l.b16 %v1731
        %v1839 = vunpack.c.h.b16 %v1731
        %v1840 = vunpack.c.l.b16 %v1732
        %v1841 = vunpack.c.h.b16 %v1732
        %v1842 = vunpack.c.l.b16 %v1733
        %v1843 = vunpack.c.h.b16 %v1733
        %v1844 = vunpack.c.l.b16 %v1734
        %v1845 = vunpack.c.h.b16 %v1734
        %v1846 = vunpack.c.l.b16 %v1735
        %v1847 = vunpack.c.h.b16 %v1735
        %v1848 = vunpack.c.l.b16 %v1736
        %v1849 = vunpack.c.h.b16 %v1736
        %v1850 = vunpack.c.l.b16 %v1737
        %v1851 = vunpack.c.h.b16 %v1737
        %v1852 = vunpack.c.l.b16 %v1738
        %v1853 = vunpack.c.h.b16 %v1738
        %v1854 = vunpack.c.l.b16 %v1739
        %v1855 = vunpack.c.h.b16 %v1739
        %v1856 = vunpack.c.l.b16 %v1740
        %v1857 = vunpack.c.h.b16 %v1740
        %v1858 = vunpack.c.l.b16 %v1741
        %v1859 = vunpack.c.h.b16 %v1741
        %v1860 = vpack.c.b16 %v1800, %v1796
        %v1861 = vpack.c.b16 %v1801, %v1797
        %v1862 = vpack.c.b16 %v1802, %v1798
        %v1863 = vpack.c.b16 %v1803, %v1799
        %v1864 = vpack.c.b16 %v1808, %v1804
        %v1865 = vpack.c.b16 %v1809, %v1805
        %v1866 = vpack.c.b16 %v1810, %v1806
        %v1867 = vpack.c.b16 %v1811, %v1807
        %v1868 = vpack.c.b16 %v1816, %v1812
        %v1869 = vpack.c.b16 %v1817, %v1813
        %v1870 = vpack.c.b16 %v1818, %v1814
        %v1871 = vpack.c.b16 %v1819, %v1815
        %v1872 = vpack.c.b16 %v1824, %v1820
        %v1873 = vpack.c.b16 %v1825, %v1821
        %v1874 = vpack.c.b16 %v1826, %v1822
        %v1875 = vpack.c.b16 %v1827, %v1823
        %v1876 = vpack.c.b16 %v1832, %v1828
        %v1877 = vpack.c.b16 %v1833, %v1829
        %v1878 = vpack.c.b16 %v1834, %v1830
        %v1879 = vpack.c.b16 %v1835, %v1831
        %v1880 = vpack.c.b16 %v1840, %v1836
        %v1881 = vpack.c.b16 %v1841, %v1837
        %v1882 = vpack.c.b16 %v1842, %v1838
        %v1883 = vpack.c.b16 %v1843, %v1839
        %v1884 = vpack.c.b16 %v1848, %v1844
        %v1885 = vpack.c.b16 %v1849, %v1845
        %v1886 = vpack.c.b16 %v1850, %v1846
        %v1887 = vpack.c.b16 %v1851, %v1847
        %v1888 = vpack.c.b16 %v1856, %v1852
        %v1889 = vpack.c.b16 %v1857, %v1853
        %v1890 = vpack.c.b16 %v1858, %v1854
        %v1891 = vpack.c.b16 %v1859, %v1855
        %1924 = vmatprep.subr.bf16.mxu0 %v1861
        %1925 = vmatpush1.bf16.msra.mxu0 %v1860
        %1926 = vmatprep.subr.bf16.mxu0 %v1865
        %1927 = vmatpush1.bf16.msra.mxu0 %v1864
        %1928 = vmatprep.subr.bf16.mxu0 %v1869
        %1929 = vmatpush1.bf16.msra.mxu0 %v1868
        %1930 = vmatprep.subr.bf16.mxu0 %v1873
        %1931 = vmatpush1.bf16.msra.mxu0 %v1872
        %1932 = vmatprep.subr.bf16.mxu0 %v1877
        %1933 = vmatpush1.bf16.msra.mxu0 %v1876
        %1934 = vmatprep.subr.bf16.mxu0 %v1881
        %1935 = vmatpush1.bf16.msra.mxu0 %v1880
        %1936 = vmatprep.subr.bf16.mxu0 %v1885
        %1937 = vmatpush1.bf16.msra.mxu0 %v1884
        %1938 = vmatprep.subr.bf16.mxu0 %v1889
        %1939 = vmatpush1.bf16.msra.mxu0 %v1888
        %1940 = vmatprep.subr.bf16.mxu0 0
        %1941 = vmatpush1.bf16.msra.mxu0 0
        %1942 = vmatprep.subr.bf16.mxu0 0
        %1943 = vmatpush1.bf16.msra.mxu0 0
        %1944 = vmatprep.subr.bf16.mxu0 0
        %1945 = vmatpush1.bf16.msra.mxu0 0
        %1946 = vmatprep.subr.bf16.mxu0 0
        %1947 = vmatpush1.bf16.msra.mxu0 0
        %1948 = vmatprep.subr.bf16.mxu0 0
        %1949 = vmatpush1.bf16.msra.mxu0 0
        %1950 = vmatprep.subr.bf16.mxu0 0
        %1951 = vmatpush1.bf16.msra.mxu0 0
        %1952 = vmatprep.subr.bf16.mxu0 0
        %1953 = vmatpush1.bf16.msra.mxu0 0
        %1954 = vmatprep.subr.bf16.mxu0 0
        %1955 = vmatpush1.bf16.msra.mxu0 0
        %1956 = vmatprep.mubr.bf16.mxu0 0
        %1957 = vmatmul.mubr.bf16.gmra.mrb[0].mxu0 %v1709
        %v1958 = vpop.f32.mrb[0].mxu0
        %v1959 = vadd.f32 %v1747, %v1958
        %v1960 = vpop.f32.mrb[0].mxu0
        %v1961 = vadd.f32 %v1751, %v1960
        %v1962 = vpop.f32.mrb[0].mxu0
        %v1963 = vadd.f32 %v1747, %v1962
        %v1964 = vpop.f32.mrb[0].mxu0
        %v1965 = vadd.f32 %v1751, %v1964
        %1966 = vdwg.mxu0
        %1967 = vmatprep.subr.bf16.mxu0 %v1863
        %1968 = vmatpush1.bf16.msra.mxu0 %v1862
        %1969 = vmatprep.subr.bf16.mxu0 %v1867
        %1970 = vmatpush1.bf16.msra.mxu0 %v1866
        %1971 = vmatprep.subr.bf16.mxu0 %v1871
        %1972 = vmatpush1.bf16.msra.mxu0 %v1870
        %1973 = vmatprep.subr.bf16.mxu0 %v1875
        %1974 = vmatpush1.bf16.msra.mxu0 %v1874
        %1975 = vmatprep.subr.bf16.mxu0 %v1879
        %1976 = vmatpush1.bf16.msra.mxu0 %v1878
        %1977 = vmatprep.subr.bf16.mxu0 %v1883
        %1978 = vmatpush1.bf16.msra.mxu0 %v1882
        %1979 = vmatprep.subr.bf16.mxu0 %v1887
        %1980 = vmatpush1.bf16.msra.mxu0 %v1886
        %1981 = vmatprep.subr.bf16.mxu0 %v1891
        %1982 = vmatpush1.bf16.msra.mxu0 %v1890
        %1983 = vmatprep.subr.bf16.mxu0 0
        %1984 = vmatpush1.bf16.msra.mxu0 0
        %1985 = vmatprep.subr.bf16.mxu0 0
        %1986 = vmatpush1.bf16.msra.mxu0 0
        %1987 = vmatprep.subr.bf16.mxu0 0
        %1988 = vmatpush1.bf16.msra.mxu0 0
        %1989 = vmatprep.subr.bf16.mxu0 0
        %1990 = vmatpush1.bf16.msra.mxu0 0
        %1991 = vmatprep.subr.bf16.mxu0 0
        %1992 = vmatpush1.bf16.msra.mxu0 0
        %1993 = vmatprep.subr.bf16.mxu0 0
        %1994 = vmatpush1.bf16.msra.mxu0 0
        %1995 = vmatprep.subr.bf16.mxu0 0
        %1996 = vmatpush1.bf16.msra.mxu0 0
        %1997 = vmatprep.subr.bf16.mxu0 0
        %1998 = vmatpush1.bf16.msra.mxu0 0
        %1999 = vmatprep.mubr.bf16.mxu0 0
        %2000 = vmatmul.mubr.bf16.gmra.mrb[0].mxu0 %v1709
        %v2001 = vpop.f32.mrb[0].mxu0
        %v2002 = vadd.f32 %v1755, %v2001
        %v2003 = vpop.f32.mrb[0].mxu0
        %v2004 = vadd.f32 %v1759, %v2003
        %v2005 = vpop.f32.mrb[0].mxu0
        %v2006 = vadd.f32 %v1755, %v2005
        %v2007 = vpop.f32.mrb[0].mxu0
        %v2008 = vadd.f32 %v1759, %v2007
        %2009 = vdwg.mxu0
        %v2010 = vmul.f32 %v1959, %v1959
        %v2011 = vmul.f32 %v1961, %v1961
        %v2012 = vmul.f32 %v2002, %v2002
        %v2013 = vmul.f32 %v2004, %v2004
        %v2014 = vmul.f32 %v1963, %v1963
        %v2015 = vmul.f32 %v1965, %v1965
        %v2016 = vmul.f32 %v2006, %v2006
        %v2017 = vmul.f32 %v2008, %v2008
        %v2018 = vmul.f32 %v1959, %v2010
        %v2019 = vmul.f32 %v1961, %v2011
        %v2020 = vmul.f32 %v2002, %v2012
        %v2021 = vmul.f32 %v2004, %v2013
        %v2022 = vmul.f32 %v1963, %v2014
        %v2023 = vmul.f32 %v1965, %v2015
        %v2024 = vmul.f32 %v2006, %v2016
        %v2025 = vmul.f32 %v2008, %v2017
        %v2026 = vmul.f32 %v2018, 0.044715
        %v2027 = vmul.f32 %v2019, 0.044715
        %v2028 = vmul.f32 %v2020, 0.044715
        %v2029 = vmul.f32 %v2021, 0.044715
        %v2030 = vmul.f32 %v2022, 0.044715
        %v2031 = vmul.f32 %v2023, 0.044715
        %v2032 = vmul.f32 %v2024, 0.044715
        %v2033 = vmul.f32 %v2025, 0.044715
        %v2034 = vadd.f32 %v1959, %v2026
        %v2035 = vadd.f32 %v1961, %v2027
        %v2036 = vadd.f32 %v2002, %v2028
        %v2037 = vadd.f32 %v2004, %v2029
        %v2038 = vadd.f32 %v1963, %v2030
        %v2039 = vadd.f32 %v1965, %v2031
        %v2040 = vadd.f32 %v2006, %v2032
        %v2041 = vadd.f32 %v2008, %v2033
        %v2042 = vmul.f32 %v2034, 0.7978846
        %v2043 = vmul.f32 %v2035, 0.7978846
        %v2044 = vmul.f32 %v2036, 0.7978846
        %v2045 = vmul.f32 %v2037, 0.7978846
        %v2046 = vmul.f32 %v2038, 0.7978846
        %v2047 = vmul.f32 %v2039, 0.7978846
        %v2048 = vmul.f32 %v2040, 0.7978846
        %v2049 = vmul.f32 %v2041, 0.7978846
        %v2050 = vtanh.pop %v2042
        %v2051 = vtanh.pop %v2043
        %v2052 = vtanh.pop %v2044
        %v2053 = vtanh.pop %v2045
        %v2054 = vtanh.pop %v2046
        %v2055 = vtanh.pop %v2047
        %v2056 = vtanh.pop %v2048
        %v2057 = vtanh.pop %v2049
        %v2058 = vadd.f32 %v2050, 1.0
        %v2059 = vadd.f32 %v2051, 1.0
        %v2060 = vadd.f32 %v2052, 1.0
        %v2061 = vadd.f32 %v2053, 1.0
        %v2062 = vadd.f32 %v2054, 1.0
        %v2063 = vadd.f32 %v2055, 1.0
        %v2064 = vadd.f32 %v2056, 1.0
        %v2065 = vadd.f32 %v2057, 1.0
        %v2066 = vmul.f32 %v2058, 0.5
        %v2067 = vmul.f32 %v2059, 0.5
        %v2068 = vmul.f32 %v2060, 0.5
        %v2069 = vmul.f32 %v2061, 0.5
        %v2070 = vmul.f32 %v2062, 0.5
        %v2071 = vmul.f32 %v2063, 0.5
        %v2072 = vmul.f32 %v2064, 0.5
        %v2073 = vmul.f32 %v2065, 0.5
        %v2074 = vmul.f32 %v1959, %v2066
        %v2075 = vmul.f32 %v1961, %v2067
        %v2076 = vmul.f32 %v2002, %v2068
        %v2077 = vmul.f32 %v2004, %v2069
        %v2078 = vmul.f32 %v1963, %v2070
        %v2079 = vmul.f32 %v1965, %v2071
        %v2080 = vmul.f32 %v2006, %v2072
        %v2081 = vmul.f32 %v2008, %v2073
        %v2082 = vpack.c.bf16 %v2078, %v2074
        %v2083 = vpack.c.bf16 %v2079, %v2075
        %v2084 = vpack.c.bf16 %v2080, %v2076
        %v2085 = vpack.c.bf16 %v2081, %v2077
        %v2086 = vld [vmem:[#allocation17] sm:$0xf]
        %v2087 = vld [vmem:[#allocation17 + $0x4] sm:$0xf]
        %v2088 = vld [vmem:[#allocation17 + $0x8] sm:$0xf]
        %v2089 = vld [vmem:[#allocation17 + $0xc] sm:$0xf]
        %v2090 = vld [vmem:[#allocation17 + $0x10] sm:$0xf]
        %v2091 = vld [vmem:[#allocation17 + $0x14] sm:$0xf]
        %v2092 = vld [vmem:[#allocation17 + $0x18] sm:$0xf]
        %v2093 = vld [vmem:[#allocation17 + $0x1c] sm:$0xf]
        %v2094 = vld [vmem:[#allocation17 + $0x20] sm:$0xf]
        %v2095 = vld [vmem:[#allocation17 + $0x24] sm:$0xf]
        %v2096 = vld [vmem:[#allocation17 + $0x28] sm:$0xf]
        %v2097 = vld [vmem:[#allocation17 + $0x2c] sm:$0xf]
        %v2098 = vld [vmem:[#allocation17 + $0x30] sm:$0xf]
        %v2099 = vld [vmem:[#allocation17 + $0x34] sm:$0xf]
        %v2100 = vld [vmem:[#allocation17 + $0x38] sm:$0xf]
        %v2101 = vld [vmem:[#allocation17 + $0x3c] sm:$0xf]
        %v2102 = vld [vmem:[#allocation17 + $0x40] sm:$0xf]
        %v2103 = vld [vmem:[#allocation17 + $0x44] sm:$0xf]
        %v2104 = vld [vmem:[#allocation17 + $0x48] sm:$0xf]
        %v2105 = vld [vmem:[#allocation17 + $0x4c] sm:$0xf]
        %v2106 = vld [vmem:[#allocation17 + $0x50] sm:$0xf]
        %v2107 = vld [vmem:[#allocation17 + $0x54] sm:$0xf]
        %v2108 = vld [vmem:[#allocation17 + $0x58] sm:$0xf]
        %v2109 = vld [vmem:[#allocation17 + $0x5c] sm:$0xf]
        %v2110 = vld [vmem:[#allocation17 + $0x60] sm:$0xf]
        %v2111 = vld [vmem:[#allocation17 + $0x64] sm:$0xf]
        %v2112 = vld [vmem:[#allocation17 + $0x68] sm:$0xf]
        %v2113 = vld [vmem:[#allocation17 + $0x6c] sm:$0xf]
        %v2114 = vld [vmem:[#allocation17 + $0x70] sm:$0xf]
        %v2115 = vld [vmem:[#allocation17 + $0x74] sm:$0xf]
        %v2116 = vld [vmem:[#allocation17 + $0x78] sm:$0xf]
        %v2117 = vld [vmem:[#allocation17 + $0x7c] sm:$0xf]
        %v2118 = vld [vmem:[#allocation17 + $0x80] sm:$0xf]
        %v2119 = vld [vmem:[#allocation17 + $0x84] sm:$0xf]
        %v2120 = vld [vmem:[#allocation17 + $0x88] sm:$0xf]
        %v2121 = vld [vmem:[#allocation17 + $0x8c] sm:$0xf]
        %v2122 = vld [vmem:[#allocation17 + $0x90] sm:$0xf]
        %v2123 = vld [vmem:[#allocation17 + $0x94] sm:$0xf]
        %v2124 = vld [vmem:[#allocation17 + $0x98] sm:$0xf]
        %v2125 = vld [vmem:[#allocation17 + $0x9c] sm:$0xf]
        %v2126 = vld [vmem:[#allocation17 + $0xa0] sm:$0xf]
        %v2127 = vld [vmem:[#allocation17 + $0xa4] sm:$0xf]
        %v2128 = vld [vmem:[#allocation17 + $0xa8] sm:$0xf]
        %v2129 = vld [vmem:[#allocation17 + $0xac] sm:$0xf]
        %v2130 = vld [vmem:[#allocation17 + $0xb0] sm:$0xf]
        %v2131 = vld [vmem:[#allocation17 + $0xb4] sm:$0xf]
        %v2132 = vld [vmem:[#allocation17 + $0xb8] sm:$0xf]
        %v2133 = vld [vmem:[#allocation17 + $0xbc] sm:$0xf]
        %v2134 = vld [vmem:[#allocation17 + $0xc0] sm:$0xf]
        %v2135 = vld [vmem:[#allocation17 + $0xc4] sm:$0xf]
        %v2136 = vld [vmem:[#allocation17 + $0xc8] sm:$0xf]
        %v2137 = vld [vmem:[#allocation17 + $0xcc] sm:$0xf]
        %v2138 = vld [vmem:[#allocation17 + $0xd0] sm:$0xf]
        %v2139 = vld [vmem:[#allocation17 + $0xd4] sm:$0xf]
        %v2140 = vld [vmem:[#allocation17 + $0xd8] sm:$0xf]
        %v2141 = vld [vmem:[#allocation17 + $0xdc] sm:$0xf]
        %v2142 = vld [vmem:[#allocation17 + $0xe0] sm:$0xf]
        %v2143 = vld [vmem:[#allocation17 + $0xe4] sm:$0xf]
        %v2144 = vld [vmem:[#allocation17 + $0xe8] sm:$0xf]
        %v2145 = vld [vmem:[#allocation17 + $0xec] sm:$0xf]
        %v2146 = vld [vmem:[#allocation17 + $0xf0] sm:$0xf]
        %v2147 = vld [vmem:[#allocation17 + $0xf4] sm:$0xf]
        %v2148 = vld [vmem:[#allocation17 + $0xf8] sm:$0xf]
        %v2149 = vld [vmem:[#allocation17 + $0xfc] sm:$0xf]
        %v2150 = vld [vmem:[%s16] sm:$0x1]
        %v2152 = vlaneseq
        %v2153 = vshrl.u32 %v2152, 7
        %v2154 = vsub.s32 0, %v2153
        %v2155 = vrot.slane %v2150, %v2154
        %v2221 = vunpack.c.l.b16 %v2086
        %v2222 = vunpack.c.l.b16 %v2087
        %v2223 = vunpack.c.l.b16 %v2088
        %v2224 = vunpack.c.l.b16 %v2089
        %v2225 = vunpack.c.l.b16 %v2090
        %v2226 = vunpack.c.l.b16 %v2091
        %v2227 = vunpack.c.l.b16 %v2092
        %v2228 = vunpack.c.l.b16 %v2093
        %v2229 = vunpack.c.l.b16 %v2094
        %v2230 = vunpack.c.l.b16 %v2095
        %v2231 = vunpack.c.l.b16 %v2096
        %v2232 = vunpack.c.l.b16 %v2097
        %v2233 = vunpack.c.l.b16 %v2098
        %v2234 = vunpack.c.l.b16 %v2099
        %v2235 = vunpack.c.l.b16 %v2100
        %v2236 = vunpack.c.l.b16 %v2101
        %v2237 = vunpack.c.l.b16 %v2102
        %v2238 = vunpack.c.l.b16 %v2103
        %v2239 = vunpack.c.l.b16 %v2104
        %v2240 = vunpack.c.l.b16 %v2105
        %v2241 = vunpack.c.l.b16 %v2106
        %v2242 = vunpack.c.l.b16 %v2107
        %v2243 = vunpack.c.l.b16 %v2108
        %v2244 = vunpack.c.l.b16 %v2109
        %v2245 = vunpack.c.l.b16 %v2110
        %v2246 = vunpack.c.l.b16 %v2111
        %v2247 = vunpack.c.l.b16 %v2112
        %v2248 = vunpack.c.l.b16 %v2113
        %v2249 = vunpack.c.l.b16 %v2114
        %v2250 = vunpack.c.l.b16 %v2115
        %v2251 = vunpack.c.l.b16 %v2116
        %v2252 = vunpack.c.l.b16 %v2117
        %v2253 = vunpack.c.l.b16 %v2118
        %v2254 = vunpack.c.l.b16 %v2119
        %v2255 = vunpack.c.l.b16 %v2120
        %v2256 = vunpack.c.l.b16 %v2121
        %v2257 = vunpack.c.l.b16 %v2122
        %v2258 = vunpack.c.l.b16 %v2123
        %v2259 = vunpack.c.l.b16 %v2124
        %v2260 = vunpack.c.l.b16 %v2125
        %v2261 = vunpack.c.l.b16 %v2126
        %v2262 = vunpack.c.l.b16 %v2127
        %v2263 = vunpack.c.l.b16 %v2128
        %v2264 = vunpack.c.l.b16 %v2129
        %v2265 = vunpack.c.l.b16 %v2130
        %v2266 = vunpack.c.l.b16 %v2131
        %v2267 = vunpack.c.l.b16 %v2132
        %v2268 = vunpack.c.l.b16 %v2133
        %v2269 = vunpack.c.l.b16 %v2134
        %v2270 = vunpack.c.l.b16 %v2135
        %v2271 = vunpack.c.l.b16 %v2136
        %v2272 = vunpack.c.l.b16 %v2137
        %v2273 = vunpack.c.l.b16 %v2138
        %v2274 = vunpack.c.l.b16 %v2139
        %v2275 = vunpack.c.l.b16 %v2140
        %v2276 = vunpack.c.l.b16 %v2141
        %v2277 = vunpack.c.l.b16 %v2142
        %v2278 = vunpack.c.l.b16 %v2143
        %v2279 = vunpack.c.l.b16 %v2144
        %v2280 = vunpack.c.l.b16 %v2145
        %v2281 = vunpack.c.l.b16 %v2146
        %v2282 = vunpack.c.l.b16 %v2147
        %v2283 = vunpack.c.l.b16 %v2148
        %v2284 = vunpack.c.l.b16 %v2149
        %v2285 = vpack.c.b16 %v2222, %v2221
        %v2286 = vpack.c.b16 %v2224, %v2223
        %v2287 = vpack.c.b16 %v2226, %v2225
        %v2288 = vpack.c.b16 %v2228, %v2227
        %v2289 = vpack.c.b16 %v2230, %v2229
        %v2290 = vpack.c.b16 %v2232, %v2231
        %v2291 = vpack.c.b16 %v2234, %v2233
        %v2292 = vpack.c.b16 %v2236, %v2235
        %v2293 = vpack.c.b16 %v2238, %v2237
        %v2294 = vpack.c.b16 %v2240, %v2239
        %v2295 = vpack.c.b16 %v2242, %v2241
        %v2296 = vpack.c.b16 %v2244, %v2243
        %v2297 = vpack.c.b16 %v2246, %v2245
        %v2298 = vpack.c.b16 %v2248, %v2247
        %v2299 = vpack.c.b16 %v2250, %v2249
        %v2300 = vpack.c.b16 %v2252, %v2251
        %v2301 = vpack.c.b16 %v2254, %v2253
        %v2302 = vpack.c.b16 %v2256, %v2255
        %v2303 = vpack.c.b16 %v2258, %v2257
        %v2304 = vpack.c.b16 %v2260, %v2259
        %v2305 = vpack.c.b16 %v2262, %v2261
        %v2306 = vpack.c.b16 %v2264, %v2263
        %v2307 = vpack.c.b16 %v2266, %v2265
        %v2308 = vpack.c.b16 %v2268, %v2267
        %v2309 = vpack.c.b16 %v2270, %v2269
        %v2310 = vpack.c.b16 %v2272, %v2271
        %v2311 = vpack.c.b16 %v2274, %v2273
        %v2312 = vpack.c.b16 %v2276, %v2275
        %v2313 = vpack.c.b16 %v2278, %v2277
        %v2314 = vpack.c.b16 %v2280, %v2279
        %v2315 = vpack.c.b16 %v2282, %v2281
        %v2316 = vpack.c.b16 %v2284, %v2283
        %2349 = vmatprep.subr.bf16.mxu0 0
        %2350 = vmatpush1.bf16.msra.mxu0 %v2285
        %2351 = vmatprep.subr.bf16.mxu0 0
        %2352 = vmatpush1.bf16.msra.mxu0 %v2286
        %2353 = vmatprep.subr.bf16.mxu0 0
        %2354 = vmatpush1.bf16.msra.mxu0 %v2287
        %2355 = vmatprep.subr.bf16.mxu0 0
        %2356 = vmatpush1.bf16.msra.mxu0 %v2288
        %2357 = vmatprep.subr.bf16.mxu0 0
        %2358 = vmatpush1.bf16.msra.mxu0 %v2289
        %2359 = vmatprep.subr.bf16.mxu0 0
        %2360 = vmatpush1.bf16.msra.mxu0 %v2290
        %2361 = vmatprep.subr.bf16.mxu0 0
        %2362 = vmatpush1.bf16.msra.mxu0 %v2291
        %2363 = vmatprep.subr.bf16.mxu0 0
        %2364 = vmatpush1.bf16.msra.mxu0 %v2292
        %2365 = vmatprep.subr.bf16.mxu0 0
        %2366 = vmatpush1.bf16.msra.mxu0 %v2293
        %2367 = vmatprep.subr.bf16.mxu0 0
        %2368 = vmatpush1.bf16.msra.mxu0 %v2294
        %2369 = vmatprep.subr.bf16.mxu0 0
        %2370 = vmatpush1.bf16.msra.mxu0 %v2295
        %2371 = vmatprep.subr.bf16.mxu0 0
        %2372 = vmatpush1.bf16.msra.mxu0 %v2296
        %2373 = vmatprep.subr.bf16.mxu0 0
        %2374 = vmatpush1.bf16.msra.mxu0 %v2297
        %2375 = vmatprep.subr.bf16.mxu0 0
        %2376 = vmatpush1.bf16.msra.mxu0 %v2298
        %2377 = vmatprep.subr.bf16.mxu0 0
        %2378 = vmatpush1.bf16.msra.mxu0 %v2299
        %2379 = vmatprep.subr.bf16.mxu0 0
        %2380 = vmatpush1.bf16.msra.mxu0 %v2300
        %2381 = vmatprep.mubr.bf16.mxu0 %v2083
        %2382 = vmatmul.mubr.bf16.gmra.mrb[0].mxu0 %v2082
        %v2383 = vpop.f32.mrb[0].mxu0
        %v2384 = vadd.f32 %v2155, %v2383
        %v2385 = vpop.f32.mrb[0].mxu0
        %v2386 = vpop.f32.mrb[0].mxu0
        %v2387 = vadd.f32 %v2155, %v2386
        %v2388 = vpop.f32.mrb[0].mxu0
        %2389 = vdwg.mxu0
        %2390 = vmatprep.subr.bf16.mxu0 0
        %2391 = vmatpush1.bf16.msra.mxu0 %v2301
        %2392 = vmatprep.subr.bf16.mxu0 0
        %2393 = vmatpush1.bf16.msra.mxu0 %v2302
        %2394 = vmatprep.subr.bf16.mxu0 0
        %2395 = vmatpush1.bf16.msra.mxu0 %v2303
        %2396 = vmatprep.subr.bf16.mxu0 0
        %2397 = vmatpush1.bf16.msra.mxu0 %v2304
        %2398 = vmatprep.subr.bf16.mxu0 0
        %2399 = vmatpush1.bf16.msra.mxu0 %v2305
        %2400 = vmatprep.subr.bf16.mxu0 0
        %2401 = vmatpush1.bf16.msra.mxu0 %v2306
        %2402 = vmatprep.subr.bf16.mxu0 0
        %2403 = vmatpush1.bf16.msra.mxu0 %v2307
        %2404 = vmatprep.subr.bf16.mxu0 0
        %2405 = vmatpush1.bf16.msra.mxu0 %v2308
        %2406 = vmatprep.subr.bf16.mxu0 0
        %2407 = vmatpush1.bf16.msra.mxu0 %v2309
        %2408 = vmatprep.subr.bf16.mxu0 0
        %2409 = vmatpush1.bf16.msra.mxu0 %v2310
        %2410 = vmatprep.subr.bf16.mxu0 0
        %2411 = vmatpush1.bf16.msra.mxu0 %v2311
        %2412 = vmatprep.subr.bf16.mxu0 0
        %2413 = vmatpush1.bf16.msra.mxu0 %v2312
        %2414 = vmatprep.subr.bf16.mxu0 0
        %2415 = vmatpush1.bf16.msra.mxu0 %v2313
        %2416 = vmatprep.subr.bf16.mxu0 0
        %2417 = vmatpush1.bf16.msra.mxu0 %v2314
        %2418 = vmatprep.subr.bf16.mxu0 0
        %2419 = vmatpush1.bf16.msra.mxu0 %v2315
        %2420 = vmatprep.subr.bf16.mxu0 0
        %2421 = vmatpush1.bf16.msra.mxu0 %v2316
        %2422 = vmatprep.mubr.bf16.mxu0 %v2085
        %2423 = vmatmul.mubr.bf16.gmra.mrb[0].mxu0 %v2084
        %v2424 = vpop.f32.mrb[0].mxu0
        %v2425 = vadd.f32 %v2384, %v2424
        %v2426 = vpop.f32.mrb[0].mxu0
        %v2427 = vpop.f32.mrb[0].mxu0
        %v2428 = vadd.f32 %v2387, %v2427
        %v2429 = vpop.f32.mrb[0].mxu0
        %2430 = vdwg.mxu0
        %v2431 = vadd.f32 %v1667, %v2425
        %v2432 = vadd.f32 %v1668, %v2428
        %s2433 = scalar_lea.vmem [#allocation10], 1
        %v2434 = vld [vmem:[%s2433] sm:$0x1]
        %s2435 = scalar_lea.vmem [#allocation11], 1
        %v2436 = vld [vmem:[%s2435] sm:$0x1]
        %2437 = vadd.xlane.f32.xlu0 %v2431
        %v2438 = vpop.xlane.xlu0 %2437
        %2439 = vadd.xlane.f32.xlu0 %v2432
        %v2440 = vpop.xlane.xlu0 %2439
        %v2441 = vmul.f32 %v2438, %v962
        %v2442 = vmul.f32 %v2440, %v962
        %v2443 = vsub.f32 %v2431, %v2441
        %v2444 = vsub.f32 %v2432, %v2442
        %v2445 = vmul.f32 %v2443, %v2443
        %v2446 = vmul.f32 %v2444, %v2444
        %2447 = vadd.xlane.f32.xlu0 %v2445
        %v2448 = vpop.xlane.xlu0 %2447
        %2449 = vadd.xlane.f32.xlu0 %v2446
        %v2450 = vpop.xlane.xlu0 %2449
        %v2451 = vmul.f32 %v2448, %v962
        %v2452 = vmul.f32 %v2450, %v962
        %v2453 = vadd.f32 %v2451, 1e-05
        %v2454 = vadd.f32 %v2452, 1e-05
        %v2455 = vrsqrt.pop %v2453
        %v2456 = vrsqrt.pop %v2454
        %v2457 = vmul.f32 %v2443, %v2455
        %v2458 = vmul.f32 %v2444, %v2456
        %v2460 = vlaneseq
        %v2461 = vshrl.u32 %v2460, 7
        %v2462 = vsub.s32 0, %v2461
        %v2463 = vrot.slane %v2434, %v2462
        %v2465 = vmul.f32 %v2457, %v2463
        %v2466 = vmul.f32 %v2458, %v2463
        %v2468 = vlaneseq
        %v2469 = vshrl.u32 %v2468, 7
        %v2470 = vsub.s32 0, %v2469
        %v2471 = vrot.slane %v2436, %v2470
        %v2473 = vadd.f32 %v2465, %v2471
        %v2474 = vadd.f32 %v2466, %v2471
        %v2475 = vpack.c.bf16 %v2474, %v2473
        %s2476 = scalar_lea.vmem [#allocation13], 192
        %v2477 = vld [vmem:[%s2476] sm:$0xff]
        %v2478 = vld [vmem:[%s2476 + $0x8] sm:$0xf]
        %v2479 = vld [vmem:[%s2476 + $0xc] sm:$0xff]
        %v2480 = vld [vmem:[%s2476 + $0x14] sm:$0xf]
        %v2481 = vld [vmem:[%s2476 + $0x18] sm:$0xff]
        %v2482 = vld [vmem:[%s2476 + $0x20] sm:$0xf]
        %v2483 = vld [vmem:[%s2476 + $0x24] sm:$0xff]
        %v2484 = vld [vmem:[%s2476 + $0x2c] sm:$0xf]
        %v2485 = vld [vmem:[%s2476 + $0x30] sm:$0xff]
        %v2486 = vld [vmem:[%s2476 + $0x38] sm:$0xf]
        %v2487 = vld [vmem:[%s2476 + $0x3c] sm:$0xff]
        %v2488 = vld [vmem:[%s2476 + $0x44] sm:$0xf]
        %v2489 = vld [vmem:[%s2476 + $0x48] sm:$0xff]
        %v2490 = vld [vmem:[%s2476 + $0x50] sm:$0xf]
        %v2491 = vld [vmem:[%s2476 + $0x54] sm:$0xff]
        %v2492 = vld [vmem:[%s2476 + $0x5c] sm:$0xf]
        %v2493 = vld [vmem:[%s2476 + $0x60] sm:$0xff]
        %v2494 = vld [vmem:[%s2476 + $0x68] sm:$0xf]
        %v2495 = vld [vmem:[%s2476 + $0x6c] sm:$0xff]
        %v2496 = vld [vmem:[%s2476 + $0x74] sm:$0xf]
        %v2497 = vld [vmem:[%s2476 + $0x78] sm:$0xff]
        %v2498 = vld [vmem:[%s2476 + $0x80] sm:$0xf]
        %v2499 = vld [vmem:[%s2476 + $0x84] sm:$0xff]
        %v2500 = vld [vmem:[%s2476 + $0x8c] sm:$0xf]
        %v2501 = vld [vmem:[%s2476 + $0x90] sm:$0xff]
        %v2502 = vld [vmem:[%s2476 + $0x98] sm:$0xf]
        %v2503 = vld [vmem:[%s2476 + $0x9c] sm:$0xff]
        %v2504 = vld [vmem:[%s2476 + $0xa4] sm:$0xf]
        %v2505 = vld [vmem:[%s2476 + $0xa8] sm:$0xff]
        %v2506 = vld [vmem:[%s2476 + $0xb0] sm:$0xf]
        %v2507 = vld [vmem:[%s2476 + $0xb4] sm:$0xff]
        %v2508 = vld [vmem:[%s2476 + $0xbc] sm:$0xf]
        %s2509 = scalar_lea.vmem %s8, 3
        %v2510 = vld [vmem:[%s2509] sm:$0x7]
        %v2512 = vlaneseq
        %v2513 = vshrl.u32 %v2512, 7
        %v2514 = vsub.s32 0, %v2513
        %v2515 = vrot.slane %v2510, %v2514
        %v2516 = vlaneseq
        %v2517 = vshrl.u32 %v2516, 7
        %v2518 = vsub.s32 1, %v2517
        %v2519 = vrot.slane %v2510, %v2518
        %v2520 = vlaneseq
        %v2521 = vshrl.u32 %v2520, 7
        %v2522 = vsub.s32 2, %v2521
        %v2523 = vrot.slane %v2510, %v2522
        %v2559 = vunpack.c.l.b16 %v2477
        %v2560 = vunpack.c.h.b16 %v2477
        %v2561 = vunpack.c.l.b16 %v2478
        %v2562 = vunpack.c.l.b16 %v2479
        %v2563 = vunpack.c.h.b16 %v2479
        %v2564 = vunpack.c.l.b16 %v2480
        %v2565 = vunpack.c.l.b16 %v2481
        %v2566 = vunpack.c.h.b16 %v2481
        %v2567 = vunpack.c.l.b16 %v2482
        %v2568 = vunpack.c.l.b16 %v2483
        %v2569 = vunpack.c.h.b16 %v2483
        %v2570 = vunpack.c.l.b16 %v2484
        %v2571 = vunpack.c.l.b16 %v2485
        %v2572 = vunpack.c.h.b16 %v2485
        %v2573 = vunpack.c.l.b16 %v2486
        %v2574 = vunpack.c.l.b16 %v2487
        %v2575 = vunpack.c.h.b16 %v2487
        %v2576 = vunpack.c.l.b16 %v2488
        %v2577 = vunpack.c.l.b16 %v2489
        %v2578 = vunpack.c.h.b16 %v2489
        %v2579 = vunpack.c.l.b16 %v2490
        %v2580 = vunpack.c.l.b16 %v2491
        %v2581 = vunpack.c.h.b16 %v2491
        %v2582 = vunpack.c.l.b16 %v2492
        %v2583 = vunpack.c.l.b16 %v2493
        %v2584 = vunpack.c.h.b16 %v2493
        %v2585 = vunpack.c.l.b16 %v2494
        %v2586 = vunpack.c.l.b16 %v2495
        %v2587 = vunpack.c.h.b16 %v2495
        %v2588 = vunpack.c.l.b16 %v2496
        %v2589 = vunpack.c.l.b16 %v2497
        %v2590 = vunpack.c.h.b16 %v2497
        %v2591 = vunpack.c.l.b16 %v2498
        %v2592 = vunpack.c.l.b16 %v2499
        %v2593 = vunpack.c.h.b16 %v2499
        %v2594 = vunpack.c.l.b16 %v2500
        %v2595 = vunpack.c.l.b16 %v2501
        %v2596 = vunpack.c.h.b16 %v2501
        %v2597 = vunpack.c.l.b16 %v2502
        %v2598 = vunpack.c.l.b16 %v2503
        %v2599 = vunpack.c.h.b16 %v2503
        %v2600 = vunpack.c.l.b16 %v2504
        %v2601 = vunpack.c.l.b16 %v2505
        %v2602 = vunpack.c.h.b16 %v2505
        %v2603 = vunpack.c.l.b16 %v2506
        %v2604 = vunpack.c.l.b16 %v2507
        %v2605 = vunpack.c.h.b16 %v2507
        %v2606 = vunpack.c.l.b16 %v2508
        %v2607 = vpack.c.b16 %v2562, %v2559
        %v2608 = vpack.c.b16 %v2563, %v2560
        %v2609 = vpack.c.b16 %v2564, %v2561
        %v2610 = vpack.c.b16 %v2568, %v2565
        %v2611 = vpack.c.b16 %v2569, %v2566
        %v2612 = vpack.c.b16 %v2570, %v2567
        %v2613 = vpack.c.b16 %v2574, %v2571
        %v2614 = vpack.c.b16 %v2575, %v2572
        %v2615 = vpack.c.b16 %v2576, %v2573
        %v2616 = vpack.c.b16 %v2580, %v2577
        %v2617 = vpack.c.b16 %v2581, %v2578
        %v2618 = vpack.c.b16 %v2582, %v2579
        %v2619 = vpack.c.b16 %v2586, %v2583
        %v2620 = vpack.c.b16 %v2587, %v2584
        %v2621 = vpack.c.b16 %v2588, %v2585
        %v2622 = vpack.c.b16 %v2592, %v2589
        %v2623 = vpack.c.b16 %v2593, %v2590
        %v2624 = vpack.c.b16 %v2594, %v2591
        %v2625 = vpack.c.b16 %v2598, %v2595
        %v2626 = vpack.c.b16 %v2599, %v2596
        %v2627 = vpack.c.b16 %v2600, %v2597
        %v2628 = vpack.c.b16 %v2604, %v2601
        %v2629 = vpack.c.b16 %v2605, %v2602
        %v2630 = vpack.c.b16 %v2606, %v2603
        %2655 = vmatprep.subr.bf16.mxu0 %v2608
        %2656 = vmatpush1.bf16.msra.mxu0 %v2607
        %2657 = vmatprep.subr.bf16.mxu0 %v2611
        %2658 = vmatpush1.bf16.msra.mxu0 %v2610
        %2659 = vmatprep.subr.bf16.mxu0 %v2614
        %2660 = vmatpush1.bf16.msra.mxu0 %v2613
        %2661 = vmatprep.subr.bf16.mxu0 %v2617
        %2662 = vmatpush1.bf16.msra.mxu0 %v2616
        %2663 = vmatprep.subr.bf16.mxu0 %v2620
        %2664 = vmatpush1.bf16.msra.mxu0 %v2619
        %2665 = vmatprep.subr.bf16.mxu0 %v2623
        %2666 = vmatpush1.bf16.msra.mxu0 %v2622
        %2667 = vmatprep.subr.bf16.mxu0 %v2626
        %2668 = vmatpush1.bf16.msra.mxu0 %v2625
        %2669 = vmatprep.subr.bf16.mxu0 %v2629
        %2670 = vmatpush1.bf16.msra.mxu0 %v2628
        %2671 = vmatprep.subr.bf16.mxu0 0
        %2672 = vmatpush1.bf16.msra.mxu0 0
        %2673 = vmatprep.subr.bf16.mxu0 0
        %2674 = vmatpush1.bf16.msra.mxu0 0
        %2675 = vmatprep.subr.bf16.mxu0 0
        %2676 = vmatpush1.bf16.msra.mxu0 0
        %2677 = vmatprep.subr.bf16.mxu0 0
        %2678 = vmatpush1.bf16.msra.mxu0 0
        %2679 = vmatprep.subr.bf16.mxu0 0
        %2680 = vmatpush1.bf16.msra.mxu0 0
        %2681 = vmatprep.subr.bf16.mxu0 0
        %2682 = vmatpush1.bf16.msra.mxu0 0
        %2683 = vmatprep.subr.bf16.mxu0 0
        %2684 = vmatpush1.bf16.msra.mxu0 0
        %2685 = vmatprep.subr.bf16.mxu0 0
        %2686 = vmatpush1.bf16.msra.mxu0 0
        %2687 = vmatprep.mubr.bf16.mxu0 0
        %2688 = vmatmul.mubr.bf16.gmra.mrb[0].mxu0 %v2475
        %v2689 = vpop.f32.mrb[0].mxu0
        %v2690 = vadd.f32 %v2515, %v2689
        %v2691 = vpop.f32.mrb[0].mxu0
        %v2692 = vadd.f32 %v2519, %v2691
        %v2693 = vpop.f32.mrb[0].mxu0
        %v2694 = vadd.f32 %v2515, %v2693
        %v2695 = vpop.f32.mrb[0].mxu0
        %v2696 = vadd.f32 %v2519, %v2695
        %2697 = vdwg.mxu0
        %2698 = vmatprep.subr.bf16.mxu0 0
        %2699 = vmatpush1.bf16.msra.mxu0 %v2609
        %2700 = vmatprep.subr.bf16.mxu0 0
        %2701 = vmatpush1.bf16.msra.mxu0 %v2612
        %2702 = vmatprep.subr.bf16.mxu0 0
        %2703 = vmatpush1.bf16.msra.mxu0 %v2615
        %2704 = vmatprep.subr.bf16.mxu0 0
        %2705 = vmatpush1.bf16.msra.mxu0 %v2618
        %2706 = vmatprep.subr.bf16.mxu0 0
        %2707 = vmatpush1.bf16.msra.mxu0 %v2621
        %2708 = vmatprep.subr.bf16.mxu0 0
        %2709 = vmatpush1.bf16.msra.mxu0 %v2624
        %2710 = vmatprep.subr.bf16.mxu0 0
        %2711 = vmatpush1.bf16.msra.mxu0 %v2627
        %2712 = vmatprep.subr.bf16.mxu0 0
        %2713 = vmatpush1.bf16.msra.mxu0 %v2630
        %2714 = vmatprep.subr.bf16.mxu0 0
        %2715 = vmatpush1.bf16.msra.mxu0 0
        %2716 = vmatprep.subr.bf16.mxu0 0
        %2717 = vmatpush1.bf16.msra.mxu0 0
        %2718 = vmatprep.subr.bf16.mxu0 0
        %2719 = vmatpush1.bf16.msra.mxu0 0
        %2720 = vmatprep.subr.bf16.mxu0 0
        %2721 = vmatpush1.bf16.msra.mxu0 0
        %2722 = vmatprep.subr.bf16.mxu0 0
        %2723 = vmatpush1.bf16.msra.mxu0 0
        %2724 = vmatprep.subr.bf16.mxu0 0
        %2725 = vmatpush1.bf16.msra.mxu0 0
        %2726 = vmatprep.subr.bf16.mxu0 0
        %2727 = vmatpush1.bf16.msra.mxu0 0
        %2728 = vmatprep.subr.bf16.mxu0 0
        %2729 = vmatpush1.bf16.msra.mxu0 0
        %2730 = vmatprep.mubr.bf16.mxu0 0
        %2731 = vmatmul.mubr.bf16.gmra.mrb[0].mxu0 %v2475
        %v2732 = vpop.f32.mrb[0].mxu0
        %v2733 = vadd.f32 %v2523, %v2732
        %v2734 = vpop.f32.mrb[0].mxu0
        %v2735 = vpop.f32.mrb[0].mxu0
        %v2736 = vadd.f32 %v2523, %v2735
        %v2737 = vpop.f32.mrb[0].mxu0
        %2738 = vdwg.mxu0
        %v2739 = vmul.f32 %v2690, 0.125
        %v2740 = vmul.f32 %v2694, 0.125
        %s2741 = scalar_lea.vmem [#allocation14], 64
        %v2742 = vld [vmem:[%s2741] sm:$0xf]
        %v2743 = vld [vmem:[%s2741 + $0x4] sm:$0xf]
        %v2744 = vld [vmem:[%s2741 + $0x8] sm:$0xf]
        %v2745 = vld [vmem:[%s2741 + $0xc] sm:$0xf]
        %v2746 = vld [vmem:[%s2741 + $0x10] sm:$0xf]
        %v2747 = vld [vmem:[%s2741 + $0x14] sm:$0xf]
        %v2748 = vld [vmem:[%s2741 + $0x18] sm:$0xf]
        %v2749 = vld [vmem:[%s2741 + $0x1c] sm:$0xf]
        %v2750 = vld [vmem:[%s2741 + $0x20] sm:$0xf]
        %v2751 = vld [vmem:[%s2741 + $0x24] sm:$0xf]
        %v2752 = vld [vmem:[%s2741 + $0x28] sm:$0xf]
        %v2753 = vld [vmem:[%s2741 + $0x2c] sm:$0xf]
        %v2754 = vld [vmem:[%s2741 + $0x30] sm:$0xf]
        %v2755 = vld [vmem:[%s2741 + $0x34] sm:$0xf]
        %v2756 = vld [vmem:[%s2741 + $0x38] sm:$0xf]
        %v2757 = vld [vmem:[%s2741 + $0x3c] sm:$0xf]
        %v2758 = vpack.c.bf16 %v2740, %v2739
        %v2759 = vpack.c.bf16 %v2696, %v2692
        %v2760 = vpack.c.bf16 %v2736, %v2733
        %v2762 = vsel %vm1280, %v2758, 0
        %v2765 = vsel %vm1280, %v2759, 0
        %2767 = vmatprep.subr.bf16.mxu0 0
        %2768 = vmatpush1.bf16.xpose.msra.mxu0 %v2765
        %2769 = vmatprep.subr.bf16.mxu0 0
        %2770 = vmatpush1.bf16.xpose.msra.mxu0 0
        %2771 = vmatprep.subr.bf16.mxu0 0
        %2772 = vmatpush1.bf16.xpose.msra.mxu0 0
        %2773 = vmatprep.subr.bf16.mxu0 0
        %2774 = vmatpush1.bf16.xpose.msra.mxu0 0
        %2775 = vmatprep.subr.bf16.mxu0 0
        %2776 = vmatpush1.bf16.xpose.msra.mxu0 0
        %2777 = vmatprep.subr.bf16.mxu0 0
        %2778 = vmatpush1.bf16.xpose.msra.mxu0 0
        %2779 = vmatprep.subr.bf16.mxu0 0
        %2780 = vmatpush1.bf16.xpose.msra.mxu0 0
        %2781 = vmatprep.subr.bf16.mxu0 0
        %2782 = vmatpush1.bf16.xpose.msra.mxu0 0
        %2783 = vmatprep.subr.bf16.mxu0 0
        %2784 = vmatpush1.bf16.xpose.msra.mxu0 0
        %2785 = vmatprep.subr.bf16.mxu0 0
        %2786 = vmatpush1.bf16.xpose.msra.mxu0 0
        %2787 = vmatprep.subr.bf16.mxu0 0
        %2788 = vmatpush1.bf16.xpose.msra.mxu0 0
        %2789 = vmatprep.subr.bf16.mxu0 0
        %2790 = vmatpush1.bf16.xpose.msra.mxu0 0
        %2791 = vmatprep.subr.bf16.mxu0 0
        %2792 = vmatpush1.bf16.xpose.msra.mxu0 0
        %2793 = vmatprep.subr.bf16.mxu0 0
        %2794 = vmatpush1.bf16.xpose.msra.mxu0 0
        %2795 = vmatprep.subr.bf16.mxu0 0
        %2796 = vmatpush1.bf16.xpose.msra.mxu0 0
        %2797 = vmatprep.subr.bf16.mxu0 0
        %2798 = vmatpush1.bf16.xpose.msra.mxu0 0
        %2799 = vmatprep.mubr.bf16.mxu0 0
        %2800 = vmatmul.mubr.bf16.gmra.mrb[0].mxu0 %v2762
        %v2801 = vpop.f32.mrb[0].mxu0
        %v2802 = vadd.f32 %v954, %v2801
        %v2803 = vpop.f32.mrb[0].mxu0
        %v2804 = vpop.f32.mrb[0].mxu0
        %v2805 = vadd.f32 %v955, %v2804
        %v2806 = vpop.f32.mrb[0].mxu0
        %2807 = vdwg.mxu0
        %v2808 = vsel %vm1328, %v2802, -inf
        %2809 = vmax.xlane.f32.xlu0 %v2808
        %v2810 = vpop.xlane.xlu0 %2809
        %v2811 = vsel %vm1328, %v2805, -inf
        %2812 = vmax.xlane.f32.xlu0 %v2811
        %v2813 = vpop.xlane.xlu0 %2812
        %v2814 = vsub.f32 %v2802, %v2810
        %v2815 = vsub.f32 %v2805, %v2813
        %v2816 = vmul.f32 %v2814, 1.442695
        %v2817 = vpow.pop %v2816
        %v2818 = vmul.f32 %v2815, 1.442695
        %v2819 = vpow.pop %v2818
        %v2820 = vsel %vm1328, %v2817, 0.0
        %2821 = vadd.xlane.f32.xlu0 %v2820
        %v2822 = vpop.xlane.xlu0 %2821
        %v2823 = vsel %vm1328, %v2819, 0.0
        %2824 = vadd.xlane.f32.xlu0 %v2823
        %v2825 = vpop.xlane.xlu0 %2824
        %v2826 = vrcp.pop %v2822
        %v2827 = vrcp.pop %v2825
        %v2828 = vmul.f32 %v2817, %v2826
        %v2829 = vmul.f32 %v2819, %v2827
        %v2830 = vpack.c.bf16 %v2829, %v2828
        %v2832 = vsel %vm1328, %v2830, 0
        %2834 = vmatprep.subr.bf16.mxu0 0
        %2835 = vmatpush1.bf16.msra.mxu0 %v2760
        %2836 = vmatprep.subr.bf16.mxu0 0
        %2837 = vmatpush1.bf16.msra.mxu0 0
        %2838 = vmatprep.subr.bf16.mxu0 0
        %2839 = vmatpush1.bf16.msra.mxu0 0
        %2840 = vmatprep.subr.bf16.mxu0 0
        %2841 = vmatpush1.bf16.msra.mxu0 0
        %2842 = vmatprep.subr.bf16.mxu0 0
        %2843 = vmatpush1.bf16.msra.mxu0 0
        %2844 = vmatprep.subr.bf16.mxu0 0
        %2845 = vmatpush1.bf16.msra.mxu0 0
        %2846 = vmatprep.subr.bf16.mxu0 0
        %2847 = vmatpush1.bf16.msra.mxu0 0
        %2848 = vmatprep.subr.bf16.mxu0 0
        %2849 = vmatpush1.bf16.msra.mxu0 0
        %2850 = vmatprep.subr.bf16.mxu0 0
        %2851 = vmatpush1.bf16.msra.mxu0 0
        %2852 = vmatprep.subr.bf16.mxu0 0
        %2853 = vmatpush1.bf16.msra.mxu0 0
        %2854 = vmatprep.subr.bf16.mxu0 0
        %2855 = vmatpush1.bf16.msra.mxu0 0
        %2856 = vmatprep.subr.bf16.mxu0 0
        %2857 = vmatpush1.bf16.msra.mxu0 0
        %2858 = vmatprep.subr.bf16.mxu0 0
        %2859 = vmatpush1.bf16.msra.mxu0 0
        %2860 = vmatprep.subr.bf16.mxu0 0
        %2861 = vmatpush1.bf16.msra.mxu0 0
        %2862 = vmatprep.subr.bf16.mxu0 0
        %2863 = vmatpush1.bf16.msra.mxu0 0
        %2864 = vmatprep.subr.bf16.mxu0 0
        %2865 = vmatpush1.bf16.msra.mxu0 0
        %2866 = vmatprep.mubr.bf16.mxu0 0
        %2867 = vmatmul.mubr.bf16.gmra.mrb[0].mxu0 %v2832
        %v2868 = vpop.f32.mrb[0].mxu0
        %v2869 = vadd.f32 0.0, %v2868
        %v2870 = vpop.f32.mrb[0].mxu0
        %v2871 = vpop.f32.mrb[0].mxu0
        %v2872 = vadd.f32 0.0, %v2871
        %v2873 = vpop.f32.mrb[0].mxu0
        %2874 = vdwg.mxu0
        %v2875 = vpack.c.bf16 %v2872, %v2869
        %2877 = vrot.lane.b32.xlu0 %v2758, 64
        %v2878 = vpop.permute.xlu0 %2877
        %2880 = vrot.lane.b32.xlu0 %v2759, 64
        %v2881 = vpop.permute.xlu0 %2880
        %v2883 = vsel %vm1280, %v2878, 0
        %v2886 = vsel %vm1280, %v2881, 0
        %2888 = vmatprep.subr.bf16.mxu0 0
        %2889 = vmatpush1.bf16.xpose.msra.mxu0 %v2886
        %2890 = vmatprep.subr.bf16.mxu0 0
        %2891 = vmatpush1.bf16.xpose.msra.mxu0 0
        %2892 = vmatprep.subr.bf16.mxu0 0
        %2893 = vmatpush1.bf16.xpose.msra.mxu0 0
        %2894 = vmatprep.subr.bf16.mxu0 0
        %2895 = vmatpush1.bf16.xpose.msra.mxu0 0
        %2896 = vmatprep.subr.bf16.mxu0 0
        %2897 = vmatpush1.bf16.xpose.msra.mxu0 0
        %2898 = vmatprep.subr.bf16.mxu0 0
        %2899 = vmatpush1.bf16.xpose.msra.mxu0 0
        %2900 = vmatprep.subr.bf16.mxu0 0
        %2901 = vmatpush1.bf16.xpose.msra.mxu0 0
        %2902 = vmatprep.subr.bf16.mxu0 0
        %2903 = vmatpush1.bf16.xpose.msra.mxu0 0
        %2904 = vmatprep.subr.bf16.mxu0 0
        %2905 = vmatpush1.bf16.xpose.msra.mxu0 0
        %2906 = vmatprep.subr.bf16.mxu0 0
        %2907 = vmatpush1.bf16.xpose.msra.mxu0 0
        %2908 = vmatprep.subr.bf16.mxu0 0
        %2909 = vmatpush1.bf16.xpose.msra.mxu0 0
        %2910 = vmatprep.subr.bf16.mxu0 0
        %2911 = vmatpush1.bf16.xpose.msra.mxu0 0
        %2912 = vmatprep.subr.bf16.mxu0 0
        %2913 = vmatpush1.bf16.xpose.msra.mxu0 0
        %2914 = vmatprep.subr.bf16.mxu0 0
        %2915 = vmatpush1.bf16.xpose.msra.mxu0 0
        %2916 = vmatprep.subr.bf16.mxu0 0
        %2917 = vmatpush1.bf16.xpose.msra.mxu0 0
        %2918 = vmatprep.subr.bf16.mxu0 0
        %2919 = vmatpush1.bf16.xpose.msra.mxu0 0
        %2920 = vmatprep.mubr.bf16.mxu0 0
        %2921 = vmatmul.mubr.bf16.gmra.mrb[0].mxu0 %v2883
        %v2922 = vpop.f32.mrb[0].mxu0
        %v2923 = vadd.f32 %v954, %v2922
        %v2924 = vpop.f32.mrb[0].mxu0
        %v2925 = vpop.f32.mrb[0].mxu0
        %v2926 = vadd.f32 %v955, %v2925
        %v2927 = vpop.f32.mrb[0].mxu0
        %2928 = vdwg.mxu0
        %v2929 = vsel %vm1328, %v2923, -inf
        %2930 = vmax.xlane.f32.xlu0 %v2929
        %v2931 = vpop.xlane.xlu0 %2930
        %v2932 = vsel %vm1328, %v2926, -inf
        %2933 = vmax.xlane.f32.xlu0 %v2932
        %v2934 = vpop.xlane.xlu0 %2933
        %v2935 = vsub.f32 %v2923, %v2931
        %v2936 = vsub.f32 %v2926, %v2934
        %v2937 = vmul.f32 %v2935, 1.442695
        %v2938 = vpow.pop %v2937
        %v2939 = vmul.f32 %v2936, 1.442695
        %v2940 = vpow.pop %v2939
        %v2941 = vsel %vm1328, %v2938, 0.0
        %2942 = vadd.xlane.f32.xlu0 %v2941
        %v2943 = vpop.xlane.xlu0 %2942
        %v2944 = vsel %vm1328, %v2940, 0.0
        %2945 = vadd.xlane.f32.xlu0 %v2944
        %v2946 = vpop.xlane.xlu0 %2945
        %v2947 = vrcp.pop %v2943
        %v2948 = vrcp.pop %v2946
        %v2949 = vmul.f32 %v2938, %v2947
        %v2950 = vmul.f32 %v2940, %v2948
        %v2951 = vpack.c.bf16 %v2950, %v2949
        %2953 = vrot.lane.b32.xlu0 %v2760, 64
        %v2954 = vpop.permute.xlu0 %2953
        %v2957 = vsel %vm1328, %v2951, 0
        %2959 = vmatprep.subr.bf16.mxu0 0
        %2960 = vmatpush1.bf16.msra.mxu0 %v2954
        %2961 = vmatprep.subr.bf16.mxu0 0
        %2962 = vmatpush1.bf16.msra.mxu0 0
        %2963 = vmatprep.subr.bf16.mxu0 0
        %2964 = vmatpush1.bf16.msra.mxu0 0
        %2965 = vmatprep.subr.bf16.mxu0 0
        %2966 = vmatpush1.bf16.msra.mxu0 0
        %2967 = vmatprep.subr.bf16.mxu0 0
        %2968 = vmatpush1.bf16.msra.mxu0 0
        %2969 = vmatprep.subr.bf16.mxu0 0
        %2970 = vmatpush1.bf16.msra.mxu0 0
        %2971 = vmatprep.subr.bf16.mxu0 0
        %2972 = vmatpush1.bf16.msra.mxu0 0
        %2973 = vmatprep.subr.bf16.mxu0 0
        %2974 = vmatpush1.bf16.msra.mxu0 0
        %2975 = vmatprep.subr.bf16.mxu0 0
        %2976 = vmatpush1.bf16.msra.mxu0 0
        %2977 = vmatprep.subr.bf16.mxu0 0
        %2978 = vmatpush1.bf16.msra.mxu0 0
        %2979 = vmatprep.subr.bf16.mxu0 0
        %2980 = vmatpush1.bf16.msra.mxu0 0
        %2981 = vmatprep.subr.bf16.mxu0 0
        %2982 = vmatpush1.bf16.msra.mxu0 0
        %2983 = vmatprep.subr.bf16.mxu0 0
        %2984 = vmatpush1.bf16.msra.mxu0 0
        %2985 = vmatprep.subr.bf16.mxu0 0
        %2986 = vmatpush1.bf16.msra.mxu0 0
        %2987 = vmatprep.subr.bf16.mxu0 0
        %2988 = vmatpush1.bf16.msra.mxu0 0
        %2989 = vmatprep.subr.bf16.mxu0 0
        %2990 = vmatpush1.bf16.msra.mxu0 0
        %2991 = vmatprep.mubr.bf16.mxu0 0
        %2992 = vmatmul.mubr.bf16.gmra.mrb[0].mxu0 %v2957
        %v2993 = vpop.f32.mrb[0].mxu0
        %v2994 = vadd.f32 0.0, %v2993
        %v2995 = vpop.f32.mrb[0].mxu0
        %v2996 = vpop.f32.mrb[0].mxu0
        %v2997 = vadd.f32 0.0, %v2996
        %v2998 = vpop.f32.mrb[0].mxu0
        %2999 = vdwg.mxu0
        %v3000 = vpack.c.bf16 %v2997, %v2994
        %v3009 = vunpack.c.l.b16 %v2750
        %v3010 = vunpack.c.l.b16 %v2751
        %v3011 = vunpack.c.l.b16 %v2752
        %v3012 = vunpack.c.l.b16 %v2753
        %v3013 = vunpack.c.l.b16 %v2754
        %v3014 = vunpack.c.l.b16 %v2755
        %v3015 = vunpack.c.l.b16 %v2756
        %v3016 = vunpack.c.l.b16 %v2757
        %v3017 = vpack.c.b16 %v3010, %v3009
        %v3018 = vpack.c.b16 %v3012, %v3011
        %v3019 = vpack.c.b16 %v3014, %v3013
        %v3020 = vpack.c.b16 %v3016, %v3015
        %v3026 = vsel %vm1280, %v3000, 0
        %3028 = vmatprep.subr.bf16.mxu0 0
        %3029 = vmatpush1.bf16.msra.mxu0 %v3017
        %3030 = vmatprep.subr.bf16.mxu0 0
        %3031 = vmatpush1.bf16.msra.mxu0 %v3018
        %3032 = vmatprep.subr.bf16.mxu0 0
        %3033 = vmatpush1.bf16.msra.mxu0 %v3019
        %3034 = vmatprep.subr.bf16.mxu0 0
        %3035 = vmatpush1.bf16.msra.mxu0 %v3020
        %3036 = vmatprep.subr.bf16.mxu0 0
        %3037 = vmatpush1.bf16.msra.mxu0 0
        %3038 = vmatprep.subr.bf16.mxu0 0
        %3039 = vmatpush1.bf16.msra.mxu0 0
        %3040 = vmatprep.subr.bf16.mxu0 0
        %3041 = vmatpush1.bf16.msra.mxu0 0
        %3042 = vmatprep.subr.bf16.mxu0 0
        %3043 = vmatpush1.bf16.msra.mxu0 0
        %3044 = vmatprep.subr.bf16.mxu0 0
        %3045 = vmatpush1.bf16.msra.mxu0 0
        %3046 = vmatprep.subr.bf16.mxu0 0
        %3047 = vmatpush1.bf16.msra.mxu0 0
        %3048 = vmatprep.subr.bf16.mxu0 0
        %3049 = vmatpush1.bf16.msra.mxu0 0
        %3050 = vmatprep.subr.bf16.mxu0 0
        %3051 = vmatpush1.bf16.msra.mxu0 0
        %3052 = vmatprep.subr.bf16.mxu0 0
        %3053 = vmatpush1.bf16.msra.mxu0 0
        %3054 = vmatprep.subr.bf16.mxu0 0
        %3055 = vmatpush1.bf16.msra.mxu0 0
        %3056 = vmatprep.subr.bf16.mxu0 0
        %3057 = vmatpush1.bf16.msra.mxu0 0
        %3058 = vmatprep.subr.bf16.mxu0 0
        %3059 = vmatpush1.bf16.msra.mxu0 0
        %3060 = vmatprep.mubr.bf16.mxu0 0
        %3061 = vmatmul.mubr.bf16.gmra.mrb[0].mxu0 %v3026
        %v3062 = vpop.f32.mrb[0].mxu0
        %v3063 = vadd.f32 0.0, %v3062
        %v3064 = vpop.f32.mrb[0].mxu0
        %v3065 = vpop.f32.mrb[0].mxu0
        %v3066 = vadd.f32 0.0, %v3065
        %v3067 = vpop.f32.mrb[0].mxu0
        %3068 = vdwg.mxu0
        %v3077 = vunpack.c.l.b16 %v2742
        %v3078 = vunpack.c.l.b16 %v2743
        %v3079 = vunpack.c.l.b16 %v2744
        %v3080 = vunpack.c.l.b16 %v2745
        %v3081 = vunpack.c.l.b16 %v2746
        %v3082 = vunpack.c.l.b16 %v2747
        %v3083 = vunpack.c.l.b16 %v2748
        %v3084 = vunpack.c.l.b16 %v2749
        %v3085 = vpack.c.b16 %v3078, %v3077
        %v3086 = vpack.c.b16 %v3080, %v3079
        %v3087 = vpack.c.b16 %v3082, %v3081
        %v3088 = vpack.c.b16 %v3084, %v3083
        %v3094 = vsel %vm1280, %v2875, 0
        %3096 = vmatprep.subr.bf16.mxu0 0
        %3097 = vmatpush1.bf16.msra.mxu0 %v3085
        %3098 = vmatprep.subr.bf16.mxu0 0
        %3099 = vmatpush1.bf16.msra.mxu0 %v3086
        %3100 = vmatprep.subr.bf16.mxu0 0
        %3101 = vmatpush1.bf16.msra.mxu0 %v3087
        %3102 = vmatprep.subr.bf16.mxu0 0
        %3103 = vmatpush1.bf16.msra.mxu0 %v3088
        %3104 = vmatprep.subr.bf16.mxu0 0
        %3105 = vmatpush1.bf16.msra.mxu0 0
        %3106 = vmatprep.subr.bf16.mxu0 0
        %3107 = vmatpush1.bf16.msra.mxu0 0
        %3108 = vmatprep.subr.bf16.mxu0 0
        %3109 = vmatpush1.bf16.msra.mxu0 0
        %3110 = vmatprep.subr.bf16.mxu0 0
        %3111 = vmatpush1.bf16.msra.mxu0 0
        %3112 = vmatprep.subr.bf16.mxu0 0
        %3113 = vmatpush1.bf16.msra.mxu0 0
        %3114 = vmatprep.subr.bf16.mxu0 0
        %3115 = vmatpush1.bf16.msra.mxu0 0
        %3116 = vmatprep.subr.bf16.mxu0 0
        %3117 = vmatpush1.bf16.msra.mxu0 0
        %3118 = vmatprep.subr.bf16.mxu0 0
        %3119 = vmatpush1.bf16.msra.mxu0 0
        %3120 = vmatprep.subr.bf16.mxu0 0
        %3121 = vmatpush1.bf16.msra.mxu0 0
        %3122 = vmatprep.subr.bf16.mxu0 0
        %3123 = vmatpush1.bf16.msra.mxu0 0
        %3124 = vmatprep.subr.bf16.mxu0 0
        %3125 = vmatpush1.bf16.msra.mxu0 0
        %3126 = vmatprep.subr.bf16.mxu0 0
        %3127 = vmatpush1.bf16.msra.mxu0 0
        %3128 = vmatprep.mubr.bf16.mxu0 0
        %3129 = vmatmul.mubr.bf16.gmra.mrb[0].mxu0 %v3094
        %v3130 = vpop.f32.mrb[0].mxu0
        %v3131 = vadd.f32 %v3063, %v3130
        %v3132 = vpop.f32.mrb[0].mxu0
        %v3133 = vpop.f32.mrb[0].mxu0
        %v3134 = vadd.f32 %v3066, %v3133
        %v3135 = vpop.f32.mrb[0].mxu0
        %3136 = vdwg.mxu0
        %v3137 = vadd.f32 %v2431, %v3131
        %v3138 = vadd.f32 %v2432, %v3134
        %s3139 = scalar_lea.vmem %s10, 1
        %v3140 = vld [vmem:[%s3139] sm:$0x1]
        %v3142 = vlaneseq
        %v3143 = vshrl.u32 %v3142, 7
        %v3144 = vsub.s32 0, %v3143
        %v3145 = vrot.slane %v3140, %v3144
        %v3147 = vadd.f32 %v3137, %v3145
        %v3148 = vadd.f32 %v3138, %v3145
        %s3149 = scalar_lea.vmem %s11, 1
        %v3150 = vld [vmem:[%s3149] sm:$0x1]
        %s3151 = scalar_lea.vmem %s12, 1
        %v3152 = vld [vmem:[%s3151] sm:$0x1]
        %3153 = vadd.xlane.f32.xlu0 %v3147
        %v3154 = vpop.xlane.xlu0 %3153
        %3155 = vadd.xlane.f32.xlu0 %v3148
        %v3156 = vpop.xlane.xlu0 %3155
        %v3157 = vmul.f32 %v3154, %v962
        %v3158 = vmul.f32 %v3156, %v962
        %v3159 = vsub.f32 %v3147, %v3157
        %v3160 = vsub.f32 %v3148, %v3158
        %v3161 = vmul.f32 %v3159, %v3159
        %v3162 = vmul.f32 %v3160, %v3160
        %3163 = vadd.xlane.f32.xlu0 %v3161
        %v3164 = vpop.xlane.xlu0 %3163
        %3165 = vadd.xlane.f32.xlu0 %v3162
        %v3166 = vpop.xlane.xlu0 %3165
        %v3167 = vmul.f32 %v3164, %v962
        %v3168 = vmul.f32 %v3166, %v962
        %v3169 = vadd.f32 %v3167, 1e-05
        %v3170 = vadd.f32 %v3168, 1e-05
        %v3171 = vrsqrt.pop %v3169
        %v3172 = vrsqrt.pop %v3170
        %v3173 = vmul.f32 %v3159, %v3171
        %v3174 = vmul.f32 %v3160, %v3172
        %v3176 = vlaneseq
        %v3177 = vshrl.u32 %v3176, 7
        %v3178 = vsub.s32 0, %v3177
        %v3179 = vrot.slane %v3150, %v3178
        %v3181 = vmul.f32 %v3173, %v3179
        %v3182 = vmul.f32 %v3174, %v3179
        %v3184 = vlaneseq
        %v3185 = vshrl.u32 %v3184, 7
        %v3186 = vsub.s32 0, %v3185
        %v3187 = vrot.slane %v3152, %v3186
        %v3189 = vadd.f32 %v3181, %v3187
        %v3190 = vadd.f32 %v3182, %v3187
        %v3191 = vpack.c.bf16 %v3190, %v3189
        %s3192 = scalar_lea.vmem [#allocation16], 256
        %v3193 = vld [vmem:[%s3192] sm:$0xff]
        %v3194 = vld [vmem:[%s3192 + $0x8] sm:$0xff]
        %v3195 = vld [vmem:[%s3192 + $0x10] sm:$0xff]
        %v3196 = vld [vmem:[%s3192 + $0x18] sm:$0xff]
        %v3197 = vld [vmem:[%s3192 + $0x20] sm:$0xff]
        %v3198 = vld [vmem:[%s3192 + $0x28] sm:$0xff]
        %v3199 = vld [vmem:[%s3192 + $0x30] sm:$0xff]
        %v3200 = vld [vmem:[%s3192 + $0x38] sm:$0xff]
        %v3201 = vld [vmem:[%s3192 + $0x40] sm:$0xff]
        %v3202 = vld [vmem:[%s3192 + $0x48] sm:$0xff]
        %v3203 = vld [vmem:[%s3192 + $0x50] sm:$0xff]
        %v3204 = vld [vmem:[%s3192 + $0x58] sm:$0xff]
        %v3205 = vld [vmem:[%s3192 + $0x60] sm:$0xff]
        %v3206 = vld [vmem:[%s3192 + $0x68] sm:$0xff]
        %v3207 = vld [vmem:[%s3192 + $0x70] sm:$0xff]
        %v3208 = vld [vmem:[%s3192 + $0x78] sm:$0xff]
        %v3209 = vld [vmem:[%s3192 + $0x80] sm:$0xff]
        %v3210 = vld [vmem:[%s3192 + $0x88] sm:$0xff]
        %v3211 = vld [vmem:[%s3192 + $0x90] sm:$0xff]
        %v3212 = vld [vmem:[%s3192 + $0x98] sm:$0xff]
        %v3213 = vld [vmem:[%s3192 + $0xa0] sm:$0xff]
        %v3214 = vld [vmem:[%s3192 + $0xa8] sm:$0xff]
        %v3215 = vld [vmem:[%s3192 + $0xb0] sm:$0xff]
        %v3216 = vld [vmem:[%s3192 + $0xb8] sm:$0xff]
        %v3217 = vld [vmem:[%s3192 + $0xc0] sm:$0xff]
        %v3218 = vld [vmem:[%s3192 + $0xc8] sm:$0xff]
        %v3219 = vld [vmem:[%s3192 + $0xd0] sm:$0xff]
        %v3220 = vld [vmem:[%s3192 + $0xd8] sm:$0xff]
        %v3221 = vld [vmem:[%s3192 + $0xe0] sm:$0xff]
        %v3222 = vld [vmem:[%s3192 + $0xe8] sm:$0xff]
        %v3223 = vld [vmem:[%s3192 + $0xf0] sm:$0xff]
        %v3224 = vld [vmem:[%s3192 + $0xf8] sm:$0xff]
        %s3225 = scalar_lea.vmem %s14, 4
        %v3226 = vld [vmem:[%s3225] sm:$0xf]
        %v3228 = vlaneseq
        %v3229 = vshrl.u32 %v3228, 7
        %v3230 = vsub.s32 0, %v3229
        %v3231 = vrot.slane %v3226, %v3230
        %v3232 = vlaneseq
        %v3233 = vshrl.u32 %v3232, 7
        %v3234 = vsub.s32 1, %v3233
        %v3235 = vrot.slane %v3226, %v3234
        %v3236 = vlaneseq
        %v3237 = vshrl.u32 %v3236, 7
        %v3238 = vsub.s32 2, %v3237
        %v3239 = vrot.slane %v3226, %v3238
        %v3240 = vlaneseq
        %v3241 = vshrl.u32 %v3240, 7
        %v3242 = vsub.s32 3, %v3241
        %v3243 = vrot.slane %v3226, %v3242
        %v3280 = vunpack.c.l.b16 %v3193
        %v3281 = vunpack.c.h.b16 %v3193
        %v3282 = vunpack.c.l.b16 %v3194
        %v3283 = vunpack.c.h.b16 %v3194
        %v3284 = vunpack.c.l.b16 %v3195
        %v3285 = vunpack.c.h.b16 %v3195
        %v3286 = vunpack.c.l.b16 %v3196
        %v3287 = vunpack.c.h.b16 %v3196
        %v3288 = vunpack.c.l.b16 %v3197
        %v3289 = vunpack.c.h.b16 %v3197
        %v3290 = vunpack.c.l.b16 %v3198
        %v3291 = vunpack.c.h.b16 %v3198
        %v3292 = vunpack.c.l.b16 %v3199
        %v3293 = vunpack.c.h.b16 %v3199
        %v3294 = vunpack.c.l.b16 %v3200
        %v3295 = vunpack.c.h.b16 %v3200
        %v3296 = vunpack.c.l.b16 %v3201
        %v3297 = vunpack.c.h.b16 %v3201
        %v3298 = vunpack.c.l.b16 %v3202
        %v3299 = vunpack.c.h.b16 %v3202
        %v3300 = vunpack.c.l.b16 %v3203
        %v3301 = vunpack.c.h.b16 %v3203
        %v3302 = vunpack.c.l.b16 %v3204
        %v3303 = vunpack.c.h.b16 %v3204
        %v3304 = vunpack.c.l.b16 %v3205
        %v3305 = vunpack.c.h.b16 %v3205
        %v3306 = vunpack.c.l.b16 %v3206
        %v3307 = vunpack.c.h.b16 %v3206
        %v3308 = vunpack.c.l.b16 %v3207
        %v3309 = vunpack.c.h.b16 %v3207
        %v3310 = vunpack.c.l.b16 %v3208
        %v3311 = vunpack.c.h.b16 %v3208
        %v3312 = vunpack.c.l.b16 %v3209
        %v3313 = vunpack.c.h.b16 %v3209
        %v3314 = vunpack.c.l.b16 %v3210
        %v3315 = vunpack.c.h.b16 %v3210
        %v3316 = vunpack.c.l.b16 %v3211
        %v3317 = vunpack.c.h.b16 %v3211
        %v3318 = vunpack.c.l.b16 %v3212
        %v3319 = vunpack.c.h.b16 %v3212
        %v3320 = vunpack.c.l.b16 %v3213
        %v3321 = vunpack.c.h.b16 %v3213
        %v3322 = vunpack.c.l.b16 %v3214
        %v3323 = vunpack.c.h.b16 %v3214
        %v3324 = vunpack.c.l.b16 %v3215
        %v3325 = vunpack.c.h.b16 %v3215
        %v3326 = vunpack.c.l.b16 %v3216
        %v3327 = vunpack.c.h.b16 %v3216
        %v3328 = vunpack.c.l.b16 %v3217
        %v3329 = vunpack.c.h.b16 %v3217
        %v3330 = vunpack.c.l.b16 %v3218
        %v3331 = vunpack.c.h.b16 %v3218
        %v3332 = vunpack.c.l.b16 %v3219
        %v3333 = vunpack.c.h.b16 %v3219
        %v3334 = vunpack.c.l.b16 %v3220
        %v3335 = vunpack.c.h.b16 %v3220
        %v3336 = vunpack.c.l.b16 %v3221
        %v3337 = vunpack.c.h.b16 %v3221
        %v3338 = vunpack.c.l.b16 %v3222
        %v3339 = vunpack.c.h.b16 %v3222
        %v3340 = vunpack.c.l.b16 %v3223
        %v3341 = vunpack.c.h.b16 %v3223
        %v3342 = vunpack.c.l.b16 %v3224
        %v3343 = vunpack.c.h.b16 %v3224
        %v3344 = vpack.c.b16 %v3284, %v3280
        %v3345 = vpack.c.b16 %v3285, %v3281
        %v3346 = vpack.c.b16 %v3286, %v3282
        %v3347 = vpack.c.b16 %v3287, %v3283
        %v3348 = vpack.c.b16 %v3292, %v3288
        %v3349 = vpack.c.b16 %v3293, %v3289
        %v3350 = vpack.c.b16 %v3294, %v3290
        %v3351 = vpack.c.b16 %v3295, %v3291
        %v3352 = vpack.c.b16 %v3300, %v3296
        %v3353 = vpack.c.b16 %v3301, %v3297
        %v3354 = vpack.c.b16 %v3302, %v3298
        %v3355 = vpack.c.b16 %v3303, %v3299
        %v3356 = vpack.c.b16 %v3308, %v3304
        %v3357 = vpack.c.b16 %v3309, %v3305
        %v3358 = vpack.c.b16 %v3310, %v3306
        %v3359 = vpack.c.b16 %v3311, %v3307
        %v3360 = vpack.c.b16 %v3316, %v3312
        %v3361 = vpack.c.b16 %v3317, %v3313
        %v3362 = vpack.c.b16 %v3318, %v3314
        %v3363 = vpack.c.b16 %v3319, %v3315
        %v3364 = vpack.c.b16 %v3324, %v3320
        %v3365 = vpack.c.b16 %v3325, %v3321
        %v3366 = vpack.c.b16 %v3326, %v3322
        %v3367 = vpack.c.b16 %v3327, %v3323
        %v3368 = vpack.c.b16 %v3332, %v3328
        %v3369 = vpack.c.b16 %v3333, %v3329
        %v3370 = vpack.c.b16 %v3334, %v3330
        %v3371 = vpack.c.b16 %v3335, %v3331
        %v3372 = vpack.c.b16 %v3340, %v3336
        %v3373 = vpack.c.b16 %v3341, %v3337
        %v3374 = vpack.c.b16 %v3342, %v3338
        %v3375 = vpack.c.b16 %v3343, %v3339
        %3408 = vmatprep.subr.bf16.mxu0 %v3345
        %3409 = vmatpush1.bf16.msra.mxu0 %v3344
        %3410 = vmatprep.subr.bf16.mxu0 %v3349
        %3411 = vmatpush1.bf16.msra.mxu0 %v3348
        %3412 = vmatprep.subr.bf16.mxu0 %v3353
        %3413 = vmatpush1.bf16.msra.mxu0 %v3352
        %3414 = vmatprep.subr.bf16.mxu0 %v3357
        %3415 = vmatpush1.bf16.msra.mxu0 %v3356
        %3416 = vmatprep.subr.bf16.mxu0 %v3361
        %3417 = vmatpush1.bf16.msra.mxu0 %v3360
        %3418 = vmatprep.subr.bf16.mxu0 %v3365
        %3419 = vmatpush1.bf16.msra.mxu0 %v3364
        %3420 = vmatprep.subr.bf16.mxu0 %v3369
        %3421 = vmatpush1.bf16.msra.mxu0 %v3368
        %3422 = vmatprep.subr.bf16.mxu0 %v3373
        %3423 = vmatpush1.bf16.msra.mxu0 %v3372
        %3424 = vmatprep.subr.bf16.mxu0 0
        %3425 = vmatpush1.bf16.msra.mxu0 0
        %3426 = vmatprep.subr.bf16.mxu0 0
        %3427 = vmatpush1.bf16.msra.mxu0 0
        %3428 = vmatprep.subr.bf16.mxu0 0
        %3429 = vmatpush1.bf16.msra.mxu0 0
        %3430 = vmatprep.subr.bf16.mxu0 0
        %3431 = vmatpush1.bf16.msra.mxu0 0
        %3432 = vmatprep.subr.bf16.mxu0 0
        %3433 = vmatpush1.bf16.msra.mxu0 0
        %3434 = vmatprep.subr.bf16.mxu0 0
        %3435 = vmatpush1.bf16.msra.mxu0 0
        %3436 = vmatprep.subr.bf16.mxu0 0
        %3437 = vmatpush1.bf16.msra.mxu0 0
        %3438 = vmatprep.subr.bf16.mxu0 0
        %3439 = vmatpush1.bf16.msra.mxu0 0
        %3440 = vmatprep.mubr.bf16.mxu0 0
        %3441 = vmatmul.mubr.bf16.gmra.mrb[0].mxu0 %v3191
        %v3442 = vpop.f32.mrb[0].mxu0
        %v3443 = vadd.f32 %v3231, %v3442
        %v3444 = vpop.f32.mrb[0].mxu0
        %v3445 = vadd.f32 %v3235, %v3444
        %v3446 = vpop.f32.mrb[0].mxu0
        %v3447 = vadd.f32 %v3231, %v3446
        %v3448 = vpop.f32.mrb[0].mxu0
        %v3449 = vadd.f32 %v3235, %v3448
        %3450 = vdwg.mxu0
        %3451 = vmatprep.subr.bf16.mxu0 %v3347
        %3452 = vmatpush1.bf16.msra.mxu0 %v3346
        %3453 = vmatprep.subr.bf16.mxu0 %v3351
        %3454 = vmatpush1.bf16.msra.mxu0 %v3350
        %3455 = vmatprep.subr.bf16.mxu0 %v3355
        %3456 = vmatpush1.bf16.msra.mxu0 %v3354
        %3457 = vmatprep.subr.bf16.mxu0 %v3359
        %3458 = vmatpush1.bf16.msra.mxu0 %v3358
        %3459 = vmatprep.subr.bf16.mxu0 %v3363
        %3460 = vmatpush1.bf16.msra.mxu0 %v3362
        %3461 = vmatprep.subr.bf16.mxu0 %v3367
        %3462 = vmatpush1.bf16.msra.mxu0 %v3366
        %3463 = vmatprep.subr.bf16.mxu0 %v3371
        %3464 = vmatpush1.bf16.msra.mxu0 %v3370
        %3465 = vmatprep.subr.bf16.mxu0 %v3375
        %3466 = vmatpush1.bf16.msra.mxu0 %v3374
        %3467 = vmatprep.subr.bf16.mxu0 0
        %3468 = vmatpush1.bf16.msra.mxu0 0
        %3469 = vmatprep.subr.bf16.mxu0 0
        %3470 = vmatpush1.bf16.msra.mxu0 0
        %3471 = vmatprep.subr.bf16.mxu0 0
        %3472 = vmatpush1.bf16.msra.mxu0 0
        %3473 = vmatprep.subr.bf16.mxu0 0
        %3474 = vmatpush1.bf16.msra.mxu0 0
        %3475 = vmatprep.subr.bf16.mxu0 0
        %3476 = vmatpush1.bf16.msra.mxu0 0
        %3477 = vmatprep.subr.bf16.mxu0 0
        %3478 = vmatpush1.bf16.msra.mxu0 0
        %3479 = vmatprep.subr.bf16.mxu0 0
        %3480 = vmatpush1.bf16.msra.mxu0 0
        %3481 = vmatprep.subr.bf16.mxu0 0
        %3482 = vmatpush1.bf16.msra.mxu0 0
        %3483 = vmatprep.mubr.bf16.mxu0 0
        %3484 = vmatmul.mubr.bf16.gmra.mrb[0].mxu0 %v3191
        %v3485 = vpop.f32.mrb[0].mxu0
        %v3486 = vadd.f32 %v3239, %v3485
        %v3487 = vpop.f32.mrb[0].mxu0
        %v3488 = vadd.f32 %v3243, %v3487
        %v3489 = vpop.f32.mrb[0].mxu0
        %v3490 = vadd.f32 %v3239, %v3489
        %v3491 = vpop.f32.mrb[0].mxu0
        %v3492 = vadd.f32 %v3243, %v3491
        %3493 = vdwg.mxu0
        %v3494 = vmul.f32 %v3443, %v3443
        %v3495 = vmul.f32 %v3445, %v3445
        %v3496 = vmul.f32 %v3486, %v3486
        %v3497 = vmul.f32 %v3488, %v3488
        %v3498 = vmul.f32 %v3447, %v3447
        %v3499 = vmul.f32 %v3449, %v3449
        %v3500 = vmul.f32 %v3490, %v3490
        %v3501 = vmul.f32 %v3492, %v3492
        %v3502 = vmul.f32 %v3443, %v3494
        %v3503 = vmul.f32 %v3445, %v3495
        %v3504 = vmul.f32 %v3486, %v3496
        %v3505 = vmul.f32 %v3488, %v3497
        %v3506 = vmul.f32 %v3447, %v3498
        %v3507 = vmul.f32 %v3449, %v3499
        %v3508 = vmul.f32 %v3490, %v3500
        %v3509 = vmul.f32 %v3492, %v3501
        %v3510 = vmul.f32 %v3502, 0.044715
        %v3511 = vmul.f32 %v3503, 0.044715
        %v3512 = vmul.f32 %v3504, 0.044715
        %v3513 = vmul.f32 %v3505, 0.044715
        %v3514 = vmul.f32 %v3506, 0.044715
        %v3515 = vmul.f32 %v3507, 0.044715
        %v3516 = vmul.f32 %v3508, 0.044715
        %v3517 = vmul.f32 %v3509, 0.044715
        %v3518 = vadd.f32 %v3443, %v3510
        %v3519 = vadd.f32 %v3445, %v3511
        %v3520 = vadd.f32 %v3486, %v3512
        %v3521 = vadd.f32 %v3488, %v3513
        %v3522 = vadd.f32 %v3447, %v3514
        %v3523 = vadd.f32 %v3449, %v3515
        %v3524 = vadd.f32 %v3490, %v3516
        %v3525 = vadd.f32 %v3492, %v3517
        %v3526 = vmul.f32 %v3518, 0.7978846
        %v3527 = vmul.f32 %v3519, 0.7978846
        %v3528 = vmul.f32 %v3520, 0.7978846
        %v3529 = vmul.f32 %v3521, 0.7978846
        %v3530 = vmul.f32 %v3522, 0.7978846
        %v3531 = vmul.f32 %v3523, 0.7978846
        %v3532 = vmul.f32 %v3524, 0.7978846
        %v3533 = vmul.f32 %v3525, 0.7978846
        %v3534 = vtanh.pop %v3526
        %v3535 = vtanh.pop %v3527
        %v3536 = vtanh.pop %v3528
        %v3537 = vtanh.pop %v3529
        %v3538 = vtanh.pop %v3530
        %v3539 = vtanh.pop %v3531
        %v3540 = vtanh.pop %v3532
        %v3541 = vtanh.pop %v3533
        %v3542 = vadd.f32 %v3534, 1.0
        %v3543 = vadd.f32 %v3535, 1.0
        %v3544 = vadd.f32 %v3536, 1.0
        %v3545 = vadd.f32 %v3537, 1.0
        %v3546 = vadd.f32 %v3538, 1.0
        %v3547 = vadd.f32 %v3539, 1.0
        %v3548 = vadd.f32 %v3540, 1.0
        %v3549 = vadd.f32 %v3541, 1.0
        %v3550 = vmul.f32 %v3542, 0.5
        %v3551 = vmul.f32 %v3543, 0.5
        %v3552 = vmul.f32 %v3544, 0.5
        %v3553 = vmul.f32 %v3545, 0.5
        %v3554 = vmul.f32 %v3546, 0.5
        %v3555 = vmul.f32 %v3547, 0.5
        %v3556 = vmul.f32 %v3548, 0.5
        %v3557 = vmul.f32 %v3549, 0.5
        %v3558 = vmul.f32 %v3443, %v3550
        %v3559 = vmul.f32 %v3445, %v3551
        %v3560 = vmul.f32 %v3486, %v3552
        %v3561 = vmul.f32 %v3488, %v3553
        %v3562 = vmul.f32 %v3447, %v3554
        %v3563 = vmul.f32 %v3449, %v3555
        %v3564 = vmul.f32 %v3490, %v3556
        %v3565 = vmul.f32 %v3492, %v3557
        %v3566 = vpack.c.bf16 %v3562, %v3558
        %v3567 = vpack.c.bf16 %v3563, %v3559
        %v3568 = vpack.c.bf16 %v3564, %v3560
        %v3569 = vpack.c.bf16 %v3565, %v3561
        %s3570 = scalar_lea.vmem [#allocation17], 256
        %v3571 = vld [vmem:[%s3570] sm:$0xf]
        %v3572 = vld [vmem:[%s3570 + $0x4] sm:$0xf]
        %v3573 = vld [vmem:[%s3570 + $0x8] sm:$0xf]
        %v3574 = vld [vmem:[%s3570 + $0xc] sm:$0xf]
        %v3575 = vld [vmem:[%s3570 + $0x10] sm:$0xf]
        %v3576 = vld [vmem:[%s3570 + $0x14] sm:$0xf]
        %v3577 = vld [vmem:[%s3570 + $0x18] sm:$0xf]
        %v3578 = vld [vmem:[%s3570 + $0x1c] sm:$0xf]
        %v3579 = vld [vmem:[%s3570 + $0x20] sm:$0xf]
        %v3580 = vld [vmem:[%s3570 + $0x24] sm:$0xf]
        %v3581 = vld [vmem:[%s3570 + $0x28] sm:$0xf]
        %v3582 = vld [vmem:[%s3570 + $0x2c] sm:$0xf]
        %v3583 = vld [vmem:[%s3570 + $0x30] sm:$0xf]
        %v3584 = vld [vmem:[%s3570 + $0x34] sm:$0xf]
        %v3585 = vld [vmem:[%s3570 + $0x38] sm:$0xf]
        %v3586 = vld [vmem:[%s3570 + $0x3c] sm:$0xf]
        %v3587 = vld [vmem:[%s3570 + $0x40] sm:$0xf]
        %v3588 = vld [vmem:[%s3570 + $0x44] sm:$0xf]
        %v3589 = vld [vmem:[%s3570 + $0x48] sm:$0xf]
        %v3590 = vld [vmem:[%s3570 + $0x4c] sm:$0xf]
        %v3591 = vld [vmem:[%s3570 + $0x50] sm:$0xf]
        %v3592 = vld [vmem:[%s3570 + $0x54] sm:$0xf]
        %v3593 = vld [vmem:[%s3570 + $0x58] sm:$0xf]
        %v3594 = vld [vmem:[%s3570 + $0x5c] sm:$0xf]
        %v3595 = vld [vmem:[%s3570 + $0x60] sm:$0xf]
        %v3596 = vld [vmem:[%s3570 + $0x64] sm:$0xf]
        %v3597 = vld [vmem:[%s3570 + $0x68] sm:$0xf]
        %v3598 = vld [vmem:[%s3570 + $0x6c] sm:$0xf]
        %v3599 = vld [vmem:[%s3570 + $0x70] sm:$0xf]
        %v3600 = vld [vmem:[%s3570 + $0x74] sm:$0xf]
        %v3601 = vld [vmem:[%s3570 + $0x78] sm:$0xf]
        %v3602 = vld [vmem:[%s3570 + $0x7c] sm:$0xf]
        %v3603 = vld [vmem:[%s3570 + $0x80] sm:$0xf]
        %v3604 = vld [vmem:[%s3570 + $0x84] sm:$0xf]
        %v3605 = vld [vmem:[%s3570 + $0x88] sm:$0xf]
        %v3606 = vld [vmem:[%s3570 + $0x8c] sm:$0xf]
        %v3607 = vld [vmem:[%s3570 + $0x90] sm:$0xf]
        %v3608 = vld [vmem:[%s3570 + $0x94] sm:$0xf]
        %v3609 = vld [vmem:[%s3570 + $0x98] sm:$0xf]
        %v3610 = vld [vmem:[%s3570 + $0x9c] sm:$0xf]
        %v3611 = vld [vmem:[%s3570 + $0xa0] sm:$0xf]
        %v3612 = vld [vmem:[%s3570 + $0xa4] sm:$0xf]
        %v3613 = vld [vmem:[%s3570 + $0xa8] sm:$0xf]
        %v3614 = vld [vmem:[%s3570 + $0xac] sm:$0xf]
        %v3615 = vld [vmem:[%s3570 + $0xb0] sm:$0xf]
        %v3616 = vld [vmem:[%s3570 + $0xb4] sm:$0xf]
        %v3617 = vld [vmem:[%s3570 + $0xb8] sm:$0xf]
        %v3618 = vld [vmem:[%s3570 + $0xbc] sm:$0xf]
        %v3619 = vld [vmem:[%s3570 + $0xc0] sm:$0xf]
        %v3620 = vld [vmem:[%s3570 + $0xc4] sm:$0xf]
        %v3621 = vld [vmem:[%s3570 + $0xc8] sm:$0xf]
        %v3622 = vld [vmem:[%s3570 + $0xcc] sm:$0xf]
        %v3623 = vld [vmem:[%s3570 + $0xd0] sm:$0xf]
        %v3624 = vld [vmem:[%s3570 + $0xd4] sm:$0xf]
        %v3625 = vld [vmem:[%s3570 + $0xd8] sm:$0xf]
        %v3626 = vld [vmem:[%s3570 + $0xdc] sm:$0xf]
        %v3627 = vld [vmem:[%s3570 + $0xe0] sm:$0xf]
        %v3628 = vld [vmem:[%s3570 + $0xe4] sm:$0xf]
        %v3629 = vld [vmem:[%s3570 + $0xe8] sm:$0xf]
        %v3630 = vld [vmem:[%s3570 + $0xec] sm:$0xf]
        %v3631 = vld [vmem:[%s3570 + $0xf0] sm:$0xf]
        %v3632 = vld [vmem:[%s3570 + $0xf4] sm:$0xf]
        %v3633 = vld [vmem:[%s3570 + $0xf8] sm:$0xf]
        %v3634 = vld [vmem:[%s3570 + $0xfc] sm:$0xf]
        %s3635 = scalar_lea.vmem %s16, 1
        %v3636 = vld [vmem:[%s3635] sm:$0x1]
        %v3638 = vlaneseq
        %v3639 = vshrl.u32 %v3638, 7
        %v3640 = vsub.s32 0, %v3639
        %v3641 = vrot.slane %v3636, %v3640
        %v3707 = vunpack.c.l.b16 %v3571
        %v3708 = vunpack.c.l.b16 %v3572
        %v3709 = vunpack.c.l.b16 %v3573
        %v3710 = vunpack.c.l.b16 %v3574
        %v3711 = vunpack.c.l.b16 %v3575
        %v3712 = vunpack.c.l.b16 %v3576
        %v3713 = vunpack.c.l.b16 %v3577
        %v3714 = vunpack.c.l.b16 %v3578
        %v3715 = vunpack.c.l.b16 %v3579
        %v3716 = vunpack.c.l.b16 %v3580
        %v3717 = vunpack.c.l.b16 %v3581
        %v3718 = vunpack.c.l.b16 %v3582
        %v3719 = vunpack.c.l.b16 %v3583
        %v3720 = vunpack.c.l.b16 %v3584
        %v3721 = vunpack.c.l.b16 %v3585
        %v3722 = vunpack.c.l.b16 %v3586
        %v3723 = vunpack.c.l.b16 %v3587
        %v3724 = vunpack.c.l.b16 %v3588
        %v3725 = vunpack.c.l.b16 %v3589
        %v3726 = vunpack.c.l.b16 %v3590
        %v3727 = vunpack.c.l.b16 %v3591
        %v3728 = vunpack.c.l.b16 %v3592
        %v3729 = vunpack.c.l.b16 %v3593
        %v3730 = vunpack.c.l.b16 %v3594
        %v3731 = vunpack.c.l.b16 %v3595
        %v3732 = vunpack.c.l.b16 %v3596
        %v3733 = vunpack.c.l.b16 %v3597
        %v3734 = vunpack.c.l.b16 %v3598
        %v3735 = vunpack.c.l.b16 %v3599
        %v3736 = vunpack.c.l.b16 %v3600
        %v3737 = vunpack.c.l.b16 %v3601
        %v3738 = vunpack.c.l.b16 %v3602
        %v3739 = vunpack.c.l.b16 %v3603
        %v3740 = vunpack.c.l.b16 %v3604
        %v3741 = vunpack.c.l.b16 %v3605
        %v3742 = vunpack.c.l.b16 %v3606
        %v3743 = vunpack.c.l.b16 %v3607
        %v3744 = vunpack.c.l.b16 %v3608
        %v3745 = vunpack.c.l.b16 %v3609
        %v3746 = vunpack.c.l.b16 %v3610
        %v3747 = vunpack.c.l.b16 %v3611
        %v3748 = vunpack.c.l.b16 %v3612
        %v3749 = vunpack.c.l.b16 %v3613
        %v3750 = vunpack.c.l.b16 %v3614
        %v3751 = vunpack.c.l.b16 %v3615
        %v3752 = vunpack.c.l.b16 %v3616
        %v3753 = vunpack.c.l.b16 %v3617
        %v3754 = vunpack.c.l.b16 %v3618
        %v3755 = vunpack.c.l.b16 %v3619
        %v3756 = vunpack.c.l.b16 %v3620
        %v3757 = vunpack.c.l.b16 %v3621
        %v3758 = vunpack.c.l.b16 %v3622
        %v3759 = vunpack.c.l.b16 %v3623
        %v3760 = vunpack.c.l.b16 %v3624
        %v3761 = vunpack.c.l.b16 %v3625
        %v3762 = vunpack.c.l.b16 %v3626
        %v3763 = vunpack.c.l.b16 %v3627
        %v3764 = vunpack.c.l.b16 %v3628
        %v3765 = vunpack.c.l.b16 %v3629
        %v3766 = vunpack.c.l.b16 %v3630
        %v3767 = vunpack.c.l.b16 %v3631
        %v3768 = vunpack.c.l.b16 %v3632
        %v3769 = vunpack.c.l.b16 %v3633
        %v3770 = vunpack.c.l.b16 %v3634
        %v3771 = vpack.c.b16 %v3708, %v3707
        %v3772 = vpack.c.b16 %v3710, %v3709
        %v3773 = vpack.c.b16 %v3712, %v3711
        %v3774 = vpack.c.b16 %v3714, %v3713
        %v3775 = vpack.c.b16 %v3716, %v3715
        %v3776 = vpack.c.b16 %v3718, %v3717
        %v3777 = vpack.c.b16 %v3720, %v3719
        %v3778 = vpack.c.b16 %v3722, %v3721
        %v3779 = vpack.c.b16 %v3724, %v3723
        %v3780 = vpack.c.b16 %v3726, %v3725
        %v3781 = vpack.c.b16 %v3728, %v3727
        %v3782 = vpack.c.b16 %v3730, %v3729
        %v3783 = vpack.c.b16 %v3732, %v3731
        %v3784 = vpack.c.b16 %v3734, %v3733
        %v3785 = vpack.c.b16 %v3736, %v3735
        %v3786 = vpack.c.b16 %v3738, %v3737
        %v3787 = vpack.c.b16 %v3740, %v3739
        %v3788 = vpack.c.b16 %v3742, %v3741
        %v3789 = vpack.c.b16 %v3744, %v3743
        %v3790 = vpack.c.b16 %v3746, %v3745
        %v3791 = vpack.c.b16 %v3748, %v3747
        %v3792 = vpack.c.b16 %v3750, %v3749
        %v3793 = vpack.c.b16 %v3752, %v3751
        %v3794 = vpack.c.b16 %v3754, %v3753
        %v3795 = vpack.c.b16 %v3756, %v3755
        %v3796 = vpack.c.b16 %v3758, %v3757
        %v3797 = vpack.c.b16 %v3760, %v3759
        %v3798 = vpack.c.b16 %v3762, %v3761
        %v3799 = vpack.c.b16 %v3764, %v3763
        %v3800 = vpack.c.b16 %v3766, %v3765
        %v3801 = vpack.c.b16 %v3768, %v3767
        %v3802 = vpack.c.b16 %v3770, %v3769
        %3835 = vmatprep.subr.bf16.mxu0 0
        %3836 = vmatpush1.bf16.msra.mxu0 %v3771
        %3837 = vmatprep.subr.bf16.mxu0 0
        %3838 = vmatpush1.bf16.msra.mxu0 %v3772
        %3839 = vmatprep.subr.bf16.mxu0 0
        %3840 = vmatpush1.bf16.msra.mxu0 %v3773
        %3841 = vmatprep.subr.bf16.mxu0 0
        %3842 = vmatpush1.bf16.msra.mxu0 %v3774
        %3843 = vmatprep.subr.bf16.mxu0 0
        %3844 = vmatpush1.bf16.msra.mxu0 %v3775
        %3845 = vmatprep.subr.bf16.mxu0 0
        %3846 = vmatpush1.bf16.msra.mxu0 %v3776
        %3847 = vmatprep.subr.bf16.mxu0 0
        %3848 = vmatpush1.bf16.msra.mxu0 %v3777
        %3849 = vmatprep.subr.bf16.mxu0 0
        %3850 = vmatpush1.bf16.msra.mxu0 %v3778
        %3851 = vmatprep.subr.bf16.mxu0 0
        %3852 = vmatpush1.bf16.msra.mxu0 %v3779
        %3853 = vmatprep.subr.bf16.mxu0 0
        %3854 = vmatpush1.bf16.msra.mxu0 %v3780
        %3855 = vmatprep.subr.bf16.mxu0 0
        %3856 = vmatpush1.bf16.msra.mxu0 %v3781
        %3857 = vmatprep.subr.bf16.mxu0 0
        %3858 = vmatpush1.bf16.msra.mxu0 %v3782
        %3859 = vmatprep.subr.bf16.mxu0 0
        %3860 = vmatpush1.bf16.msra.mxu0 %v3783
        %3861 = vmatprep.subr.bf16.mxu0 0
        %3862 = vmatpush1.bf16.msra.mxu0 %v3784
        %3863 = vmatprep.subr.bf16.mxu0 0
        %3864 = vmatpush1.bf16.msra.mxu0 %v3785
        %3865 = vmatprep.subr.bf16.mxu0 0
        %3866 = vmatpush1.bf16.msra.mxu0 %v3786
        %3867 = vmatprep.mubr.bf16.mxu0 %v3567
        %3868 = vmatmul.mubr.bf16.gmra.mrb[0].mxu0 %v3566
        %v3869 = vpop.f32.mrb[0].mxu0
        %v3870 = vadd.f32 %v3641, %v3869
        %v3871 = vpop.f32.mrb[0].mxu0
        %v3872 = vpop.f32.mrb[0].mxu0
        %v3873 = vadd.f32 %v3641, %v3872
        %v3874 = vpop.f32.mrb[0].mxu0
        %3875 = vdwg.mxu0
        %3876 = vmatprep.subr.bf16.mxu0 0
        %3877 = vmatpush1.bf16.msra.mxu0 %v3787
        %3878 = vmatprep.subr.bf16.mxu0 0
        %3879 = vmatpush1.bf16.msra.mxu0 %v3788
        %3880 = vmatprep.subr.bf16.mxu0 0
        %3881 = vmatpush1.bf16.msra.mxu0 %v3789
        %3882 = vmatprep.subr.bf16.mxu0 0
        %3883 = vmatpush1.bf16.msra.mxu0 %v3790
        %3884 = vmatprep.subr.bf16.mxu0 0
        %3885 = vmatpush1.bf16.msra.mxu0 %v3791
        %3886 = vmatprep.subr.bf16.mxu0 0
        %3887 = vmatpush1.bf16.msra.mxu0 %v3792
        %3888 = vmatprep.subr.bf16.mxu0 0
        %3889 = vmatpush1.bf16.msra.mxu0 %v3793
        %3890 = vmatprep.subr.bf16.mxu0 0
        %3891 = vmatpush1.bf16.msra.mxu0 %v3794
        %3892 = vmatprep.subr.bf16.mxu0 0
        %3893 = vmatpush1.bf16.msra.mxu0 %v3795
        %3894 = vmatprep.subr.bf16.mxu0 0
        %3895 = vmatpush1.bf16.msra.mxu0 %v3796
        %3896 = vmatprep.subr.bf16.mxu0 0
        %3897 = vmatpush1.bf16.msra.mxu0 %v3797
        %3898 = vmatprep.subr.bf16.mxu0 0
        %3899 = vmatpush1.bf16.msra.mxu0 %v3798
        %3900 = vmatprep.subr.bf16.mxu0 0
        %3901 = vmatpush1.bf16.msra.mxu0 %v3799
        %3902 = vmatprep.subr.bf16.mxu0 0
        %3903 = vmatpush1.bf16.msra.mxu0 %v3800
        %3904 = vmatprep.subr.bf16.mxu0 0
        %3905 = vmatpush1.bf16.msra.mxu0 %v3801
        %3906 = vmatprep.subr.bf16.mxu0 0
        %3907 = vmatpush1.bf16.msra.mxu0 %v3802
        %3908 = vmatprep.mubr.bf16.mxu0 %v3569
        %3909 = vmatmul.mubr.bf16.gmra.mrb[0].mxu0 %v3568
        %v3910 = vpop.f32.mrb[0].mxu0
        %v3911 = vadd.f32 %v3870, %v3910
        %v3912 = vpop.f32.mrb[0].mxu0
        %v3913 = vpop.f32.mrb[0].mxu0
        %v3914 = vadd.f32 %v3873, %v3913
        %v3915 = vpop.f32.mrb[0].mxu0
        %3916 = vdwg.mxu0
        %v3917 = vadd.f32 %v3147, %v3911
        %v3918 = vadd.f32 %v3148, %v3914
        %v3919 = vld [vmem:[%s17] sm:$0x1]
        %v3920 = vld [vmem:[%s18] sm:$0x1]
        %3921 = vadd.xlane.f32.xlu0 %v3917
        %v3922 = vpop.xlane.xlu0 %3921
        %3923 = vadd.xlane.f32.xlu0 %v3918
        %v3924 = vpop.xlane.xlu0 %3923
        %v3925 = vmul.f32 %v3922, %v962
        %v3926 = vmul.f32 %v3924, %v962
        %v3927 = vsub.f32 %v3917, %v3925
        %v3928 = vsub.f32 %v3918, %v3926
        %v3929 = vmul.f32 %v3927, %v3927
        %v3930 = vmul.f32 %v3928, %v3928
        %3931 = vadd.xlane.f32.xlu0 %v3929
        %v3932 = vpop.xlane.xlu0 %3931
        %3933 = vadd.xlane.f32.xlu0 %v3930
        %v3934 = vpop.xlane.xlu0 %3933
        %v3935 = vmul.f32 %v3932, %v962
        %v3936 = vmul.f32 %v3934, %v962
        %v3937 = vadd.f32 %v3935, 1e-05
        %v3938 = vadd.f32 %v3936, 1e-05
        %v3939 = vrsqrt.pop %v3937
        %v3940 = vrsqrt.pop %v3938
        %v3941 = vmul.f32 %v3927, %v3939
        %v3942 = vmul.f32 %v3928, %v3940
        %v3944 = vlaneseq
        %v3945 = vshrl.u32 %v3944, 7
        %v3946 = vsub.s32 0, %v3945
        %v3947 = vrot.slane %v3919, %v3946
        %v3949 = vmul.f32 %v3941, %v3947
        %v3950 = vmul.f32 %v3942, %v3947
        %v3952 = vlaneseq
        %v3953 = vshrl.u32 %v3952, 7
        %v3954 = vsub.s32 0, %v3953
        %v3955 = vrot.slane %v3920, %v3954
        %v3957 = vadd.f32 %v3949, %v3955
        %v3958 = vadd.f32 %v3950, %v3955
        %v3959 = vld [vmem:[%s19] sm:$0x1]
        %v3960 = vld [vmem:[#allocation2] sm:$0x1]
        %v3962 = vlaneseq
        %v3963 = vshrl.u32 %v3962, 7
        %v3964 = vsub.s32 0, %v3963
        %v3965 = vrot.slane %v3959, %v3964
        %v3967 = vmul.f32 %v3957, %v3965
        %vm3968 = vcmask 1047559
        %v3969 = vsel %vm3968, %v3967, 0.0
        %3970 = vadd.xlane.f32.xlu0 %v3969
        %v3971 = vpop.xlane.xlu0 %3970
        %v3973 = vlaneseq
        %v3974 = vshrl.u32 %v3973, 7
        %v3975 = vsub.s32 0, %v3974
        %v3976 = vrot.slane %v3960, %v3975
        %v3978 = vadd.f32 %v3971, %v3976
        %vm3979 = vcmask 7175
        %3980 = vst.msk [vmem:[%s826 - $0x7] sm:$0x80] %vm3979, %v3978
        %v3981 = vmul.f32 %v3958, %v3965
        %v3982 = vsel %vm3968, %v3981, 0.0
        %3983 = vadd.xlane.f32.xlu0 %v3982
        %v3984 = vpop.xlane.xlu0 %3983
        %v3985 = vadd.f32 %v3984, %v3976
        %3986 = vst.msk [vmem:[%s826 - $0x6] sm:$0x80] %vm3979, %v3985
        %p3987 = scmp.lt.s32.totalorder %s44, 1
        %s3988 = scalar_select %p3987, %s44, 1
        %s3989 = smul.addr %s3988, 2
        %s3990 = scalar_lea.vmem %s21, %s3989
        // Predicated region
        $region145: #{tpu_custom_call.1} parent=103 // pred_check
          %p3991 = pneg %p513
        $region146: #{tpu_custom_call.1} parent=103 // pred_check_branch
          %3993 = sbr.rel (%p3991) target = $region148
        $region147: #{tpu_custom_call.1} parent=103 // pred_region
          _
        $region148: #{tpu_custom_call.1} parent=103 // pred_fallthru
          _
      $region104: #{tpu_custom_call.1} parent=5 // pred_fallthru
        _
      %p3994 = scmp.le.s32.totalorder 2, %s39
      // Predicated region
      $region149: #{tpu_custom_call.1} parent=5 // pred_check
        %p3995 = pneg %p3994
      $region150: #{tpu_custom_call.1} parent=5 // pred_check_branch
        %3997 = sbr.rel (%p3995) target = $region152
      $region151: #{tpu_custom_call.1} parent=5 // pred_region
        %s3998 = ssub.s32 %s39, 2
        // Predicated region
        $region153: #{tpu_custom_call.1} parent=151 // pred_check
          %p3999 = pneg %p519
        $region154: #{tpu_custom_call.1} parent=151 // pred_check_branch
          %4001 = sbr.rel (%p3999) target = $region156
        $region155: #{tpu_custom_call.1} parent=151 // pred_region
          %p4002 = scmp.lt.s32.totalorder %s45, 1
          %s4003 = scalar_select %p4002, %s45, 1
          %s4004 = smul.addr %s4003, 2
          %s4005 = scalar_lea.vmem %s21, %s4004
        $region156: #{tpu_custom_call.1} parent=151 // pred_fallthru
          _
      $region152: #{tpu_custom_call.1} parent=5 // pred_fallthru
        _
    $region6: #{tpu_custom_call.1} parent=1 // loop_footer
      %s43 = sadd.s32 1, %s39
    $region7: #{tpu_custom_call.1} parent=1 // loop_footer_branch
      %38 = sbr.rel target = $region3
    $region8: #{tpu_custom_call.1} parent=1 // loop_exit
      _
    %4006 = vsyncpa [#allocation4], 1
    %s4007 = scalar_lea.sflag [#allocation4], 1
    %4008 = vsyncpa %s4007, 1
    %4009 = vsyncpa [#allocation6], 1
    %s4010 = scalar_lea.sflag [#allocation6], 1
    %4011 = vsyncpa %s4010, 1
    %4012 = vsyncpa [#allocation9], 1
    %4013 = vsyncpa [#allocation12], 1
    %4014 = vsyncpa [#allocation15], 1
    %4015 = vsyncpa [#allocation18], 1

</llo_original>
